<compile_context>
chip_gen: v7x
topology: tpu7x:2x2x1
jax: 0.10.0
libtpu: 0.0.40
codegen_flags: <defaults>
</compile_context>

<pallas_src>
import functools

import jax
import jax.numpy as jnp
from jax.experimental import pallas as pl
from jax.experimental.pallas import tpu as pltpu


# ----------------------------------------------------------------------------
# Generic matmul(+bias, +ReLU) kernel — used only by the encoder convs (im2col)
# ----------------------------------------------------------------------------

def _matmul_bias_kernel(x_ref, w_ref, b_ref, o_ref, *, activation):
    acc = jnp.dot(x_ref[...], w_ref[...], preferred_element_type=jnp.float32)
    acc = acc + b_ref[...]
    if activation == "relu":
        acc = jnp.maximum(acc, 0.0)
    o_ref[...] = acc.astype(o_ref.dtype)


def matmul_bias(x, w, b, activation=None):
    """(M,K) @ (K,N) + b  (single VMEM block; shapes here are small)."""
    M, K = x.shape
    _, N = w.shape
    return pl.pallas_call(
        functools.partial(_matmul_bias_kernel, activation=activation),
        grid=(1,),
        in_specs=[
            pl.BlockSpec((M, K), lambda i: (0, 0)),
            pl.BlockSpec((K, N), lambda i: (0, 0)),
            pl.BlockSpec((1, N), lambda i: (0, 0)),
        ],
        out_specs=pl.BlockSpec((M, N), lambda i: (0, 0)),
        out_shape=jax.ShapeDtypeStruct((M, N), jnp.float32),
    )(x, w, b.reshape(1, N))


def conv2d_relu(x_nhwc, w, b, stride=2, pad=1):
    """x (B,H,W,Cin), w (kh*kw*Cin, Cout), b (Cout,) -> (B,Ho,Wo,Cout) with ReLU."""
    kh = kw = 3
    xp = jnp.pad(x_nhwc, ((0, 0), (pad, pad), (pad, pad), (0, 0)))
    B, Hp, Wp, C = xp.shape
    Ho = (Hp - kh) // stride + 1
    Wo = (Wp - kw) // stride + 1
    cols = []
    for i in range(kh):
        for j in range(kw):
            cols.append(xp[:, i:i + Ho * stride:stride, j:j + Wo * stride:stride, :])
    patches = jnp.concatenate(cols, axis=-1).reshape(B * Ho * Wo, kh * kw * C)
    out = matmul_bias(patches, w, b, activation="relu")    # Pallas MXU matmul
    return out.reshape(B, Ho, Wo, -1)


# ----------------------------------------------------------------------------
# Fully fused decoder: ONE pallas_call (grid=(1,)), unrolled time loop inside.
# ----------------------------------------------------------------------------

def _decoder_kernel(feat_ref, emb_ref,
                    encw_ref, encb_ref,
                    initw_ref, initb_ref,
                    v_ref, dab_ref,
                    whatt_ref, wemb_ref, wctx_ref, lb_ref,
                    fcw_ref, fcb_ref,
                    logits_ref, alpha_ref,
                    h_all_sc):
    feat = feat_ref[...]                                  # (B, P, E)
    B, P, E = feat.shape
    T, _, De = emb_ref.shape
    A = encw_ref.shape[1]
    H4 = wemb_ref.shape[1]
    H = H4 // 4

    # -------- prologue: everything hoistable out of the recurrence --------
    # initial LSTM state from mean feature: one lane-dense (E, 2H) matmul
    f_mean = jnp.mean(feat, axis=1)                       # (B, E)
    hc0 = (jnp.dot(f_mean, initw_ref[...],
                   preferred_element_type=jnp.float32) + initb_ref[...])   # (B, 2H)
    h = hc0[:, :H]
    c = hc0[:, H:]

    # encoder-side attention projection, one matmul over all pixels
    enc_proj = (jnp.dot(feat.reshape(B * P, E), encw_ref[...],
                        preferred_element_type=jnp.float32)
                + encb_ref[...]).reshape(B, P, A)         # (B, P, A)

    # embedding contribution to the LSTM gates, one matmul over all timesteps
    emb_proj = (jnp.dot(emb_ref[...].reshape(T * B, De), wemb_ref[...],
                        preferred_element_type=jnp.float32)
                + lb_ref[...]).reshape(T, B, H4)          # (T, B, 4H)  (bias folded in)

    v = v_ref[...]                                        # (1, A)
    dab = dab_ref[...]                                    # (1, A)
    whatt = whatt_ref[...]                                # (H, 4H + A)  [W_hh | dec_att_w]
    wctx = wctx_ref[...]                                  # (E, 4H)

    # -------- recurrence: fully unrolled static loop (T is small/static) --------
    for t in range(T):
        # fused recurrent matmul: gate term and dec_att projection in one MXU push
        y = jnp.dot(h, whatt, preferred_element_type=jnp.float32)   # (B, 4H + A)
        dec_proj = y[:, H4:] + dab                                   # (B, A)

        # additive attention over the P pixels
        e = jnp.maximum(enc_proj + dec_proj[:, None, :], 0.0)        # (B, P, A)
        scores = jnp.sum(e * v, axis=-1)                             # (B, P)
        m = jnp.max(scores, axis=-1, keepdims=True)
        pexp = jnp.exp(scores - m)
        alpha = pexp / jnp.sum(pexp, axis=-1, keepdims=True)         # softmax (exact)

        # context as a VPU multiply + sublane reduce (no M=1 MXU matmul)
        ctx = jnp.sum(alpha[:, :, None] * feat, axis=1)              # (B, E)

        # LSTM gates: recurrent term + context term + precomputed emb term
        gates = (y[:, :H4]
                 + jnp.dot(ctx, wctx, preferred_element_type=jnp.float32)
                 + emb_proj[t])                                      # (B, 4H)
        sig = jax.nn.sigmoid(gates[:, :3 * H])                       # gates [i, f, o]
        i_g = sig[:, :H]
        f_g = sig[:, H:2 * H]
        o_g = sig[:, 2 * H:]
        g_g = jnp.tanh(gates[:, 3 * H:])                             # gate g
        c = f_g * c + i_g * g_g
        h = o_g * jnp.tanh(c)

        h_all_sc[t] = h                                              # VMEM-resident
        alpha_ref[t] = alpha                                         # VMEM-resident output

    # -------- vocab head: one lane-dense matmul over all hidden states --------
    h_all = h_all_sc[...].reshape(T * B, H)
    logits_ref[...] = (jnp.dot(h_all, fcw_ref[...],
                               preferred_element_type=jnp.float32)
                       + fcb_ref[...]).astype(logits_ref.dtype)


def fused_decoder(features, emb_tbd, p):
    """features (B,P,E), emb_tbd (T,B,De) -> logits (T*B,Vp), alpha (T,B,P)."""
    B, P, E = features.shape
    T, _, De = emb_tbd.shape
    A = p["full_att_v"].shape[1]
    H = p["init_hc_w"].shape[1] // 2
    Vp = p["fc_w_pad"].shape[1]

    def full(shape):
        return pl.BlockSpec(shape, lambda i, _s=shape: (0,) * len(_s))

    return pl.pallas_call(
        _decoder_kernel,
        grid=(1,),
        in_specs=[
            full((B, P, E)),              # features
            full((T, B, De)),             # embeddings (time-major)
            full((E, A)), full((1, A)),   # enc_att
            full((E, 2 * H)), full((1, 2 * H)),   # init h/c projection (fused)
            full((1, A)), full((1, A)),   # full_att v, dec_att bias
            full((H, 4 * H + A)),         # [W_hh | dec_att_w]
            full((De, 4 * H)),            # W_emb
            full((E, 4 * H)),             # W_ctx
            full((1, 4 * H)),             # lstm bias
            full((H, Vp)), full((1, Vp)), # vocab head (lane-dense padded)
        ],
        out_specs=(
            full((T * B, Vp)),
            full((T, B, P)),
        ),
        out_shape=(
            jax.ShapeDtypeStruct((T * B, Vp), jnp.float32),
            jax.ShapeDtypeStruct((T, B, P), jnp.float32),
        ),
        scratch_shapes=[pltpu.VMEM((T, B, H), jnp.float32)],   # all hidden states
        compiler_params=pltpu.CompilerParams(
            dimension_semantics=("arbitrary",)),
    )(features, emb_tbd,
      p["enc_att_w"], p["enc_att_b"].reshape(1, A),
      p["init_hc_w"], p["init_hc_b"].reshape(1, 2 * H),
      p["full_att_v"], p["dec_att_b"].reshape(1, A),
      p["lstm_w_h_att"], p["lstm_w_emb"], p["lstm_w_ctx"],
      p["lstm_b"].reshape(1, 4 * H),
      p["fc_w_pad"], p["fc_b_pad"].reshape(1, Vp))


# ----------------------------------------------------------------------------
# Parameter construction (deterministic, synthetic, pre-packed for the kernel)
# ----------------------------------------------------------------------------

def make_params(key, *, emb_size, vocab_size, attn_size,
                enc_hidden_size, dec_hidden_size, c1=16):
    ks = iter(jax.random.split(key, 24))
    s = 0.05
    E, H, A, De, V = enc_hidden_size, dec_hidden_size, attn_size, emb_size, vocab_size
    p = {}
    # EncoderCNN: two 3x3 stride-2 convs, 3 -> c1 -> E
    p["conv1_w"] = s * jax.random.normal(next(ks), (3 * 3 * 3, c1), jnp.float32)
    p["conv1_b"] = jnp.zeros((c1,), jnp.float32)
    p["conv2_w"] = s * jax.random.normal(next(ks), (3 * 3 * c1, E), jnp.float32)
    p["conv2_b"] = jnp.zeros((E,), jnp.float32)
    # DecoderRNN
    p["embed"] = s * jax.random.normal(next(ks), (V, De), jnp.float32)
    # init_h / init_c fused into one lane-dense (E, 2H) projection
    p["init_hc_w"] = s * jax.random.normal(next(ks), (E, 2 * H), jnp.float32)
    p["init_hc_b"] = jnp.zeros((2 * H,), jnp.float32)
    # additive attention
    p["enc_att_w"] = s * jax.random.normal(next(ks), (E, A), jnp.float32)
    p["enc_att_b"] = jnp.zeros((A,), jnp.float32)
    dec_att_w = s * jax.random.normal(next(ks), (H, A), jnp.float32)
    p["dec_att_b"] = jnp.zeros((A,), jnp.float32)
    p["full_att_v"] = s * jax.random.normal(next(ks), (1, A), jnp.float32)
    # LSTMCell weights split per operand; gate column order [i, f, o | g]
    p["lstm_w_emb"] = s * jax.random.normal(next(ks), (De, 4 * H), jnp.float32)
    p["lstm_w_ctx"] = s * jax.random.normal(next(ks), (E, 4 * H), jnp.float32)
    w_hh = s * jax.random.normal(next(ks), (H, 4 * H), jnp.float32)
    # recurrent matmul fused with the dec_att projection: h @ [W_hh | dec_att_w]
    p["lstm_w_h_att"] = jnp.concatenate([w_hh, dec_att_w], axis=1)
    p["lstm_b"] = jnp.zeros((4 * H,), jnp.float32)
    # vocab head, padded to a lane-dense multiple of 128
    Vp = ((V + 127) // 128) * 128
    fc_w = s * jax.random.normal(next(ks), (H, V), jnp.float32)
    p["fc_w_pad"] = jnp.pad(fc_w, ((0, 0), (0, Vp - V)))
    p["fc_b_pad"] = jnp.zeros((Vp,), jnp.float32)
    return p


# ----------------------------------------------------------------------------
# EncoderDecoder forward (decoder_type='lstm', use_attention=True)
# ----------------------------------------------------------------------------

def encoder_decoder_forward(params, images_nchw, captions, *, vocab_size):
    # ---- EncoderCNN ----
    x = jnp.transpose(images_nchw, (0, 2, 3, 1))                 # NCHW -> NHWC
    x = conv2d_relu(x, params["conv1_w"], params["conv1_b"])     # (B, 8, 8, c1)
    x = conv2d_relu(x, params["conv2_w"], params["conv2_b"])     # (B, 4, 4, E)
    B, Hf, Wf, E = x.shape
    P = Hf * Wf
    features = x.reshape(B, P, E)                                # (B, P, E)

    # ---- embedding lookup (glue gather) + time-major layout ----
    T = captions.shape[1]
    emb = jnp.take(params["embed"], captions, axis=0)            # (B, T, De)
    emb_tbd = jnp.transpose(emb, (1, 0, 2))                      # (T, B, De)

    # ---- single fused decoder kernel (init, attention-LSTM loop, vocab head) ----
    logits, alpha = fused_decoder(features, emb_tbd, params)     # (T*B,Vp), (T,B,P)

    V = vocab_size
    outputs = logits[:, :V].reshape(T, B, V).transpose(1, 0, 2)  # (B, T, V)
    attentions = jnp.transpose(alpha, (1, 0, 2))                 # (B, T, P)
    return outputs, attentions


# ----------------------------------------------------------------------------
# Main
# ----------------------------------------------------------------------------

if __name__ == "__main__":
    emb_size, vocab_size, attn_size = 32, 50, 32
    enc_hidden_size, dec_hidden_size = 64, 64
    B, T = 2, 8

    key = jax.random.PRNGKey(0)
    k_img, k_cap, k_par = jax.random.split(key, 3)

    images = jax.random.normal(k_img, (B, 3, 16, 16), jnp.float32)     # NCHW like PyTorch
    captions = jax.random.randint(k_cap, (B, T), 0, vocab_size, jnp.int32)

    params = make_params(k_par, emb_size=emb_size, vocab_size=vocab_size,
                         attn_size=attn_size, enc_hidden_size=enc_hidden_size,
                         dec_hidden_size=dec_hidden_size)

    fwd = jax.jit(functools.partial(encoder_decoder_forward, vocab_size=vocab_size))
    outputs, attentions = fwd(params, images, captions)
    jax.block_until_ready((outputs, attentions))

    assert outputs.shape == (B, T, vocab_size)
    assert attentions.shape == (B, T, 16)
    print("KERNEL_OK")
</pallas_src>

<mosaic_0001>
module attributes {stable_mosaic.version = 11 : i64} {
  func.func @_matmul_bias_kernel(%arg0: i32, %arg1: memref<128x27xf32, #tpu.memory_space<vmem>>, %arg2: memref<27x16xf32, #tpu.memory_space<vmem>>, %arg3: memref<1x16xf32, #tpu.memory_space<vmem>>, %arg4: memref<128x16xf32, #tpu.memory_space<vmem>>) attributes {dimension_semantics = [#tpu.dimension_semantics<arbitrary>], iteration_bounds = array<i64: 1>, scalar_prefetch = 0 : i64, scratch_operands = 0 : i64, tpu.core_type = #tpu.core_type<tc>, window_params = [{pipeline_mode = #tpu.pipeline_mode<synchronous>, transform_indices = @transform_0, window_bounds = array<i64: 128, 27>}, {pipeline_mode = #tpu.pipeline_mode<synchronous>, transform_indices = @transform_1, window_bounds = array<i64: 27, 16>}, {pipeline_mode = #tpu.pipeline_mode<synchronous>, transform_indices = @transform_2, window_bounds = array<i64: 1, 16>}, {pipeline_mode = #tpu.pipeline_mode<synchronous>, transform_indices = @transform_3, window_bounds = array<i64: 128, 16>}]} {
    %c0 = arith.constant 0 : index
    %c0_0 = arith.constant 0 : index
    %0 = vector.load %arg1[%c0, %c0_0] : memref<128x27xf32, #tpu.memory_space<vmem>>, vector<128x27xf32>
    %c0_1 = arith.constant 0 : index
    %c0_2 = arith.constant 0 : index
    %1 = vector.load %arg2[%c0_1, %c0_2] : memref<27x16xf32, #tpu.memory_space<vmem>>, vector<27x16xf32>
    %cst = arith.constant dense<0.000000e+00> : vector<128x16xf32>
    %2 = tpu.matmul %0, %1, %cst {dimension_numbers = #tpu.dot_dimension_numbers<[1], [0], [0], [1], [0, 0, 1, 1], [], []>} : vector<128x27xf32>, vector<27x16xf32>, vector<128x16xf32> -> vector<128x16xf32>
    %c0_3 = arith.constant 0 : index
    %c0_4 = arith.constant 0 : index
    %3 = vector.load %arg3[%c0_3, %c0_4] : memref<1x16xf32, #tpu.memory_space<vmem>>, vector<1x16xf32>
    %4 = vector.broadcast %3 : vector<1x16xf32> to vector<128x16xf32>
    %5 = arith.addf %2, %4 : vector<128x16xf32>
    %cst_5 = arith.constant 0.000000e+00 : f32
    %6 = vector.broadcast %cst_5 : f32 to vector<128x16xf32>
    %7 = arith.maximumf %5, %6 : vector<128x16xf32>
    %c0_6 = arith.constant 0 : index
    %c0_7 = arith.constant 0 : index
    %8 = vector.load %arg4[%c0_6, %c0_7] : memref<128x16xf32, #tpu.memory_space<vmem>>, vector<128x16xf32>
    tpu.vector_store %arg4[%c0_6, %c0_7], %7 {strides = array<i32>} : memref<128x16xf32, #tpu.memory_space<vmem>>, vector<128x16xf32>,
    return
  }
  func.func @transform_0(%arg0: i32) -> (i32, i32) {
    %c0_i32 = arith.constant 0 : i32
    %c0_i32_0 = arith.constant 0 : i32
    %c0_i32_1 = arith.constant 0 : i32
    return %c0_i32, %c0_i32_0 : i32, i32
  }
  func.func @transform_1(%arg0: i32) -> (i32, i32) {
    %c0_i32 = arith.constant 0 : i32
    %c0_i32_0 = arith.constant 0 : i32
    %c0_i32_1 = arith.constant 0 : i32
    return %c0_i32, %c0_i32_0 : i32, i32
  }
  func.func @transform_2(%arg0: i32) -> (i32, i32) {
    %c0_i32 = arith.constant 0 : i32
    %c0_i32_0 = arith.constant 0 : i32
    %c0_i32_1 = arith.constant 0 : i32
    return %c0_i32, %c0_i32_0 : i32, i32
  }
  func.func @transform_3(%arg0: i32) -> (i32, i32) {
    %c0_i32 = arith.constant 0 : i32
    %c0_i32_0 = arith.constant 0 : i32
    %c0_i32_1 = arith.constant 0 : i32
    return %c0_i32, %c0_i32_0 : i32, i32
  }
}

module attributes {stable_mosaic.version = 11 : i64} {
  func.func @_matmul_bias_kernel(%arg0: i32, %arg1: memref<32x144xf32, #tpu.memory_space<vmem>>, %arg2: memref<144x64xf32, #tpu.memory_space<vmem>>, %arg3: memref<1x64xf32, #tpu.memory_space<vmem>>, %arg4: memref<32x64xf32, #tpu.memory_space<vmem>>) attributes {dimension_semantics = [#tpu.dimension_semantics<arbitrary>], iteration_bounds = array<i64: 1>, scalar_prefetch = 0 : i64, scratch_operands = 0 : i64, tpu.core_type = #tpu.core_type<tc>, window_params = [{pipeline_mode = #tpu.pipeline_mode<synchronous>, transform_indices = @transform_0, window_bounds = array<i64: 32, 144>}, {pipeline_mode = #tpu.pipeline_mode<synchronous>, transform_indices = @transform_1, window_bounds = array<i64: 144, 64>}, {pipeline_mode = #tpu.pipeline_mode<synchronous>, transform_indices = @transform_2, window_bounds = array<i64: 1, 64>}, {pipeline_mode = #tpu.pipeline_mode<synchronous>, transform_indices = @transform_3, window_bounds = array<i64: 32, 64>}]} {
    %c0 = arith.constant 0 : index
    %c0_0 = arith.constant 0 : index
    %0 = vector.load %arg1[%c0, %c0_0] : memref<32x144xf32, #tpu.memory_space<vmem>>, vector<32x144xf32>
    %c0_1 = arith.constant 0 : index
    %c0_2 = arith.constant 0 : index
    %1 = vector.load %arg2[%c0_1, %c0_2] : memref<144x64xf32, #tpu.memory_space<vmem>>, vector<144x64xf32>
    %cst = arith.constant dense<0.000000e+00> : vector<32x64xf32>
    %2 = tpu.matmul %0, %1, %cst {dimension_numbers = #tpu.dot_dimension_numbers<[1], [0], [0], [1], [0, 0, 1, 1], [], []>} : vector<32x144xf32>, vector<144x64xf32>, vector<32x64xf32> -> vector<32x64xf32>
    %c0_3 = arith.constant 0 : index
    %c0_4 = arith.constant 0 : index
    %3 = vector.load %arg3[%c0_3, %c0_4] : memref<1x64xf32, #tpu.memory_space<vmem>>, vector<1x64xf32>
    %4 = vector.broadcast %3 : vector<1x64xf32> to vector<32x64xf32>
    %5 = arith.addf %2, %4 : vector<32x64xf32>
    %cst_5 = arith.constant 0.000000e+00 : f32
    %6 = vector.broadcast %cst_5 : f32 to vector<32x64xf32>
    %7 = arith.maximumf %5, %6 : vector<32x64xf32>
    %c0_6 = arith.constant 0 : index
    %c0_7 = arith.constant 0 : index
    %8 = vector.load %arg4[%c0_6, %c0_7] : memref<32x64xf32, #tpu.memory_space<vmem>>, vector<32x64xf32>
    tpu.vector_store %arg4[%c0_6, %c0_7], %7 {strides = array<i32>} : memref<32x64xf32, #tpu.memory_space<vmem>>, vector<32x64xf32>,
    return
  }
  func.func @transform_0(%arg0: i32) -> (i32, i32) {
    %c0_i32 = arith.constant 0 : i32
    %c0_i32_0 = arith.constant 0 : i32
    %c0_i32_1 = arith.constant 0 : i32
    return %c0_i32, %c0_i32_0 : i32, i32
  }
  func.func @transform_1(%arg0: i32) -> (i32, i32) {
    %c0_i32 = arith.constant 0 : i32
    %c0_i32_0 = arith.constant 0 : i32
    %c0_i32_1 = arith.constant 0 : i32
    return %c0_i32, %c0_i32_0 : i32, i32
  }
  func.func @transform_2(%arg0: i32) -> (i32, i32) {
    %c0_i32 = arith.constant 0 : i32
    %c0_i32_0 = arith.constant 0 : i32
    %c0_i32_1 = arith.constant 0 : i32
    return %c0_i32, %c0_i32_0 : i32, i32
  }
  func.func @transform_3(%arg0: i32) -> (i32, i32) {
    %c0_i32 = arith.constant 0 : i32
    %c0_i32_0 = arith.constant 0 : i32
    %c0_i32_1 = arith.constant 0 : i32
    return %c0_i32, %c0_i32_0 : i32, i32
  }
}

module attributes {stable_mosaic.version = 11 : i64} {
  func.func @_decoder_kernel(%arg0: i32, %arg1: memref<2x16x64xf32, #tpu.memory_space<vmem>>, %arg2: memref<8x2x32xf32, #tpu.memory_space<vmem>>, %arg3: memref<64x32xf32, #tpu.memory_space<vmem>>, %arg4: memref<1x32xf32, #tpu.memory_space<vmem>>, %arg5: memref<64x128xf32, #tpu.memory_space<vmem>>, %arg6: memref<1x128xf32, #tpu.memory_space<vmem>>, %arg7: memref<1x32xf32, #tpu.memory_space<vmem>>, %arg8: memref<1x32xf32, #tpu.memory_space<vmem>>, %arg9: memref<64x288xf32, #tpu.memory_space<vmem>>, %arg10: memref<32x256xf32, #tpu.memory_space<vmem>>, %arg11: memref<64x256xf32, #tpu.memory_space<vmem>>, %arg12: memref<1x256xf32, #tpu.memory_space<vmem>>, %arg13: memref<64x128xf32, #tpu.memory_space<vmem>>, %arg14: memref<1x128xf32, #tpu.memory_space<vmem>>, %arg15: memref<16x128xf32, #tpu.memory_space<vmem>>, %arg16: memref<8x2x16xf32, #tpu.memory_space<vmem>>, %arg17: memref<8x2x64xf32, #tpu.memory_space<vmem>>) attributes {dimension_semantics = [#tpu.dimension_semantics<arbitrary>], iteration_bounds = array<i64: 1>, scalar_prefetch = 0 : i64, scratch_operands = 1 : i64, tpu.core_type = #tpu.core_type<tc>, window_params = [{pipeline_mode = #tpu.pipeline_mode<synchronous>, transform_indices = @transform_0, window_bounds = array<i64: 2, 16, 64>}, {pipeline_mode = #tpu.pipeline_mode<synchronous>, transform_indices = @transform_1, window_bounds = array<i64: 8, 2, 32>}, {pipeline_mode = #tpu.pipeline_mode<synchronous>, transform_indices = @transform_2, window_bounds = array<i64: 64, 32>}, {pipeline_mode = #tpu.pipeline_mode<synchronous>, transform_indices = @transform_3, window_bounds = array<i64: 1, 32>}, {pipeline_mode = #tpu.pipeline_mode<synchronous>, transform_indices = @transform_4, window_bounds = array<i64: 64, 128>}, {pipeline_mode = #tpu.pipeline_mode<synchronous>, transform_indices = @transform_5, window_bounds = array<i64: 1, 128>}, {pipeline_mode = #tpu.pipeline_mode<synchronous>, transform_indices = @transform_6, window_bounds = array<i64: 1, 32>}, {pipeline_mode = #tpu.pipeline_mode<synchronous>, transform_indices = @transform_7, window_bounds = array<i64: 1, 32>}, {pipeline_mode = #tpu.pipeline_mode<synchronous>, transform_indices = @transform_8, window_bounds = array<i64: 64, 288>}, {pipeline_mode = #tpu.pipeline_mode<synchronous>, transform_indices = @transform_9, window_bounds = array<i64: 32, 256>}, {pipeline_mode = #tpu.pipeline_mode<synchronous>, transform_indices = @transform_10, window_bounds = array<i64: 64, 256>}, {pipeline_mode = #tpu.pipeline_mode<synchronous>, transform_indices = @transform_11, window_bounds = array<i64: 1, 256>}, {pipeline_mode = #tpu.pipeline_mode<synchronous>, transform_indices = @transform_12, window_bounds = array<i64: 64, 128>}, {pipeline_mode = #tpu.pipeline_mode<synchronous>, transform_indices = @transform_13, window_bounds = array<i64: 1, 128>}, {pipeline_mode = #tpu.pipeline_mode<synchronous>, transform_indices = @transform_14, window_bounds = array<i64: 16, 128>}, {pipeline_mode = #tpu.pipeline_mode<synchronous>, transform_indices = @transform_15, window_bounds = array<i64: 8, 2, 16>}]} {
    %c0 = arith.constant 0 : index
    %c0_0 = arith.constant 0 : index
    %c0_1 = arith.constant 0 : index
    %0 = vector.load %arg1[%c0, %c0_0, %c0_1] : memref<2x16x64xf32, #tpu.memory_space<vmem>>, vector<2x16x64xf32>
    %cst = arith.constant dense<0.000000e+00> : vector<2x64xf32>
    %1 = vector.multi_reduction <add>, %0, %cst [1] : vector<2x16x64xf32> to vector<2x64xf32>
    %cst_2 = arith.constant 1.600000e+01 : f32
    %2 = vector.broadcast %cst_2 : f32 to vector<2x64xf32>
    %3 = arith.divf %1, %2 : vector<2x64xf32>
    %c0_3 = arith.constant 0 : index
    %c0_4 = arith.constant 0 : index
    %4 = vector.load %arg5[%c0_3, %c0_4] : memref<64x128xf32, #tpu.memory_space<vmem>>, vector<64x128xf32>
    %cst_5 = arith.constant dense<0.000000e+00> : vector<2x128xf32>
    %5 = tpu.matmul %3, %4, %cst_5 {dimension_numbers = #tpu.dot_dimension_numbers<[1], [0], [0], [1], [0, 0, 1, 1], [], []>} : vector<2x64xf32>, vector<64x128xf32>, vector<2x128xf32> -> vector<2x128xf32>
    %c0_6 = arith.constant 0 : index
    %c0_7 = arith.constant 0 : index
    %6 = vector.load %arg6[%c0_6, %c0_7] : memref<1x128xf32, #tpu.memory_space<vmem>>, vector<1x128xf32>
    %7 = vector.broadcast %6 : vector<1x128xf32> to vector<2x128xf32>
    %8 = arith.addf %5, %7 : vector<2x128xf32>
    %9 = vector.extract_strided_slice %8 {offsets = [0, 0], sizes = [2, 64], strides = [1, 1]} : vector<2x128xf32> to vector<2x64xf32>
    %10 = vector.extract_strided_slice %8 {offsets = [0, 64], sizes = [2, 64], strides = [1, 1]} : vector<2x128xf32> to vector<2x64xf32>
    %11 = vector.shape_cast %0 : vector<2x16x64xf32> to vector<32x64xf32>
    %c0_8 = arith.constant 0 : index
    %c0_9 = arith.constant 0 : index
    %12 = vector.load %arg3[%c0_8, %c0_9] : memref<64x32xf32, #tpu.memory_space<vmem>>, vector<64x32xf32>
    %cst_10 = arith.constant dense<0.000000e+00> : vector<32x32xf32>
    %13 = tpu.matmul %11, %12, %cst_10 {dimension_numbers = #tpu.dot_dimension_numbers<[1], [0], [0], [1], [0, 0, 1, 1], [], []>} : vector<32x64xf32>, vector<64x32xf32>, vector<32x32xf32> -> vector<32x32xf32>
    %c0_11 = arith.constant 0 : index
    %c0_12 = arith.constant 0 : index
    %14 = vector.load %arg4[%c0_11, %c0_12] : memref<1x32xf32, #tpu.memory_space<vmem>>, vector<1x32xf32>
    %15 = vector.broadcast %14 : vector<1x32xf32> to vector<32x32xf32>
    %16 = arith.addf %13, %15 : vector<32x32xf32>
    %17 = vector.shape_cast %16 : vector<32x32xf32> to vector<2x16x32xf32>
    %c0_13 = arith.constant 0 : index
    %c0_14 = arith.constant 0 : index
    %c0_15 = arith.constant 0 : index
    %18 = vector.load %arg2[%c0_13, %c0_14, %c0_15] : memref<8x2x32xf32, #tpu.memory_space<vmem>>, vector<8x2x32xf32>
    %19 = vector.shape_cast %18 : vector<8x2x32xf32> to vector<16x32xf32>
    %c0_16 = arith.constant 0 : index
    %c0_17 = arith.constant 0 : index
    %20 = vector.load %arg10[%c0_16, %c0_17] : memref<32x256xf32, #tpu.memory_space<vmem>>, vector<32x256xf32>
    %cst_18 = arith.constant dense<0.000000e+00> : vector<16x256xf32>
    %21 = tpu.matmul %19, %20, %cst_18 {dimension_numbers = #tpu.dot_dimension_numbers<[1], [0], [0], [1], [0, 0, 1, 1], [], []>} : vector<16x32xf32>, vector<32x256xf32>, vector<16x256xf32> -> vector<16x256xf32>
    %c0_19 = arith.constant 0 : index
    %c0_20 = arith.constant 0 : index
    %22 = vector.load %arg12[%c0_19, %c0_20] : memref<1x256xf32, #tpu.memory_space<vmem>>, vector<1x256xf32>
    %23 = vector.broadcast %22 : vector<1x256xf32> to vector<16x256xf32>
    %24 = arith.addf %21, %23 : vector<16x256xf32>
    %25 = vector.shape_cast %24 : vector<16x256xf32> to vector<8x2x256xf32>
    %c0_21 = arith.constant 0 : index
    %c0_22 = arith.constant 0 : index
    %26 = vector.load %arg7[%c0_21, %c0_22] : memref<1x32xf32, #tpu.memory_space<vmem>>, vector<1x32xf32>
    %c0_23 = arith.constant 0 : index
    %c0_24 = arith.constant 0 : index
    %27 = vector.load %arg8[%c0_23, %c0_24] : memref<1x32xf32, #tpu.memory_space<vmem>>, vector<1x32xf32>
    %c0_25 = arith.constant 0 : index
    %c0_26 = arith.constant 0 : index
    %28 = vector.load %arg9[%c0_25, %c0_26] : memref<64x288xf32, #tpu.memory_space<vmem>>, vector<64x288xf32>
    %c0_27 = arith.constant 0 : index
    %c0_28 = arith.constant 0 : index
    %29 = vector.load %arg11[%c0_27, %c0_28] : memref<64x256xf32, #tpu.memory_space<vmem>>, vector<64x256xf32>
    %cst_29 = arith.constant dense<0.000000e+00> : vector<2x288xf32>
    %30 = tpu.matmul %9, %28, %cst_29 {dimension_numbers = #tpu.dot_dimension_numbers<[1], [0], [0], [1], [0, 0, 1, 1], [], []>} : vector<2x64xf32>, vector<64x288xf32>, vector<2x288xf32> -> vector<2x288xf32>
    %31 = vector.extract_strided_slice %30 {offsets = [0, 256], sizes = [2, 32], strides = [1, 1]} : vector<2x288xf32> to vector<2x32xf32>
    %32 = vector.broadcast %27 : vector<1x32xf32> to vector<2x32xf32>
    %33 = arith.addf %31, %32 : vector<2x32xf32>
    %34 = vector.shape_cast %33 : vector<2x32xf32> to vector<2x1x32xf32>
    %35 = vector.broadcast %34 : vector<2x1x32xf32> to vector<2x16x32xf32>
    %36 = arith.addf %17, %35 : vector<2x16x32xf32>
    %cst_30 = arith.constant 0.000000e+00 : f32
    %37 = vector.broadcast %cst_30 : f32 to vector<2x16x32xf32>
    %38 = arith.maximumf %36, %37 : vector<2x16x32xf32>
    %39 = vector.shape_cast %26 : vector<1x32xf32> to vector<1x1x32xf32>
    %40 = vector.broadcast %39 : vector<1x1x32xf32> to vector<2x16x32xf32>
    %41 = arith.mulf %38, %40 : vector<2x16x32xf32>
    %cst_31 = arith.constant dense<0.000000e+00> : vector<2x16xf32>
    %42 = vector.multi_reduction <add>, %41, %cst_31 [2] : vector<2x16x32xf32> to vector<2x16xf32>
    %cst_32 = arith.constant dense<0xFF800000> : vector<2xf32>
    %43 = vector.multi_reduction <maximumf>, %42, %cst_32 [1] : vector<2x16xf32> to vector<2xf32>
    %44 = vector.shape_cast %43 : vector<2xf32> to vector<2x1xf32>
    %45 = vector.broadcast %44 : vector<2x1xf32> to vector<2x16xf32>
    %46 = arith.subf %42, %45 : vector<2x16xf32>
    %47 = math.exp %46 : vector<2x16xf32>
    %cst_33 = arith.constant dense<0.000000e+00> : vector<2xf32>
    %48 = vector.multi_reduction <add>, %47, %cst_33 [1] : vector<2x16xf32> to vector<2xf32>
    %49 = vector.shape_cast %48 : vector<2xf32> to vector<2x1xf32>
    %50 = vector.broadcast %49 : vector<2x1xf32> to vector<2x16xf32>
    %51 = arith.divf %47, %50 : vector<2x16xf32>
    %52 = vector.shape_cast %51 : vector<2x16xf32> to vector<2x16x1xf32>
    %53 = vector.broadcast %52 : vector<2x16x1xf32> to vector<2x16x64xf32>
    %54 = arith.mulf %53, %0 : vector<2x16x64xf32>
    %cst_34 = arith.constant dense<0.000000e+00> : vector<2x64xf32>
    %55 = vector.multi_reduction <add>, %54, %cst_34 [1] : vector<2x16x64xf32> to vector<2x64xf32>
    %56 = vector.extract_strided_slice %30 {offsets = [0, 0], sizes = [2, 256], strides = [1, 1]} : vector<2x288xf32> to vector<2x256xf32>
    %cst_35 = arith.constant dense<0.000000e+00> : vector<2x256xf32>
    %57 = tpu.matmul %55, %29, %cst_35 {dimension_numbers = #tpu.dot_dimension_numbers<[1], [0], [0], [1], [0, 0, 1, 1], [], []>} : vector<2x64xf32>, vector<64x256xf32>, vector<2x256xf32> -> vector<2x256xf32>
    %58 = arith.addf %56, %57 : vector<2x256xf32>
    %59 = vector.extract_strided_slice %25 {offsets = [0, 0, 0], sizes = [1, 2, 256], strides = [1, 1, 1]} : vector<8x2x256xf32> to vector<1x2x256xf32>
    %60 = vector.shape_cast %59 : vector<1x2x256xf32> to vector<2x256xf32>
    %61 = arith.addf %58, %60 : vector<2x256xf32>
    %62 = vector.extract_strided_slice %61 {offsets = [0, 0], sizes = [2, 192], strides = [1, 1]} : vector<2x256xf32> to vector<2x192xf32>
    %63 = arith.negf %62 : vector<2x192xf32>
    %64 = math.exp %63 : vector<2x192xf32>
    %cst_36 = arith.constant 1.000000e+00 : f32
    %65 = vector.broadcast %cst_36 : f32 to vector<2x192xf32>
    %66 = arith.addf %65, %64 : vector<2x192xf32>
    %67 = arith.divf %65, %66 : vector<2x192xf32>
    %68 = vector.extract_strided_slice %67 {offsets = [0, 0], sizes = [2, 64], strides = [1, 1]} : vector<2x192xf32> to vector<2x64xf32>
    %69 = vector.extract_strided_slice %67 {offsets = [0, 64], sizes = [2, 64], strides = [1, 1]} : vector<2x192xf32> to vector<2x64xf32>
    %70 = vector.extract_strided_slice %67 {offsets = [0, 128], sizes = [2, 64], strides = [1, 1]} : vector<2x192xf32> to vector<2x64xf32>
    %71 = vector.extract_strided_slice %61 {offsets = [0, 192], sizes = [2, 64], strides = [1, 1]} : vector<2x256xf32> to vector<2x64xf32>
    %72 = math.tanh %71 : vector<2x64xf32>
    %73 = arith.mulf %69, %10 : vector<2x64xf32>
    %74 = arith.mulf %68, %72 : vector<2x64xf32>
    %75 = arith.addf %73, %74 : vector<2x64xf32>
    %76 = math.tanh %75 : vector<2x64xf32>
    %77 = arith.mulf %70, %76 : vector<2x64xf32>
    %c0_37 = arith.constant 0 : index
    %c0_38 = arith.constant 0 : index
    %c0_39 = arith.constant 0 : index
    %78 = vector.load %arg17[%c0_37, %c0_38, %c0_39] : memref<8x2x64xf32, #tpu.memory_space<vmem>>, vector<1x2x64xf32>
    %79 = vector.shape_cast %78 : vector<1x2x64xf32> to vector<2x64xf32>
    %80 = vector.shape_cast %77 : vector<2x64xf32> to vector<1x2x64xf32>
    tpu.vector_store %arg17[%c0_37, %c0_38, %c0_39], %80 {strides = array<i32>} : memref<8x2x64xf32, #tpu.memory_space<vmem>>, vector<1x2x64xf32>,
    %c0_40 = arith.constant 0 : index
    %c0_41 = arith.constant 0 : index
    %c0_42 = arith.constant 0 : index
    %81 = vector.load %arg16[%c0_40, %c0_41, %c0_42] : memref<8x2x16xf32, #tpu.memory_space<vmem>>, vector<1x2x16xf32>
    %82 = vector.shape_cast %81 : vector<1x2x16xf32> to vector<2x16xf32>
    %83 = vector.shape_cast %51 : vector<2x16xf32> to vector<1x2x16xf32>
    tpu.vector_store %arg16[%c0_40, %c0_41, %c0_42], %83 {strides = array<i32>} : memref<8x2x16xf32, #tpu.memory_space<vmem>>, vector<1x2x16xf32>,
    %cst_43 = arith.constant dense<0.000000e+00> : vector<2x288xf32>
    %84 = tpu.matmul %77, %28, %cst_43 {dimension_numbers = #tpu.dot_dimension_numbers<[1], [0], [0], [1], [0, 0, 1, 1], [], []>} : vector<2x64xf32>, vector<64x288xf32>, vector<2x288xf32> -> vector<2x288xf32>
    %85 = vector.extract_strided_slice %84 {offsets = [0, 256], sizes = [2, 32], strides = [1, 1]} : vector<2x288xf32> to vector<2x32xf32>
    %86 = vector.broadcast %27 : vector<1x32xf32> to vector<2x32xf32>
    %87 = arith.addf %85, %86 : vector<2x32xf32>
    %88 = vector.shape_cast %87 : vector<2x32xf32> to vector<2x1x32xf32>
    %89 = vector.broadcast %88 : vector<2x1x32xf32> to vector<2x16x32xf32>
    %90 = arith.addf %17, %89 : vector<2x16x32xf32>
    %cst_44 = arith.constant 0.000000e+00 : f32
    %91 = vector.broadcast %cst_44 : f32 to vector<2x16x32xf32>
    %92 = arith.maximumf %90, %91 : vector<2x16x32xf32>
    %93 = vector.shape_cast %26 : vector<1x32xf32> to vector<1x1x32xf32>
    %94 = vector.broadcast %93 : vector<1x1x32xf32> to vector<2x16x32xf32>
    %95 = arith.mulf %92, %94 : vector<2x16x32xf32>
    %cst_45 = arith.constant dense<0.000000e+00> : vector<2x16xf32>
    %96 = vector.multi_reduction <add>, %95, %cst_45 [2] : vector<2x16x32xf32> to vector<2x16xf32>
    %cst_46 = arith.constant dense<0xFF800000> : vector<2xf32>
    %97 = vector.multi_reduction <maximumf>, %96, %cst_46 [1] : vector<2x16xf32> to vector<2xf32>
    %98 = vector.shape_cast %97 : vector<2xf32> to vector<2x1xf32>
    %99 = vector.broadcast %98 : vector<2x1xf32> to vector<2x16xf32>
    %100 = arith.subf %96, %99 : vector<2x16xf32>
    %101 = math.exp %100 : vector<2x16xf32>
    %cst_47 = arith.constant dense<0.000000e+00> : vector<2xf32>
    %102 = vector.multi_reduction <add>, %101, %cst_47 [1] : vector<2x16xf32> to vector<2xf32>
    %103 = vector.shape_cast %102 : vector<2xf32> to vector<2x1xf32>
    %104 = vector.broadcast %103 : vector<2x1xf32> to vector<2x16xf32>
    %105 = arith.divf %101, %104 : vector<2x16xf32>
    %106 = vector.shape_cast %105 : vector<2x16xf32> to vector<2x16x1xf32>
    %107 = vector.broadcast %106 : vector<2x16x1xf32> to vector<2x16x64xf32>
    %108 = arith.mulf %107, %0 : vector<2x16x64xf32>
    %cst_48 = arith.constant dense<0.000000e+00> : vector<2x64xf32>
    %109 = vector.multi_reduction <add>, %108, %cst_48 [1] : vector<2x16x64xf32> to vector<2x64xf32>
    %110 = vector.extract_strided_slice %84 {offsets = [0, 0], sizes = [2, 256], strides = [1, 1]} : vector<2x288xf32> to vector<2x256xf32>
    %cst_49 = arith.constant dense<0.000000e+00> : vector<2x256xf32>
    %111 = tpu.matmul %109, %29, %cst_49 {dimension_numbers = #tpu.dot_dimension_numbers<[1], [0], [0], [1], [0, 0, 1, 1], [], []>} : vector<2x64xf32>, vector<64x256xf32>, vector<2x256xf32> -> vector<2x256xf32>
    %112 = arith.addf %110, %111 : vector<2x256xf32>
    %113 = vector.extract_strided_slice %25 {offsets = [1, 0, 0], sizes = [1, 2, 256], strides = [1, 1, 1]} : vector<8x2x256xf32> to vector<1x2x256xf32>
    %114 = vector.shape_cast %113 : vector<1x2x256xf32> to vector<2x256xf32>
    %115 = arith.addf %112, %114 : vector<2x256xf32>
    %116 = vector.extract_strided_slice %115 {offsets = [0, 0], sizes = [2, 192], strides = [1, 1]} : vector<2x256xf32> to vector<2x192xf32>
    %117 = arith.negf %116 : vector<2x192xf32>
    %118 = math.exp %117 : vector<2x192xf32>
    %cst_50 = arith.constant 1.000000e+00 : f32
    %119 = vector.broadcast %cst_50 : f32 to vector<2x192xf32>
    %120 = arith.addf %119, %118 : vector<2x192xf32>
    %121 = arith.divf %119, %120 : vector<2x192xf32>
    %122 = vector.extract_strided_slice %121 {offsets = [0, 0], sizes = [2, 64], strides = [1, 1]} : vector<2x192xf32> to vector<2x64xf32>
    %123 = vector.extract_strided_slice %121 {offsets = [0, 64], sizes = [2, 64], strides = [1, 1]} : vector<2x192xf32> to vector<2x64xf32>
    %124 = vector.extract_strided_slice %121 {offsets = [0, 128], sizes = [2, 64], strides = [1, 1]} : vector<2x192xf32> to vector<2x64xf32>
    %125 = vector.extract_strided_slice %115 {offsets = [0, 192], sizes = [2, 64], strides = [1, 1]} : vector<2x256xf32> to vector<2x64xf32>
    %126 = math.tanh %125 : vector<2x64xf32>
    %127 = arith.mulf %123, %75 : vector<2x64xf32>
    %128 = arith.mulf %122, %126 : vector<2x64xf32>
    %129 = arith.addf %127, %128 : vector<2x64xf32>
    %130 = math.tanh %129 : vector<2x64xf32>
    %131 = arith.mulf %124, %130 : vector<2x64xf32>
    %c1 = arith.constant 1 : index
    %c0_51 = arith.constant 0 : index
    %c0_52 = arith.constant 0 : index
    %132 = vector.load %arg17[%c1, %c0_51, %c0_52] : memref<8x2x64xf32, #tpu.memory_space<vmem>>, vector<1x2x64xf32>
    %133 = vector.shape_cast %132 : vector<1x2x64xf32> to vector<2x64xf32>
    %134 = vector.shape_cast %131 : vector<2x64xf32> to vector<1x2x64xf32>
    tpu.vector_store %arg17[%c1, %c0_51, %c0_52], %134 {strides = array<i32>} : memref<8x2x64xf32, #tpu.memory_space<vmem>>, vector<1x2x64xf32>,
    %c1_53 = arith.constant 1 : index
    %c0_54 = arith.constant 0 : index
    %c0_55 = arith.constant 0 : index
    %135 = vector.load %arg16[%c1_53, %c0_54, %c0_55] : memref<8x2x16xf32, #tpu.memory_space<vmem>>, vector<1x2x16xf32>
    %136 = vector.shape_cast %135 : vector<1x2x16xf32> to vector<2x16xf32>
    %137 = vector.shape_cast %105 : vector<2x16xf32> to vector<1x2x16xf32>
    tpu.vector_store %arg16[%c1_53, %c0_54, %c0_55], %137 {strides = array<i32>} : memref<8x2x16xf32, #tpu.memory_space<vmem>>, vector<1x2x16xf32>,
    %cst_56 = arith.constant dense<0.000000e+00> : vector<2x288xf32>
    %138 = tpu.matmul %131, %28, %cst_56 {dimension_numbers = #tpu.dot_dimension_numbers<[1], [0], [0], [1], [0, 0, 1, 1], [], []>} : vector<2x64xf32>, vector<64x288xf32>, vector<2x288xf32> -> vector<2x288xf32>
    %139 = vector.extract_strided_slice %138 {offsets = [0, 256], sizes = [2, 32], strides = [1, 1]} : vector<2x288xf32> to vector<2x32xf32>
    %140 = vector.broadcast %27 : vector<1x32xf32> to vector<2x32xf32>
    %141 = arith.addf %139, %140 : vector<2x32xf32>
    %142 = vector.shape_cast %141 : vector<2x32xf32> to vector<2x1x32xf32>
    %143 = vector.broadcast %142 : vector<2x1x32xf32> to vector<2x16x32xf32>
    %144 = arith.addf %17, %143 : vector<2x16x32xf32>
    %cst_57 = arith.constant 0.000000e+00 : f32
    %145 = vector.broadcast %cst_57 : f32 to vector<2x16x32xf32>
    %146 = arith.maximumf %144, %145 : vector<2x16x32xf32>
    %147 = vector.shape_cast %26 : vector<1x32xf32> to vector<1x1x32xf32>
    %148 = vector.broadcast %147 : vector<1x1x32xf32> to vector<2x16x32xf32>
    %149 = arith.mulf %146, %148 : vector<2x16x32xf32>
    %cst_58 = arith.constant dense<0.000000e+00> : vector<2x16xf32>
    %150 = vector.multi_reduction <add>, %149, %cst_58 [2] : vector<2x16x32xf32> to vector<2x16xf32>
    %cst_59 = arith.constant dense<0xFF800000> : vector<2xf32>
    %151 = vector.multi_reduction <maximumf>, %150, %cst_59 [1] : vector<2x16xf32> to vector<2xf32>
    %152 = vector.shape_cast %151 : vector<2xf32> to vector<2x1xf32>
    %153 = vector.broadcast %152 : vector<2x1xf32> to vector<2x16xf32>
    %154 = arith.subf %150, %153 : vector<2x16xf32>
    %155 = math.exp %154 : vector<2x16xf32>
    %cst_60 = arith.constant dense<0.000000e+00> : vector<2xf32>
    %156 = vector.multi_reduction <add>, %155, %cst_60 [1] : vector<2x16xf32> to vector<2xf32>
    %157 = vector.shape_cast %156 : vector<2xf32> to vector<2x1xf32>
    %158 = vector.broadcast %157 : vector<2x1xf32> to vector<2x16xf32>
    %159 = arith.divf %155, %158 : vector<2x16xf32>
    %160 = vector.shape_cast %159 : vector<2x16xf32> to vector<2x16x1xf32>
    %161 = vector.broadcast %160 : vector<2x16x1xf32> to vector<2x16x64xf32>
    %162 = arith.mulf %161, %0 : vector<2x16x64xf32>
    %cst_61 = arith.constant dense<0.000000e+00> : vector<2x64xf32>
    %163 = vector.multi_reduction <add>, %162, %cst_61 [1] : vector<2x16x64xf32> to vector<2x64xf32>
    %164 = vector.extract_strided_slice %138 {offsets = [0, 0], sizes = [2, 256], strides = [1, 1]} : vector<2x288xf32> to vector<2x256xf32>
    %cst_62 = arith.constant dense<0.000000e+00> : vector<2x256xf32>
    %165 = tpu.matmul %163, %29, %cst_62 {dimension_numbers = #tpu.dot_dimension_numbers<[1], [0], [0], [1], [0, 0, 1, 1], [], []>} : vector<2x64xf32>, vector<64x256xf32>, vector<2x256xf32> -> vector<2x256xf32>
    %166 = arith.addf %164, %165 : vector<2x256xf32>
    %167 = vector.extract_strided_slice %25 {offsets = [2, 0, 0], sizes = [1, 2, 256], strides = [1, 1, 1]} : vector<8x2x256xf32> to vector<1x2x256xf32>
    %168 = vector.shape_cast %167 : vector<1x2x256xf32> to vector<2x256xf32>
    %169 = arith.addf %166, %168 : vector<2x256xf32>
    %170 = vector.extract_strided_slice %169 {offsets = [0, 0], sizes = [2, 192], strides = [1, 1]} : vector<2x256xf32> to vector<2x192xf32>
    %171 = arith.negf %170 : vector<2x192xf32>
    %172 = math.exp %171 : vector<2x192xf32>
    %cst_63 = arith.constant 1.000000e+00 : f32
    %173 = vector.broadcast %cst_63 : f32 to vector<2x192xf32>
    %174 = arith.addf %173, %172 : vector<2x192xf32>
    %175 = arith.divf %173, %174 : vector<2x192xf32>
    %176 = vector.extract_strided_slice %175 {offsets = [0, 0], sizes = [2, 64], strides = [1, 1]} : vector<2x192xf32> to vector<2x64xf32>
    %177 = vector.extract_strided_slice %175 {offsets = [0, 64], sizes = [2, 64], strides = [1, 1]} : vector<2x192xf32> to vector<2x64xf32>
    %178 = vector.extract_strided_slice %175 {offsets = [0, 128], sizes = [2, 64], strides = [1, 1]} : vector<2x192xf32> to vector<2x64xf32>
    %179 = vector.extract_strided_slice %169 {offsets = [0, 192], sizes = [2, 64], strides = [1, 1]} : vector<2x256xf32> to vector<2x64xf32>
    %180 = math.tanh %179 : vector<2x64xf32>
    %181 = arith.mulf %177, %129 : vector<2x64xf32>
    %182 = arith.mulf %176, %180 : vector<2x64xf32>
    %183 = arith.addf %181, %182 : vector<2x64xf32>
    %184 = math.tanh %183 : vector<2x64xf32>
    %185 = arith.mulf %178, %184 : vector<2x64xf32>
    %c2 = arith.constant 2 : index
    %c0_64 = arith.constant 0 : index
    %c0_65 = arith.constant 0 : index
    %186 = vector.load %arg17[%c2, %c0_64, %c0_65] : memref<8x2x64xf32, #tpu.memory_space<vmem>>, vector<1x2x64xf32>
    %187 = vector.shape_cast %186 : vector<1x2x64xf32> to vector<2x64xf32>
    %188 = vector.shape_cast %185 : vector<2x64xf32> to vector<1x2x64xf32>
    tpu.vector_store %arg17[%c2, %c0_64, %c0_65], %188 {strides = array<i32>} : memref<8x2x64xf32, #tpu.memory_space<vmem>>, vector<1x2x64xf32>,
    %c2_66 = arith.constant 2 : index
    %c0_67 = arith.constant 0 : index
    %c0_68 = arith.constant 0 : index
    %189 = vector.load %arg16[%c2_66, %c0_67, %c0_68] : memref<8x2x16xf32, #tpu.memory_space<vmem>>, vector<1x2x16xf32>
    %190 = vector.shape_cast %189 : vector<1x2x16xf32> to vector<2x16xf32>
    %191 = vector.shape_cast %159 : vector<2x16xf32> to vector<1x2x16xf32>
    tpu.vector_store %arg16[%c2_66, %c0_67, %c0_68], %191 {strides = array<i32>} : memref<8x2x16xf32, #tpu.memory_space<vmem>>, vector<1x2x16xf32>,
    %cst_69 = arith.constant dense<0.000000e+00> : vector<2x288xf32>
    %192 = tpu.matmul %185, %28, %cst_69 {dimension_numbers = #tpu.dot_dimension_numbers<[1], [0], [0], [1], [0, 0, 1, 1], [], []>} : vector<2x64xf32>, vector<64x288xf32>, vector<2x288xf32> -> vector<2x288xf32>
    %193 = vector.extract_strided_slice %192 {offsets = [0, 256], sizes = [2, 32], strides = [1, 1]} : vector<2x288xf32> to vector<2x32xf32>
    %194 = vector.broadcast %27 : vector<1x32xf32> to vector<2x32xf32>
    %195 = arith.addf %193, %194 : vector<2x32xf32>
    %196 = vector.shape_cast %195 : vector<2x32xf32> to vector<2x1x32xf32>
    %197 = vector.broadcast %196 : vector<2x1x32xf32> to vector<2x16x32xf32>
    %198 = arith.addf %17, %197 : vector<2x16x32xf32>
    %cst_70 = arith.constant 0.000000e+00 : f32
    %199 = vector.broadcast %cst_70 : f32 to vector<2x16x32xf32>
    %200 = arith.maximumf %198, %199 : vector<2x16x32xf32>
    %201 = vector.shape_cast %26 : vector<1x32xf32> to vector<1x1x32xf32>
    %202 = vector.broadcast %201 : vector<1x1x32xf32> to vector<2x16x32xf32>
    %203 = arith.mulf %200, %202 : vector<2x16x32xf32>
    %cst_71 = arith.constant dense<0.000000e+00> : vector<2x16xf32>
    %204 = vector.multi_reduction <add>, %203, %cst_71 [2] : vector<2x16x32xf32> to vector<2x16xf32>
    %cst_72 = arith.constant dense<0xFF800000> : vector<2xf32>
    %205 = vector.multi_reduction <maximumf>, %204, %cst_72 [1] : vector<2x16xf32> to vector<2xf32>
    %206 = vector.shape_cast %205 : vector<2xf32> to vector<2x1xf32>
    %207 = vector.broadcast %206 : vector<2x1xf32> to vector<2x16xf32>
    %208 = arith.subf %204, %207 : vector<2x16xf32>
    %209 = math.exp %208 : vector<2x16xf32>
    %cst_73 = arith.constant dense<0.000000e+00> : vector<2xf32>
    %210 = vector.multi_reduction <add>, %209, %cst_73 [1] : vector<2x16xf32> to vector<2xf32>
    %211 = vector.shape_cast %210 : vector<2xf32> to vector<2x1xf32>
    %212 = vector.broadcast %211 : vector<2x1xf32> to vector<2x16xf32>
    %213 = arith.divf %209, %212 : vector<2x16xf32>
    %214 = vector.shape_cast %213 : vector<2x16xf32> to vector<2x16x1xf32>
    %215 = vector.broadcast %214 : vector<2x16x1xf32> to vector<2x16x64xf32>
    %216 = arith.mulf %215, %0 : vector<2x16x64xf32>
    %cst_74 = arith.constant dense<0.000000e+00> : vector<2x64xf32>
    %217 = vector.multi_reduction <add>, %216, %cst_74 [1] : vector<2x16x64xf32> to vector<2x64xf32>
    %218 = vector.extract_strided_slice %192 {offsets = [0, 0], sizes = [2, 256], strides = [1, 1]} : vector<2x288xf32> to vector<2x256xf32>
    %cst_75 = arith.constant dense<0.000000e+00> : vector<2x256xf32>
    %219 = tpu.matmul %217, %29, %cst_75 {dimension_numbers = #tpu.dot_dimension_numbers<[1], [0], [0], [1], [0, 0, 1, 1], [], []>} : vector<2x64xf32>, vector<64x256xf32>, vector<2x256xf32> -> vector<2x256xf32>
    %220 = arith.addf %218, %219 : vector<2x256xf32>
    %221 = vector.extract_strided_slice %25 {offsets = [3, 0, 0], sizes = [1, 2, 256], strides = [1, 1, 1]} : vector<8x2x256xf32> to vector<1x2x256xf32>
    %222 = vector.shape_cast %221 : vector<1x2x256xf32> to vector<2x256xf32>
    %223 = arith.addf %220, %222 : vector<2x256xf32>
    %224 = vector.extract_strided_slice %223 {offsets = [0, 0], sizes = [2, 192], strides = [1, 1]} : vector<2x256xf32> to vector<2x192xf32>
    %225 = arith.negf %224 : vector<2x192xf32>
    %226 = math.exp %225 : vector<2x192xf32>
    %cst_76 = arith.constant 1.000000e+00 : f32
    %227 = vector.broadcast %cst_76 : f32 to vector<2x192xf32>
    %228 = arith.addf %227, %226 : vector<2x192xf32>
    %229 = arith.divf %227, %228 : vector<2x192xf32>
    %230 = vector.extract_strided_slice %229 {offsets = [0, 0], sizes = [2, 64], strides = [1, 1]} : vector<2x192xf32> to vector<2x64xf32>
    %231 = vector.extract_strided_slice %229 {offsets = [0, 64], sizes = [2, 64], strides = [1, 1]} : vector<2x192xf32> to vector<2x64xf32>
    %232 = vector.extract_strided_slice %229 {offsets = [0, 128], sizes = [2, 64], strides = [1, 1]} : vector<2x192xf32> to vector<2x64xf32>
    %233 = vector.extract_strided_slice %223 {offsets = [0, 192], sizes = [2, 64], strides = [1, 1]} : vector<2x256xf32> to vector<2x64xf32>
    %234 = math.tanh %233 : vector<2x64xf32>
    %235 = arith.mulf %231, %183 : vector<2x64xf32>
    %236 = arith.mulf %230, %234 : vector<2x64xf32>
    %237 = arith.addf %235, %236 : vector<2x64xf32>
    %238 = math.tanh %237 : vector<2x64xf32>
    %239 = arith.mulf %232, %238 : vector<2x64xf32>
    %c3 = arith.constant 3 : index
    %c0_77 = arith.constant 0 : index
    %c0_78 = arith.constant 0 : index
    %240 = vector.load %arg17[%c3, %c0_77, %c0_78] : memref<8x2x64xf32, #tpu.memory_space<vmem>>, vector<1x2x64xf32>
    %241 = vector.shape_cast %240 : vector<1x2x64xf32> to vector<2x64xf32>
    %242 = vector.shape_cast %239 : vector<2x64xf32> to vector<1x2x64xf32>
    tpu.vector_store %arg17[%c3, %c0_77, %c0_78], %242 {strides = array<i32>} : memref<8x2x64xf32, #tpu.memory_space<vmem>>, vector<1x2x64xf32>,
    %c3_79 = arith.constant 3 : index
    %c0_80 = arith.constant 0 : index
    %c0_81 = arith.constant 0 : index
    %243 = vector.load %arg16[%c3_79, %c0_80, %c0_81] : memref<8x2x16xf32, #tpu.memory_space<vmem>>, vector<1x2x16xf32>
    %244 = vector.shape_cast %243 : vector<1x2x16xf32> to vector<2x16xf32>
    %245 = vector.shape_cast %213 : vector<2x16xf32> to vector<1x2x16xf32>
    tpu.vector_store %arg16[%c3_79, %c0_80, %c0_81], %245 {strides = array<i32>} : memref<8x2x16xf32, #tpu.memory_space<vmem>>, vector<1x2x16xf32>,
    %cst_82 = arith.constant dense<0.000000e+00> : vector<2x288xf32>
    %246 = tpu.matmul %239, %28, %cst_82 {dimension_numbers = #tpu.dot_dimension_numbers<[1], [0], [0], [1], [0, 0, 1, 1], [], []>} : vector<2x64xf32>, vector<64x288xf32>, vector<2x288xf32> -> vector<2x288xf32>
    %247 = vector.extract_strided_slice %246 {offsets = [0, 256], sizes = [2, 32], strides = [1, 1]} : vector<2x288xf32> to vector<2x32xf32>
    %248 = vector.broadcast %27 : vector<1x32xf32> to vector<2x32xf32>
    %249 = arith.addf %247, %248 : vector<2x32xf32>
    %250 = vector.shape_cast %249 : vector<2x32xf32> to vector<2x1x32xf32>
    %251 = vector.broadcast %250 : vector<2x1x32xf32> to vector<2x16x32xf32>
    %252 = arith.addf %17, %251 : vector<2x16x32xf32>
    %cst_83 = arith.constant 0.000000e+00 : f32
    %253 = vector.broadcast %cst_83 : f32 to vector<2x16x32xf32>
    %254 = arith.maximumf %252, %253 : vector<2x16x32xf32>
    %255 = vector.shape_cast %26 : vector<1x32xf32> to vector<1x1x32xf32>
    %256 = vector.broadcast %255 : vector<1x1x32xf32> to vector<2x16x32xf32>
    %257 = arith.mulf %254, %256 : vector<2x16x32xf32>
    %cst_84 = arith.constant dense<0.000000e+00> : vector<2x16xf32>
    %258 = vector.multi_reduction <add>, %257, %cst_84 [2] : vector<2x16x32xf32> to vector<2x16xf32>
    %cst_85 = arith.constant dense<0xFF800000> : vector<2xf32>
    %259 = vector.multi_reduction <maximumf>, %258, %cst_85 [1] : vector<2x16xf32> to vector<2xf32>
    %260 = vector.shape_cast %259 : vector<2xf32> to vector<2x1xf32>
    %261 = vector.broadcast %260 : vector<2x1xf32> to vector<2x16xf32>
    %262 = arith.subf %258, %261 : vector<2x16xf32>
    %263 = math.exp %262 : vector<2x16xf32>
    %cst_86 = arith.constant dense<0.000000e+00> : vector<2xf32>
    %264 = vector.multi_reduction <add>, %263, %cst_86 [1] : vector<2x16xf32> to vector<2xf32>
    %265 = vector.shape_cast %264 : vector<2xf32> to vector<2x1xf32>
    %266 = vector.broadcast %265 : vector<2x1xf32> to vector<2x16xf32>
    %267 = arith.divf %263, %266 : vector<2x16xf32>
    %268 = vector.shape_cast %267 : vector<2x16xf32> to vector<2x16x1xf32>
    %269 = vector.broadcast %268 : vector<2x16x1xf32> to vector<2x16x64xf32>
    %270 = arith.mulf %269, %0 : vector<2x16x64xf32>
    %cst_87 = arith.constant dense<0.000000e+00> : vector<2x64xf32>
    %271 = vector.multi_reduction <add>, %270, %cst_87 [1] : vector<2x16x64xf32> to vector<2x64xf32>
    %272 = vector.extract_strided_slice %246 {offsets = [0, 0], sizes = [2, 256], strides = [1, 1]} : vector<2x288xf32> to vector<2x256xf32>
    %cst_88 = arith.constant dense<0.000000e+00> : vector<2x256xf32>
    %273 = tpu.matmul %271, %29, %cst_88 {dimension_numbers = #tpu.dot_dimension_numbers<[1], [0], [0], [1], [0, 0, 1, 1], [], []>} : vector<2x64xf32>, vector<64x256xf32>, vector<2x256xf32> -> vector<2x256xf32>
    %274 = arith.addf %272, %273 : vector<2x256xf32>
    %275 = vector.extract_strided_slice %25 {offsets = [4, 0, 0], sizes = [1, 2, 256], strides = [1, 1, 1]} : vector<8x2x256xf32> to vector<1x2x256xf32>
    %276 = vector.shape_cast %275 : vector<1x2x256xf32> to vector<2x256xf32>
    %277 = arith.addf %274, %276 : vector<2x256xf32>
    %278 = vector.extract_strided_slice %277 {offsets = [0, 0], sizes = [2, 192], strides = [1, 1]} : vector<2x256xf32> to vector<2x192xf32>
    %279 = arith.negf %278 : vector<2x192xf32>
    %280 = math.exp %279 : vector<2x192xf32>
    %cst_89 = arith.constant 1.000000e+00 : f32
    %281 = vector.broadcast %cst_89 : f32 to vector<2x192xf32>
    %282 = arith.addf %281, %280 : vector<2x192xf32>
    %283 = arith.divf %281, %282 : vector<2x192xf32>
    %284 = vector.extract_strided_slice %283 {offsets = [0, 0], sizes = [2, 64], strides = [1, 1]} : vector<2x192xf32> to vector<2x64xf32>
    %285 = vector.extract_strided_slice %283 {offsets = [0, 64], sizes = [2, 64], strides = [1, 1]} : vector<2x192xf32> to vector<2x64xf32>
    %286 = vector.extract_strided_slice %283 {offsets = [0, 128], sizes = [2, 64], strides = [1, 1]} : vector<2x192xf32> to vector<2x64xf32>
    %287 = vector.extract_strided_slice %277 {offsets = [0, 192], sizes = [2, 64], strides = [1, 1]} : vector<2x256xf32> to vector<2x64xf32>
    %288 = math.tanh %287 : vector<2x64xf32>
    %289 = arith.mulf %285, %237 : vector<2x64xf32>
    %290 = arith.mulf %284, %288 : vector<2x64xf32>
    %291 = arith.addf %289, %290 : vector<2x64xf32>
    %292 = math.tanh %291 : vector<2x64xf32>
    %293 = arith.mulf %286, %292 : vector<2x64xf32>
    %c4 = arith.constant 4 : index
    %c0_90 = arith.constant 0 : index
    %c0_91 = arith.constant 0 : index
    %294 = vector.load %arg17[%c4, %c0_90, %c0_91] : memref<8x2x64xf32, #tpu.memory_space<vmem>>, vector<1x2x64xf32>
    %295 = vector.shape_cast %294 : vector<1x2x64xf32> to vector<2x64xf32>
    %296 = vector.shape_cast %293 : vector<2x64xf32> to vector<1x2x64xf32>
    tpu.vector_store %arg17[%c4, %c0_90, %c0_91], %296 {strides = array<i32>} : memref<8x2x64xf32, #tpu.memory_space<vmem>>, vector<1x2x64xf32>,
    %c4_92 = arith.constant 4 : index
    %c0_93 = arith.constant 0 : index
    %c0_94 = arith.constant 0 : index
    %297 = vector.load %arg16[%c4_92, %c0_93, %c0_94] : memref<8x2x16xf32, #tpu.memory_space<vmem>>, vector<1x2x16xf32>
    %298 = vector.shape_cast %297 : vector<1x2x16xf32> to vector<2x16xf32>
    %299 = vector.shape_cast %267 : vector<2x16xf32> to vector<1x2x16xf32>
    tpu.vector_store %arg16[%c4_92, %c0_93, %c0_94], %299 {strides = array<i32>} : memref<8x2x16xf32, #tpu.memory_space<vmem>>, vector<1x2x16xf32>,
    %cst_95 = arith.constant dense<0.000000e+00> : vector<2x288xf32>
    %300 = tpu.matmul %293, %28, %cst_95 {dimension_numbers = #tpu.dot_dimension_numbers<[1], [0], [0], [1], [0, 0, 1, 1], [], []>} : vector<2x64xf32>, vector<64x288xf32>, vector<2x288xf32> -> vector<2x288xf32>
    %301 = vector.extract_strided_slice %300 {offsets = [0, 256], sizes = [2, 32], strides = [1, 1]} : vector<2x288xf32> to vector<2x32xf32>
    %302 = vector.broadcast %27 : vector<1x32xf32> to vector<2x32xf32>
    %303 = arith.addf %301, %302 : vector<2x32xf32>
    %304 = vector.shape_cast %303 : vector<2x32xf32> to vector<2x1x32xf32>
    %305 = vector.broadcast %304 : vector<2x1x32xf32> to vector<2x16x32xf32>
    %306 = arith.addf %17, %305 : vector<2x16x32xf32>
    %cst_96 = arith.constant 0.000000e+00 : f32
    %307 = vector.broadcast %cst_96 : f32 to vector<2x16x32xf32>
    %308 = arith.maximumf %306, %307 : vector<2x16x32xf32>
    %309 = vector.shape_cast %26 : vector<1x32xf32> to vector<1x1x32xf32>
    %310 = vector.broadcast %309 : vector<1x1x32xf32> to vector<2x16x32xf32>
    %311 = arith.mulf %308, %310 : vector<2x16x32xf32>
    %cst_97 = arith.constant dense<0.000000e+00> : vector<2x16xf32>
    %312 = vector.multi_reduction <add>, %311, %cst_97 [2] : vector<2x16x32xf32> to vector<2x16xf32>
    %cst_98 = arith.constant dense<0xFF800000> : vector<2xf32>
    %313 = vector.multi_reduction <maximumf>, %312, %cst_98 [1] : vector<2x16xf32> to vector<2xf32>
    %314 = vector.shape_cast %313 : vector<2xf32> to vector<2x1xf32>
    %315 = vector.broadcast %314 : vector<2x1xf32> to vector<2x16xf32>
    %316 = arith.subf %312, %315 : vector<2x16xf32>
    %317 = math.exp %316 : vector<2x16xf32>
    %cst_99 = arith.constant dense<0.000000e+00> : vector<2xf32>
    %318 = vector.multi_reduction <add>, %317, %cst_99 [1] : vector<2x16xf32> to vector<2xf32>
    %319 = vector.shape_cast %318 : vector<2xf32> to vector<2x1xf32>
    %320 = vector.broadcast %319 : vector<2x1xf32> to vector<2x16xf32>
    %321 = arith.divf %317, %320 : vector<2x16xf32>
    %322 = vector.shape_cast %321 : vector<2x16xf32> to vector<2x16x1xf32>
    %323 = vector.broadcast %322 : vector<2x16x1xf32> to vector<2x16x64xf32>
    %324 = arith.mulf %323, %0 : vector<2x16x64xf32>
    %cst_100 = arith.constant dense<0.000000e+00> : vector<2x64xf32>
    %325 = vector.multi_reduction <add>, %324, %cst_100 [1] : vector<2x16x64xf32> to vector<2x64xf32>
    %326 = vector.extract_strided_slice %300 {offsets = [0, 0], sizes = [2, 256], strides = [1, 1]} : vector<2x288xf32> to vector<2x256xf32>
    %cst_101 = arith.constant dense<0.000000e+00> : vector<2x256xf32>
    %327 = tpu.matmul %325, %29, %cst_101 {dimension_numbers = #tpu.dot_dimension_numbers<[1], [0], [0], [1], [0, 0, 1, 1], [], []>} : vector<2x64xf32>, vector<64x256xf32>, vector<2x256xf32> -> vector<2x256xf32>
    %328 = arith.addf %326, %327 : vector<2x256xf32>
    %329 = vector.extract_strided_slice %25 {offsets = [5, 0, 0], sizes = [1, 2, 256], strides = [1, 1, 1]} : vector<8x2x256xf32> to vector<1x2x256xf32>
    %330 = vector.shape_cast %329 : vector<1x2x256xf32> to vector<2x256xf32>
    %331 = arith.addf %328, %330 : vector<2x256xf32>
    %332 = vector.extract_strided_slice %331 {offsets = [0, 0], sizes = [2, 192], strides = [1, 1]} : vector<2x256xf32> to vector<2x192xf32>
    %333 = arith.negf %332 : vector<2x192xf32>
    %334 = math.exp %333 : vector<2x192xf32>
    %cst_102 = arith.constant 1.000000e+00 : f32
    %335 = vector.broadcast %cst_102 : f32 to vector<2x192xf32>
    %336 = arith.addf %335, %334 : vector<2x192xf32>
    %337 = arith.divf %335, %336 : vector<2x192xf32>
    %338 = vector.extract_strided_slice %337 {offsets = [0, 0], sizes = [2, 64], strides = [1, 1]} : vector<2x192xf32> to vector<2x64xf32>
    %339 = vector.extract_strided_slice %337 {offsets = [0, 64], sizes = [2, 64], strides = [1, 1]} : vector<2x192xf32> to vector<2x64xf32>
    %340 = vector.extract_strided_slice %337 {offsets = [0, 128], sizes = [2, 64], strides = [1, 1]} : vector<2x192xf32> to vector<2x64xf32>
    %341 = vector.extract_strided_slice %331 {offsets = [0, 192], sizes = [2, 64], strides = [1, 1]} : vector<2x256xf32> to vector<2x64xf32>
    %342 = math.tanh %341 : vector<2x64xf32>
    %343 = arith.mulf %339, %291 : vector<2x64xf32>
    %344 = arith.mulf %338, %342 : vector<2x64xf32>
    %345 = arith.addf %343, %344 : vector<2x64xf32>
    %346 = math.tanh %345 : vector<2x64xf32>
    %347 = arith.mulf %340, %346 : vector<2x64xf32>
    %c5 = arith.constant 5 : index
    %c0_103 = arith.constant 0 : index
    %c0_104 = arith.constant 0 : index
    %348 = vector.load %arg17[%c5, %c0_103, %c0_104] : memref<8x2x64xf32, #tpu.memory_space<vmem>>, vector<1x2x64xf32>
    %349 = vector.shape_cast %348 : vector<1x2x64xf32> to vector<2x64xf32>
    %350 = vector.shape_cast %347 : vector<2x64xf32> to vector<1x2x64xf32>
    tpu.vector_store %arg17[%c5, %c0_103, %c0_104], %350 {strides = array<i32>} : memref<8x2x64xf32, #tpu.memory_space<vmem>>, vector<1x2x64xf32>,
    %c5_105 = arith.constant 5 : index
    %c0_106 = arith.constant 0 : index
    %c0_107 = arith.constant 0 : index
    %351 = vector.load %arg16[%c5_105, %c0_106, %c0_107] : memref<8x2x16xf32, #tpu.memory_space<vmem>>, vector<1x2x16xf32>
    %352 = vector.shape_cast %351 : vector<1x2x16xf32> to vector<2x16xf32>
    %353 = vector.shape_cast %321 : vector<2x16xf32> to vector<1x2x16xf32>
    tpu.vector_store %arg16[%c5_105, %c0_106, %c0_107], %353 {strides = array<i32>} : memref<8x2x16xf32, #tpu.memory_space<vmem>>, vector<1x2x16xf32>,
    %cst_108 = arith.constant dense<0.000000e+00> : vector<2x288xf32>
    %354 = tpu.matmul %347, %28, %cst_108 {dimension_numbers = #tpu.dot_dimension_numbers<[1], [0], [0], [1], [0, 0, 1, 1], [], []>} : vector<2x64xf32>, vector<64x288xf32>, vector<2x288xf32> -> vector<2x288xf32>
    %355 = vector.extract_strided_slice %354 {offsets = [0, 256], sizes = [2, 32], strides = [1, 1]} : vector<2x288xf32> to vector<2x32xf32>
    %356 = vector.broadcast %27 : vector<1x32xf32> to vector<2x32xf32>
    %357 = arith.addf %355, %356 : vector<2x32xf32>
    %358 = vector.shape_cast %357 : vector<2x32xf32> to vector<2x1x32xf32>
    %359 = vector.broadcast %358 : vector<2x1x32xf32> to vector<2x16x32xf32>
    %360 = arith.addf %17, %359 : vector<2x16x32xf32>
    %cst_109 = arith.constant 0.000000e+00 : f32
    %361 = vector.broadcast %cst_109 : f32 to vector<2x16x32xf32>
    %362 = arith.maximumf %360, %361 : vector<2x16x32xf32>
    %363 = vector.shape_cast %26 : vector<1x32xf32> to vector<1x1x32xf32>
    %364 = vector.broadcast %363 : vector<1x1x32xf32> to vector<2x16x32xf32>
    %365 = arith.mulf %362, %364 : vector<2x16x32xf32>
    %cst_110 = arith.constant dense<0.000000e+00> : vector<2x16xf32>
    %366 = vector.multi_reduction <add>, %365, %cst_110 [2] : vector<2x16x32xf32> to vector<2x16xf32>
    %cst_111 = arith.constant dense<0xFF800000> : vector<2xf32>
    %367 = vector.multi_reduction <maximumf>, %366, %cst_111 [1] : vector<2x16xf32> to vector<2xf32>
    %368 = vector.shape_cast %367 : vector<2xf32> to vector<2x1xf32>
    %369 = vector.broadcast %368 : vector<2x1xf32> to vector<2x16xf32>
    %370 = arith.subf %366, %369 : vector<2x16xf32>
    %371 = math.exp %370 : vector<2x16xf32>
    %cst_112 = arith.constant dense<0.000000e+00> : vector<2xf32>
    %372 = vector.multi_reduction <add>, %371, %cst_112 [1] : vector<2x16xf32> to vector<2xf32>
    %373 = vector.shape_cast %372 : vector<2xf32> to vector<2x1xf32>
    %374 = vector.broadcast %373 : vector<2x1xf32> to vector<2x16xf32>
    %375 = arith.divf %371, %374 : vector<2x16xf32>
    %376 = vector.shape_cast %375 : vector<2x16xf32> to vector<2x16x1xf32>
    %377 = vector.broadcast %376 : vector<2x16x1xf32> to vector<2x16x64xf32>
    %378 = arith.mulf %377, %0 : vector<2x16x64xf32>
    %cst_113 = arith.constant dense<0.000000e+00> : vector<2x64xf32>
    %379 = vector.multi_reduction <add>, %378, %cst_113 [1] : vector<2x16x64xf32> to vector<2x64xf32>
    %380 = vector.extract_strided_slice %354 {offsets = [0, 0], sizes = [2, 256], strides = [1, 1]} : vector<2x288xf32> to vector<2x256xf32>
    %cst_114 = arith.constant dense<0.000000e+00> : vector<2x256xf32>
    %381 = tpu.matmul %379, %29, %cst_114 {dimension_numbers = #tpu.dot_dimension_numbers<[1], [0], [0], [1], [0, 0, 1, 1], [], []>} : vector<2x64xf32>, vector<64x256xf32>, vector<2x256xf32> -> vector<2x256xf32>
    %382 = arith.addf %380, %381 : vector<2x256xf32>
    %383 = vector.extract_strided_slice %25 {offsets = [6, 0, 0], sizes = [1, 2, 256], strides = [1, 1, 1]} : vector<8x2x256xf32> to vector<1x2x256xf32>
    %384 = vector.shape_cast %383 : vector<1x2x256xf32> to vector<2x256xf32>
    %385 = arith.addf %382, %384 : vector<2x256xf32>
    %386 = vector.extract_strided_slice %385 {offsets = [0, 0], sizes = [2, 192], strides = [1, 1]} : vector<2x256xf32> to vector<2x192xf32>
    %387 = arith.negf %386 : vector<2x192xf32>
    %388 = math.exp %387 : vector<2x192xf32>
    %cst_115 = arith.constant 1.000000e+00 : f32
    %389 = vector.broadcast %cst_115 : f32 to vector<2x192xf32>
    %390 = arith.addf %389, %388 : vector<2x192xf32>
    %391 = arith.divf %389, %390 : vector<2x192xf32>
    %392 = vector.extract_strided_slice %391 {offsets = [0, 0], sizes = [2, 64], strides = [1, 1]} : vector<2x192xf32> to vector<2x64xf32>
    %393 = vector.extract_strided_slice %391 {offsets = [0, 64], sizes = [2, 64], strides = [1, 1]} : vector<2x192xf32> to vector<2x64xf32>
    %394 = vector.extract_strided_slice %391 {offsets = [0, 128], sizes = [2, 64], strides = [1, 1]} : vector<2x192xf32> to vector<2x64xf32>
    %395 = vector.extract_strided_slice %385 {offsets = [0, 192], sizes = [2, 64], strides = [1, 1]} : vector<2x256xf32> to vector<2x64xf32>
    %396 = math.tanh %395 : vector<2x64xf32>
    %397 = arith.mulf %393, %345 : vector<2x64xf32>
    %398 = arith.mulf %392, %396 : vector<2x64xf32>
    %399 = arith.addf %397, %398 : vector<2x64xf32>
    %400 = math.tanh %399 : vector<2x64xf32>
    %401 = arith.mulf %394, %400 : vector<2x64xf32>
    %c6 = arith.constant 6 : index
    %c0_116 = arith.constant 0 : index
    %c0_117 = arith.constant 0 : index
    %402 = vector.load %arg17[%c6, %c0_116, %c0_117] : memref<8x2x64xf32, #tpu.memory_space<vmem>>, vector<1x2x64xf32>
    %403 = vector.shape_cast %402 : vector<1x2x64xf32> to vector<2x64xf32>
    %404 = vector.shape_cast %401 : vector<2x64xf32> to vector<1x2x64xf32>
    tpu.vector_store %arg17[%c6, %c0_116, %c0_117], %404 {strides = array<i32>} : memref<8x2x64xf32, #tpu.memory_space<vmem>>, vector<1x2x64xf32>,
    %c6_118 = arith.constant 6 : index
    %c0_119 = arith.constant 0 : index
    %c0_120 = arith.constant 0 : index
    %405 = vector.load %arg16[%c6_118, %c0_119, %c0_120] : memref<8x2x16xf32, #tpu.memory_space<vmem>>, vector<1x2x16xf32>
    %406 = vector.shape_cast %405 : vector<1x2x16xf32> to vector<2x16xf32>
    %407 = vector.shape_cast %375 : vector<2x16xf32> to vector<1x2x16xf32>
    tpu.vector_store %arg16[%c6_118, %c0_119, %c0_120], %407 {strides = array<i32>} : memref<8x2x16xf32, #tpu.memory_space<vmem>>, vector<1x2x16xf32>,
    %cst_121 = arith.constant dense<0.000000e+00> : vector<2x288xf32>
    %408 = tpu.matmul %401, %28, %cst_121 {dimension_numbers = #tpu.dot_dimension_numbers<[1], [0], [0], [1], [0, 0, 1, 1], [], []>} : vector<2x64xf32>, vector<64x288xf32>, vector<2x288xf32> -> vector<2x288xf32>
    %409 = vector.extract_strided_slice %408 {offsets = [0, 256], sizes = [2, 32], strides = [1, 1]} : vector<2x288xf32> to vector<2x32xf32>
    %410 = vector.broadcast %27 : vector<1x32xf32> to vector<2x32xf32>
    %411 = arith.addf %409, %410 : vector<2x32xf32>
    %412 = vector.shape_cast %411 : vector<2x32xf32> to vector<2x1x32xf32>
    %413 = vector.broadcast %412 : vector<2x1x32xf32> to vector<2x16x32xf32>
    %414 = arith.addf %17, %413 : vector<2x16x32xf32>
    %cst_122 = arith.constant 0.000000e+00 : f32
    %415 = vector.broadcast %cst_122 : f32 to vector<2x16x32xf32>
    %416 = arith.maximumf %414, %415 : vector<2x16x32xf32>
    %417 = vector.shape_cast %26 : vector<1x32xf32> to vector<1x1x32xf32>
    %418 = vector.broadcast %417 : vector<1x1x32xf32> to vector<2x16x32xf32>
    %419 = arith.mulf %416, %418 : vector<2x16x32xf32>
    %cst_123 = arith.constant dense<0.000000e+00> : vector<2x16xf32>
    %420 = vector.multi_reduction <add>, %419, %cst_123 [2] : vector<2x16x32xf32> to vector<2x16xf32>
    %cst_124 = arith.constant dense<0xFF800000> : vector<2xf32>
    %421 = vector.multi_reduction <maximumf>, %420, %cst_124 [1] : vector<2x16xf32> to vector<2xf32>
    %422 = vector.shape_cast %421 : vector<2xf32> to vector<2x1xf32>
    %423 = vector.broadcast %422 : vector<2x1xf32> to vector<2x16xf32>
    %424 = arith.subf %420, %423 : vector<2x16xf32>
    %425 = math.exp %424 : vector<2x16xf32>
    %cst_125 = arith.constant dense<0.000000e+00> : vector<2xf32>
    %426 = vector.multi_reduction <add>, %425, %cst_125 [1] : vector<2x16xf32> to vector<2xf32>
    %427 = vector.shape_cast %426 : vector<2xf32> to vector<2x1xf32>
    %428 = vector.broadcast %427 : vector<2x1xf32> to vector<2x16xf32>
    %429 = arith.divf %425, %428 : vector<2x16xf32>
    %430 = vector.shape_cast %429 : vector<2x16xf32> to vector<2x16x1xf32>
    %431 = vector.broadcast %430 : vector<2x16x1xf32> to vector<2x16x64xf32>
    %432 = arith.mulf %431, %0 : vector<2x16x64xf32>
    %cst_126 = arith.constant dense<0.000000e+00> : vector<2x64xf32>
    %433 = vector.multi_reduction <add>, %432, %cst_126 [1] : vector<2x16x64xf32> to vector<2x64xf32>
    %434 = vector.extract_strided_slice %408 {offsets = [0, 0], sizes = [2, 256], strides = [1, 1]} : vector<2x288xf32> to vector<2x256xf32>
    %cst_127 = arith.constant dense<0.000000e+00> : vector<2x256xf32>
    %435 = tpu.matmul %433, %29, %cst_127 {dimension_numbers = #tpu.dot_dimension_numbers<[1], [0], [0], [1], [0, 0, 1, 1], [], []>} : vector<2x64xf32>, vector<64x256xf32>, vector<2x256xf32> -> vector<2x256xf32>
    %436 = arith.addf %434, %435 : vector<2x256xf32>
    %437 = vector.extract_strided_slice %25 {offsets = [7, 0, 0], sizes = [1, 2, 256], strides = [1, 1, 1]} : vector<8x2x256xf32> to vector<1x2x256xf32>
    %438 = vector.shape_cast %437 : vector<1x2x256xf32> to vector<2x256xf32>
    %439 = arith.addf %436, %438 : vector<2x256xf32>
    %440 = vector.extract_strided_slice %439 {offsets = [0, 0], sizes = [2, 192], strides = [1, 1]} : vector<2x256xf32> to vector<2x192xf32>
    %441 = arith.negf %440 : vector<2x192xf32>
    %442 = math.exp %441 : vector<2x192xf32>
    %cst_128 = arith.constant 1.000000e+00 : f32
    %443 = vector.broadcast %cst_128 : f32 to vector<2x192xf32>
    %444 = arith.addf %443, %442 : vector<2x192xf32>
    %445 = arith.divf %443, %444 : vector<2x192xf32>
    %446 = vector.extract_strided_slice %445 {offsets = [0, 0], sizes = [2, 64], strides = [1, 1]} : vector<2x192xf32> to vector<2x64xf32>
    %447 = vector.extract_strided_slice %445 {offsets = [0, 64], sizes = [2, 64], strides = [1, 1]} : vector<2x192xf32> to vector<2x64xf32>
    %448 = vector.extract_strided_slice %445 {offsets = [0, 128], sizes = [2, 64], strides = [1, 1]} : vector<2x192xf32> to vector<2x64xf32>
    %449 = vector.extract_strided_slice %439 {offsets = [0, 192], sizes = [2, 64], strides = [1, 1]} : vector<2x256xf32> to vector<2x64xf32>
    %450 = math.tanh %449 : vector<2x64xf32>
    %451 = arith.mulf %447, %399 : vector<2x64xf32>
    %452 = arith.mulf %446, %450 : vector<2x64xf32>
    %453 = arith.addf %451, %452 : vector<2x64xf32>
    %454 = math.tanh %453 : vector<2x64xf32>
    %455 = arith.mulf %448, %454 : vector<2x64xf32>
    %c7 = arith.constant 7 : index
    %c0_129 = arith.constant 0 : index
    %c0_130 = arith.constant 0 : index
    %456 = vector.load %arg17[%c7, %c0_129, %c0_130] : memref<8x2x64xf32, #tpu.memory_space<vmem>>, vector<1x2x64xf32>
    %457 = vector.shape_cast %456 : vector<1x2x64xf32> to vector<2x64xf32>
    %458 = vector.shape_cast %455 : vector<2x64xf32> to vector<1x2x64xf32>
    tpu.vector_store %arg17[%c7, %c0_129, %c0_130], %458 {strides = array<i32>} : memref<8x2x64xf32, #tpu.memory_space<vmem>>, vector<1x2x64xf32>,
    %c7_131 = arith.constant 7 : index
    %c0_132 = arith.constant 0 : index
    %c0_133 = arith.constant 0 : index
    %459 = vector.load %arg16[%c7_131, %c0_132, %c0_133] : memref<8x2x16xf32, #tpu.memory_space<vmem>>, vector<1x2x16xf32>
    %460 = vector.shape_cast %459 : vector<1x2x16xf32> to vector<2x16xf32>
    %461 = vector.shape_cast %429 : vector<2x16xf32> to vector<1x2x16xf32>
    tpu.vector_store %arg16[%c7_131, %c0_132, %c0_133], %461 {strides = array<i32>} : memref<8x2x16xf32, #tpu.memory_space<vmem>>, vector<1x2x16xf32>,
    %c0_134 = arith.constant 0 : index
    %c0_135 = arith.constant 0 : index
    %c0_136 = arith.constant 0 : index
    %462 = vector.load %arg17[%c0_134, %c0_135, %c0_136] : memref<8x2x64xf32, #tpu.memory_space<vmem>>, vector<8x2x64xf32>
    %463 = vector.shape_cast %462 : vector<8x2x64xf32> to vector<16x64xf32>
    %c0_137 = arith.constant 0 : index
    %c0_138 = arith.constant 0 : index
    %464 = vector.load %arg13[%c0_137, %c0_138] : memref<64x128xf32, #tpu.memory_space<vmem>>, vector<64x128xf32>
    %cst_139 = arith.constant dense<0.000000e+00> : vector<16x128xf32>
    %465 = tpu.matmul %463, %464, %cst_139 {dimension_numbers = #tpu.dot_dimension_numbers<[1], [0], [0], [1], [0, 0, 1, 1], [], []>} : vector<16x64xf32>, vector<64x128xf32>, vector<16x128xf32> -> vector<16x128xf32>
    %c0_140 = arith.constant 0 : index
    %c0_141 = arith.constant 0 : index
    %466 = vector.load %arg14[%c0_140, %c0_141] : memref<1x128xf32, #tpu.memory_space<vmem>>, vector<1x128xf32>
    %467 = vector.broadcast %466 : vector<1x128xf32> to vector<16x128xf32>
    %468 = arith.addf %465, %467 : vector<16x128xf32>
    %c0_142 = arith.constant 0 : index
    %c0_143 = arith.constant 0 : index
    %469 = vector.load %arg15[%c0_142, %c0_143] : memref<16x128xf32, #tpu.memory_space<vmem>>, vector<16x128xf32>
    tpu.vector_store %arg15[%c0_142, %c0_143], %468 {strides = array<i32>} : memref<16x128xf32, #tpu.memory_space<vmem>>, vector<16x128xf32>,
    return
  }
  func.func @transform_0(%arg0: i32) -> (i32, i32, i32) {
    %c0_i32 = arith.constant 0 : i32
    %c0_i32_0 = arith.constant 0 : i32
    %c0_i32_1 = arith.constant 0 : i32
    %c0_i32_2 = arith.constant 0 : i32
    return %c0_i32, %c0_i32_0, %c0_i32_1 : i32, i32, i32
  }
  func.func @transform_1(%arg0: i32) -> (i32, i32, i32) {
    %c0_i32 = arith.constant 0 : i32
    %c0_i32_0 = arith.constant 0 : i32
    %c0_i32_1 = arith.constant 0 : i32
    %c0_i32_2 = arith.constant 0 : i32
    return %c0_i32, %c0_i32_0, %c0_i32_1 : i32, i32, i32
  }
  func.func @transform_2(%arg0: i32) -> (i32, i32) {
    %c0_i32 = arith.constant 0 : i32
    %c0_i32_0 = arith.constant 0 : i32
    %c0_i32_1 = arith.constant 0 : i32
    return %c0_i32, %c0_i32_0 : i32, i32
  }
  func.func @transform_3(%arg0: i32) -> (i32, i32) {
    %c0_i32 = arith.constant 0 : i32
    %c0_i32_0 = arith.constant 0 : i32
    %c0_i32_1 = arith.constant 0 : i32
    return %c0_i32, %c0_i32_0 : i32, i32
  }
  func.func @transform_4(%arg0: i32) -> (i32, i32) {
    %c0_i32 = arith.constant 0 : i32
    %c0_i32_0 = arith.constant 0 : i32
    %c0_i32_1 = arith.constant 0 : i32
    return %c0_i32, %c0_i32_0 : i32, i32
  }
  func.func @transform_5(%arg0: i32) -> (i32, i32) {
    %c0_i32 = arith.constant 0 : i32
    %c0_i32_0 = arith.constant 0 : i32
    %c0_i32_1 = arith.constant 0 : i32
    return %c0_i32, %c0_i32_0 : i32, i32
  }
  func.func @transform_6(%arg0: i32) -> (i32, i32) {
    %c0_i32 = arith.constant 0 : i32
    %c0_i32_0 = arith.constant 0 : i32
    %c0_i32_1 = arith.constant 0 : i32
    return %c0_i32, %c0_i32_0 : i32, i32
  }
  func.func @transform_7(%arg0: i32) -> (i32, i32) {
    %c0_i32 = arith.constant 0 : i32
    %c0_i32_0 = arith.constant 0 : i32
    %c0_i32_1 = arith.constant 0 : i32
    return %c0_i32, %c0_i32_0 : i32, i32
  }
  func.func @transform_8(%arg0: i32) -> (i32, i32) {
    %c0_i32 = arith.constant 0 : i32
    %c0_i32_0 = arith.constant 0 : i32
    %c0_i32_1 = arith.constant 0 : i32
    return %c0_i32, %c0_i32_0 : i32, i32
  }
  func.func @transform_9(%arg0: i32) -> (i32, i32) {
    %c0_i32 = arith.constant 0 : i32
    %c0_i32_0 = arith.constant 0 : i32
    %c0_i32_1 = arith.constant 0 : i32
    return %c0_i32, %c0_i32_0 : i32, i32
  }
  func.func @transform_10(%arg0: i32) -> (i32, i32) {
    %c0_i32 = arith.constant 0 : i32
    %c0_i32_0 = arith.constant 0 : i32
    %c0_i32_1 = arith.constant 0 : i32
    return %c0_i32, %c0_i32_0 : i32, i32
  }
  func.func @transform_11(%arg0: i32) -> (i32, i32) {
    %c0_i32 = arith.constant 0 : i32
    %c0_i32_0 = arith.constant 0 : i32
    %c0_i32_1 = arith.constant 0 : i32
    return %c0_i32, %c0_i32_0 : i32, i32
  }
  func.func @transform_12(%arg0: i32) -> (i32, i32) {
    %c0_i32 = arith.constant 0 : i32
    %c0_i32_0 = arith.constant 0 : i32
    %c0_i32_1 = arith.constant 0 : i32
    return %c0_i32, %c0_i32_0 : i32, i32
  }
  func.func @transform_13(%arg0: i32) -> (i32, i32) {
    %c0_i32 = arith.constant 0 : i32
    %c0_i32_0 = arith.constant 0 : i32
    %c0_i32_1 = arith.constant 0 : i32
    return %c0_i32, %c0_i32_0 : i32, i32
  }
  func.func @transform_14(%arg0: i32) -> (i32, i32) {
    %c0_i32 = arith.constant 0 : i32
    %c0_i32_0 = arith.constant 0 : i32
    %c0_i32_1 = arith.constant 0 : i32
    return %c0_i32, %c0_i32_0 : i32, i32
  }
  func.func @transform_15(%arg0: i32) -> (i32, i32, i32) {
    %c0_i32 = arith.constant 0 : i32
    %c0_i32_0 = arith.constant 0 : i32
    %c0_i32_1 = arith.constant 0 : i32
    %c0_i32_2 = arith.constant 0 : i32
    return %c0_i32, %c0_i32_0, %c0_i32_1 : i32, i32, i32
  }
}

</mosaic_0001>

<llo_original>
// kernel: encoder_decoder_forward.3
$region0: #{encoder_decoder_forward.3}
  #allocation0 [shape = 'u32[]', space=smem, size = 0x4, offset = 0x4, fixed_abs, tag = 'smem constant byte address 0x4 - core index']
  #allocation1 [shape = 'u32[144,128]{1,0:T(1,128)}', space=vmem, size = 0x12000, scoped, tag = 'internal scratch']
  %s0 = inlined_call_operand.vmem [shape: f32[128,27], index: 0, kind: input, shape index: {}]
  %s1 = inlined_call_operand.vmem [shape: f32[27,16], index: 1, kind: input, shape index: {}]
  %s2 = inlined_call_operand.vmem [shape: f32[1,16], index: 2, kind: input, shape index: {}]
  %s3 = inlined_call_operand.vmem [shape: f32[128,16], index: 3, kind: output, shape index: {}]
  %s4 = sld [smem:[#allocation0]]
  $region22: #{encoder_decoder_forward.3} parent=0
    _
  %s6 = ssub.s32 1, %s4
  %s7 = scalar_select 0, %s6, %s4
  // Predicated region
  $region2: #{encoder_decoder_forward.3} parent=0 // pred_check
    _
  $region3: #{encoder_decoder_forward.3} parent=0 // pred_check_branch
    %9 = sbr.rel (0) target = $region5
  $region4: #{encoder_decoder_forward.3} parent=0 // pred_region
    _
  $region5: #{encoder_decoder_forward.3} parent=0 // pred_fallthru
    _
  // Predicated region
  $region6: #{encoder_decoder_forward.3} parent=0 // pred_check
    _
  $region7: #{encoder_decoder_forward.3} parent=0 // pred_check_branch
    %11 = sbr.rel (0) target = $region9
  $region8: #{encoder_decoder_forward.3} parent=0 // pred_region
    _
  $region9: #{encoder_decoder_forward.3} parent=0 // pred_fallthru
    _
  // Predicated region
  $region10: #{encoder_decoder_forward.3} parent=0 // pred_check
    _
  $region11: #{encoder_decoder_forward.3} parent=0 // pred_check_branch
    %13 = sbr.rel (0) target = $region13
  $region12: #{encoder_decoder_forward.3} parent=0 // pred_region
    _
  $region13: #{encoder_decoder_forward.3} parent=0 // pred_fallthru
    _
  %v14 = vld [vmem:[%s0] sm:$0xff]
  %v15 = vld [vmem:[%s0 + $0x8] sm:$0xff]
  %v16 = vld [vmem:[%s0 + $0x10] sm:$0xff]
  %v17 = vld [vmem:[%s0 + $0x18] sm:$0xff]
  %v18 = vld [vmem:[%s0 + $0x20] sm:$0xff]
  %v19 = vld [vmem:[%s0 + $0x28] sm:$0xff]
  %v20 = vld [vmem:[%s0 + $0x30] sm:$0xff]
  %v21 = vld [vmem:[%s0 + $0x38] sm:$0xff]
  %v22 = vld [vmem:[%s0 + $0x40] sm:$0xff]
  %v23 = vld [vmem:[%s0 + $0x48] sm:$0xff]
  %v24 = vld [vmem:[%s0 + $0x50] sm:$0xff]
  %v25 = vld [vmem:[%s0 + $0x58] sm:$0xff]
  %v26 = vld [vmem:[%s0 + $0x60] sm:$0xff]
  %v27 = vld [vmem:[%s0 + $0x68] sm:$0xff]
  %v28 = vld [vmem:[%s0 + $0x70] sm:$0xff]
  %v29 = vld [vmem:[%s0 + $0x78] sm:$0xff]
  %v30 = vld [vmem:[%s1] sm:$0xff]
  %v31 = vld [vmem:[%s1 + $0x8] sm:$0xff]
  %v32 = vld [vmem:[%s1 + $0x10] sm:$0xff]
  %v33 = vld [vmem:[%s1 + $0x18] sm:$0x7]
  %v34 = vld [vmem:[%s2] sm:$0x1]
  %v36 = vlaneseq
  %v37 = vshrl.u32 %v36, 7
  %v38 = vsub.s32 0, %v37
  %v39 = vrot.slane %v34, %v38
  %vm41 = vcmask 220160
  %v43 = vsel %vm41, %v14, 0
  %v46 = vsel %vm41, %v15, 0
  %v49 = vsel %vm41, %v16, 0
  %v52 = vsel %vm41, %v17, 0
  %v55 = vsel %vm41, %v18, 0
  %v58 = vsel %vm41, %v19, 0
  %v61 = vsel %vm41, %v20, 0
  %v64 = vsel %vm41, %v21, 0
  %v67 = vsel %vm41, %v22, 0
  %v70 = vsel %vm41, %v23, 0
  %v73 = vsel %vm41, %v24, 0
  %v76 = vsel %vm41, %v25, 0
  %v79 = vsel %vm41, %v26, 0
  %v82 = vsel %vm41, %v27, 0
  %v85 = vsel %vm41, %v28, 0
  %v88 = vsel %vm41, %v29, 0
  %vm90 = vcmask 1042432
  %v92 = vsel %vm90, %v33, 0
  %94 = vmatprep.subr.mxu0 0.0
  %95 = vmatpush1.msra.mxu0 %v30
  %96 = vmatprep.subr.mxu0 0.0
  %97 = vmatpush1.msra.mxu0 %v31
  %98 = vmatprep.subr.mxu0 0.0
  %99 = vmatpush1.msra.mxu0 %v32
  %100 = vmatprep.subr.mxu0 0.0
  %101 = vmatpush1.msra.mxu0 %v92
  %102 = vmatprep.subr.mxu0 0.0
  %103 = vmatpush1.msra.mxu0 0.0
  %104 = vmatprep.subr.mxu0 0.0
  %105 = vmatpush1.msra.mxu0 0.0
  %106 = vmatprep.subr.mxu0 0.0
  %107 = vmatpush1.msra.mxu0 0.0
  %108 = vmatprep.subr.mxu0 0.0
  %109 = vmatpush1.msra.mxu0 0.0
  %110 = vmatprep.subr.mxu0 0.0
  %111 = vmatpush1.msra.mxu0 0.0
  %112 = vmatprep.subr.mxu0 0.0
  %113 = vmatpush1.msra.mxu0 0.0
  %114 = vmatprep.subr.mxu0 0.0
  %115 = vmatpush1.msra.mxu0 0.0
  %116 = vmatprep.subr.mxu0 0.0
  %117 = vmatpush1.msra.mxu0 0.0
  %118 = vmatprep.subr.mxu0 0.0
  %119 = vmatpush1.msra.mxu0 0.0
  %120 = vmatprep.subr.mxu0 0.0
  %121 = vmatpush1.msra.mxu0 0.0
  %122 = vmatprep.subr.mxu0 0.0
  %123 = vmatpush1.msra.mxu0 0.0
  %124 = vmatprep.subr.mxu0 0.0
  %125 = vmatpush1.msra.mxu0 0.0
  %126 = vmatprep.subr.mxu0 0.0
  %127 = vmatpush1.msra.mxu0 0.0
  %128 = vmatprep.subr.mxu0 0.0
  %129 = vmatpush1.msra.mxu0 0.0
  %130 = vmatprep.subr.mxu0 0.0
  %131 = vmatpush1.msra.mxu0 0.0
  %132 = vmatprep.subr.mxu0 0.0
  %133 = vmatpush1.msra.mxu0 0.0
  %134 = vmatprep.subr.mxu0 0.0
  %135 = vmatpush1.msra.mxu0 0.0
  %136 = vmatprep.subr.mxu0 0.0
  %137 = vmatpush1.msra.mxu0 0.0
  %138 = vmatprep.subr.mxu0 0.0
  %139 = vmatpush1.msra.mxu0 0.0
  %140 = vmatprep.subr.mxu0 0.0
  %141 = vmatpush1.msra.mxu0 0.0
  %142 = vmatprep.subr.mxu0 0.0
  %143 = vmatpush1.msra.mxu0 0.0
  %144 = vmatprep.subr.mxu0 0.0
  %145 = vmatpush1.msra.mxu0 0.0
  %146 = vmatprep.subr.mxu0 0.0
  %147 = vmatpush1.msra.mxu0 0.0
  %148 = vmatprep.subr.mxu0 0.0
  %149 = vmatpush1.msra.mxu0 0.0
  %150 = vmatprep.subr.mxu0 0.0
  %151 = vmatpush1.msra.mxu0 0.0
  %152 = vmatprep.subr.mxu0 0.0
  %153 = vmatpush1.msra.mxu0 0.0
  %154 = vmatprep.subr.mxu0 0.0
  %155 = vmatpush1.msra.mxu0 0.0
  %156 = vmatprep.subr.mxu0 0.0
  %157 = vmatpush1.msra.mxu0 0.0
  %158 = vmatprep.mubr.f32.mxu0 0.0
  %159 = vmatmul.mubr.f32.gmra.mrb[0].mxu0 %v43
  %v160 = vpop.f32.mrb[0].mxu0
  %v161 = vadd.f32 %v39, %v160
  %v162 = vpop.f32.mrb[0].mxu0
  %163 = vmatprep.mubr.f32.mxu0 0.0
  %164 = vmatmul.mubr.f32.gmra.mrb[0].mxu0 %v46
  %v165 = vpop.f32.mrb[0].mxu0
  %v166 = vadd.f32 %v39, %v165
  %v167 = vpop.f32.mrb[0].mxu0
  %168 = vmatprep.mubr.f32.mxu0 0.0
  %169 = vmatmul.mubr.f32.gmra.mrb[0].mxu0 %v49
  %v170 = vpop.f32.mrb[0].mxu0
  %v171 = vadd.f32 %v39, %v170
  %v172 = vpop.f32.mrb[0].mxu0
  %173 = vmatprep.mubr.f32.mxu0 0.0
  %174 = vmatmul.mubr.f32.gmra.mrb[0].mxu0 %v52
  %v175 = vpop.f32.mrb[0].mxu0
  %v176 = vadd.f32 %v39, %v175
  %v177 = vpop.f32.mrb[0].mxu0
  %178 = vmatprep.mubr.f32.mxu0 0.0
  %179 = vmatmul.mubr.f32.gmra.mrb[0].mxu0 %v55
  %v180 = vpop.f32.mrb[0].mxu0
  %v181 = vadd.f32 %v39, %v180
  %v182 = vpop.f32.mrb[0].mxu0
  %183 = vmatprep.mubr.f32.mxu0 0.0
  %184 = vmatmul.mubr.f32.gmra.mrb[0].mxu0 %v58
  %v185 = vpop.f32.mrb[0].mxu0
  %v186 = vadd.f32 %v39, %v185
  %v187 = vpop.f32.mrb[0].mxu0
  %188 = vmatprep.mubr.f32.mxu0 0.0
  %189 = vmatmul.mubr.f32.gmra.mrb[0].mxu0 %v61
  %v190 = vpop.f32.mrb[0].mxu0
  %v191 = vadd.f32 %v39, %v190
  %v192 = vpop.f32.mrb[0].mxu0
  %193 = vmatprep.mubr.f32.mxu0 0.0
  %194 = vmatmul.mubr.f32.gmra.mrb[0].mxu0 %v64
  %v195 = vpop.f32.mrb[0].mxu0
  %v196 = vadd.f32 %v39, %v195
  %v197 = vpop.f32.mrb[0].mxu0
  %198 = vmatprep.mubr.f32.mxu0 0.0
  %199 = vmatmul.mubr.f32.gmra.mrb[0].mxu0 %v67
  %v200 = vpop.f32.mrb[0].mxu0
  %v201 = vadd.f32 %v39, %v200
  %v202 = vpop.f32.mrb[0].mxu0
  %203 = vmatprep.mubr.f32.mxu0 0.0
  %204 = vmatmul.mubr.f32.gmra.mrb[0].mxu0 %v70
  %v205 = vpop.f32.mrb[0].mxu0
  %v206 = vadd.f32 %v39, %v205
  %v207 = vpop.f32.mrb[0].mxu0
  %208 = vmatprep.mubr.f32.mxu0 0.0
  %209 = vmatmul.mubr.f32.gmra.mrb[0].mxu0 %v73
  %v210 = vpop.f32.mrb[0].mxu0
  %v211 = vadd.f32 %v39, %v210
  %v212 = vpop.f32.mrb[0].mxu0
  %213 = vmatprep.mubr.f32.mxu0 0.0
  %214 = vmatmul.mubr.f32.gmra.mrb[0].mxu0 %v76
  %v215 = vpop.f32.mrb[0].mxu0
  %v216 = vadd.f32 %v39, %v215
  %v217 = vpop.f32.mrb[0].mxu0
  %218 = vmatprep.mubr.f32.mxu0 0.0
  %219 = vmatmul.mubr.f32.gmra.mrb[0].mxu0 %v79
  %v220 = vpop.f32.mrb[0].mxu0
  %v221 = vadd.f32 %v39, %v220
  %v222 = vpop.f32.mrb[0].mxu0
  %223 = vmatprep.mubr.f32.mxu0 0.0
  %224 = vmatmul.mubr.f32.gmra.mrb[0].mxu0 %v82
  %v225 = vpop.f32.mrb[0].mxu0
  %v226 = vadd.f32 %v39, %v225
  %v227 = vpop.f32.mrb[0].mxu0
  %228 = vmatprep.mubr.f32.mxu0 0.0
  %229 = vmatmul.mubr.f32.gmra.mrb[0].mxu0 %v85
  %v230 = vpop.f32.mrb[0].mxu0
  %v231 = vadd.f32 %v39, %v230
  %v232 = vpop.f32.mrb[0].mxu0
  %233 = vmatprep.mubr.f32.mxu0 0.0
  %234 = vmatmul.mubr.f32.gmra.mrb[0].mxu0 %v88
  %v235 = vpop.f32.mrb[0].mxu0
  %v236 = vadd.f32 %v39, %v235
  %v237 = vpop.f32.mrb[0].mxu0
  %238 = vdwg.mxu0
  %v239 = vmax.f32 %v161, 0.0
  %v240 = vmax.f32 %v166, 0.0
  %v241 = vmax.f32 %v171, 0.0
  %v242 = vmax.f32 %v176, 0.0
  %v243 = vmax.f32 %v181, 0.0
  %v244 = vmax.f32 %v186, 0.0
  %v245 = vmax.f32 %v191, 0.0
  %v246 = vmax.f32 %v196, 0.0
  %v247 = vmax.f32 %v201, 0.0
  %v248 = vmax.f32 %v206, 0.0
  %v249 = vmax.f32 %v211, 0.0
  %v250 = vmax.f32 %v216, 0.0
  %v251 = vmax.f32 %v221, 0.0
  %v252 = vmax.f32 %v226, 0.0
  %v253 = vmax.f32 %v231, 0.0
  %v254 = vmax.f32 %v236, 0.0
  %vm255 = vcmask 130048
  %256 = vst.msk [vmem:[%s3] sm:$0xff] %vm255, %v239
  %257 = vst.msk [vmem:[%s3 + $0x8] sm:$0xff] %vm255, %v240
  %258 = vst.msk [vmem:[%s3 + $0x10] sm:$0xff] %vm255, %v241
  %259 = vst.msk [vmem:[%s3 + $0x18] sm:$0xff] %vm255, %v242
  %260 = vst.msk [vmem:[%s3 + $0x20] sm:$0xff] %vm255, %v243
  %261 = vst.msk [vmem:[%s3 + $0x28] sm:$0xff] %vm255, %v244
  %262 = vst.msk [vmem:[%s3 + $0x30] sm:$0xff] %vm255, %v245
  %263 = vst.msk [vmem:[%s3 + $0x38] sm:$0xff] %vm255, %v246
  %264 = vst.msk [vmem:[%s3 + $0x40] sm:$0xff] %vm255, %v247
  %265 = vst.msk [vmem:[%s3 + $0x48] sm:$0xff] %vm255, %v248
  %266 = vst.msk [vmem:[%s3 + $0x50] sm:$0xff] %vm255, %v249
  %267 = vst.msk [vmem:[%s3 + $0x58] sm:$0xff] %vm255, %v250
  %268 = vst.msk [vmem:[%s3 + $0x60] sm:$0xff] %vm255, %v251
  %269 = vst.msk [vmem:[%s3 + $0x68] sm:$0xff] %vm255, %v252
  %270 = vst.msk [vmem:[%s3 + $0x70] sm:$0xff] %vm255, %v253
  %271 = vst.msk [vmem:[%s3 + $0x78] sm:$0xff] %vm255, %v254
  // Predicated region
  $region14: #{encoder_decoder_forward.3} parent=0 // pred_check
    _
  $region15: #{encoder_decoder_forward.3} parent=0 // pred_check_branch
    %273 = sbr.rel (0) target = $region17
  $region16: #{encoder_decoder_forward.3} parent=0 // pred_region
    _
  $region17: #{encoder_decoder_forward.3} parent=0 // pred_fallthru
    _
  // Predicated region
  $region18: #{encoder_decoder_forward.3} parent=0 // pred_check
    _
  $region19: #{encoder_decoder_forward.3} parent=0 // pred_check_branch
    %275 = sbr.rel (0) target = $region21
  $region20: #{encoder_decoder_forward.3} parent=0 // pred_region
    _
  $region21: #{encoder_decoder_forward.3} parent=0 // pred_fallthru
    _

// kernel: encoder_decoder_forward.4
$region0: #{encoder_decoder_forward.4}
  #allocation0 [shape = 'u32[]', space=smem, size = 0x4, offset = 0x4, fixed_abs, tag = 'smem constant byte address 0x4 - core index']
  #allocation1 [shape = 'u32[144,128]{1,0:T(1,128)}', space=vmem, size = 0x12000, scoped, tag = 'internal scratch']
  %s0 = inlined_call_operand.vmem [shape: f32[32,144], index: 0, kind: input, shape index: {}]
  %s1 = inlined_call_operand.vmem [shape: f32[144,64], index: 1, kind: input, shape index: {}]
  %s2 = inlined_call_operand.vmem [shape: f32[1,64], index: 2, kind: input, shape index: {}]
  %s3 = inlined_call_operand.vmem [shape: f32[32,64], index: 3, kind: output, shape index: {}]
  %s4 = sld [smem:[#allocation0]]
  $region22: #{encoder_decoder_forward.4} parent=0
    _
  %s6 = ssub.s32 1, %s4
  %s7 = scalar_select 0, %s6, %s4
  // Predicated region
  $region2: #{encoder_decoder_forward.4} parent=0 // pred_check
    _
  $region3: #{encoder_decoder_forward.4} parent=0 // pred_check_branch
    %9 = sbr.rel (0) target = $region5
  $region4: #{encoder_decoder_forward.4} parent=0 // pred_region
    _
  $region5: #{encoder_decoder_forward.4} parent=0 // pred_fallthru
    _
  // Predicated region
  $region6: #{encoder_decoder_forward.4} parent=0 // pred_check
    _
  $region7: #{encoder_decoder_forward.4} parent=0 // pred_check_branch
    %11 = sbr.rel (0) target = $region9
  $region8: #{encoder_decoder_forward.4} parent=0 // pred_region
    _
  $region9: #{encoder_decoder_forward.4} parent=0 // pred_fallthru
    _
  // Predicated region
  $region10: #{encoder_decoder_forward.4} parent=0 // pred_check
    _
  $region11: #{encoder_decoder_forward.4} parent=0 // pred_check_branch
    %13 = sbr.rel (0) target = $region13
  $region12: #{encoder_decoder_forward.4} parent=0 // pred_region
    _
  $region13: #{encoder_decoder_forward.4} parent=0 // pred_fallthru
    _
  %v14 = vld [vmem:[%s0] sm:$0xff]
  %v15 = vld [vmem:[%s0 + $0x8] sm:$0xff]
  %v16 = vld [vmem:[%s0 + $0x10] sm:$0xff]
  %v17 = vld [vmem:[%s0 + $0x18] sm:$0xff]
  %v18 = vld [vmem:[%s0 + $0x20] sm:$0xff]
  %v19 = vld [vmem:[%s0 + $0x28] sm:$0xff]
  %v20 = vld [vmem:[%s0 + $0x30] sm:$0xff]
  %v21 = vld [vmem:[%s0 + $0x38] sm:$0xff]
  %v22 = vld [vmem:[%s1] sm:$0xff]
  %v23 = vld [vmem:[%s1 + $0x8] sm:$0xff]
  %v24 = vld [vmem:[%s1 + $0x10] sm:$0xff]
  %v25 = vld [vmem:[%s1 + $0x18] sm:$0xff]
  %v26 = vld [vmem:[%s1 + $0x20] sm:$0xff]
  %v27 = vld [vmem:[%s1 + $0x28] sm:$0xff]
  %v28 = vld [vmem:[%s1 + $0x30] sm:$0xff]
  %v29 = vld [vmem:[%s1 + $0x38] sm:$0xff]
  %v30 = vld [vmem:[%s1 + $0x40] sm:$0xff]
  %v31 = vld [vmem:[%s1 + $0x48] sm:$0xff]
  %v32 = vld [vmem:[%s1 + $0x50] sm:$0xff]
  %v33 = vld [vmem:[%s1 + $0x58] sm:$0xff]
  %v34 = vld [vmem:[%s1 + $0x60] sm:$0xff]
  %v35 = vld [vmem:[%s1 + $0x68] sm:$0xff]
  %v36 = vld [vmem:[%s1 + $0x70] sm:$0xff]
  %v37 = vld [vmem:[%s1 + $0x78] sm:$0xff]
  %v38 = vld [vmem:[%s1 + $0x80] sm:$0xff]
  %v39 = vld [vmem:[%s1 + $0x88] sm:$0xff]
  %v40 = vld [vmem:[%s2] sm:$0x1]
  %v42 = vlaneseq
  %v43 = vshrl.u32 %v42, 7
  %v44 = vsub.s32 0, %v43
  %v45 = vrot.slane %v40, %v44
  %vm47 = vcmask 130048
  %v49 = vsel %vm47, %v15, 0
  %v52 = vsel %vm47, %v17, 0
  %v55 = vsel %vm47, %v19, 0
  %v58 = vsel %vm47, %v21, 0
  %60 = vmatprep.subr.mxu0 0.0
  %61 = vmatpush1.msra.mxu0 %v22
  %62 = vmatprep.subr.mxu0 0.0
  %63 = vmatpush1.msra.mxu0 %v23
  %64 = vmatprep.subr.mxu0 0.0
  %65 = vmatpush1.msra.mxu0 %v24
  %66 = vmatprep.subr.mxu0 0.0
  %67 = vmatpush1.msra.mxu0 %v25
  %68 = vmatprep.subr.mxu0 0.0
  %69 = vmatpush1.msra.mxu0 %v26
  %70 = vmatprep.subr.mxu0 0.0
  %71 = vmatpush1.msra.mxu0 %v27
  %72 = vmatprep.subr.mxu0 0.0
  %73 = vmatpush1.msra.mxu0 %v28
  %74 = vmatprep.subr.mxu0 0.0
  %75 = vmatpush1.msra.mxu0 %v29
  %76 = vmatprep.subr.mxu0 0.0
  %77 = vmatpush1.msra.mxu0 %v30
  %78 = vmatprep.subr.mxu0 0.0
  %79 = vmatpush1.msra.mxu0 %v31
  %80 = vmatprep.subr.mxu0 0.0
  %81 = vmatpush1.msra.mxu0 %v32
  %82 = vmatprep.subr.mxu0 0.0
  %83 = vmatpush1.msra.mxu0 %v33
  %84 = vmatprep.subr.mxu0 0.0
  %85 = vmatpush1.msra.mxu0 %v34
  %86 = vmatprep.subr.mxu0 0.0
  %87 = vmatpush1.msra.mxu0 %v35
  %88 = vmatprep.subr.mxu0 0.0
  %89 = vmatpush1.msra.mxu0 %v36
  %90 = vmatprep.subr.mxu0 0.0
  %91 = vmatpush1.msra.mxu0 %v37
  %92 = vmatprep.subr.mxu0 0.0
  %93 = vmatpush1.msra.mxu0 %v38
  %94 = vmatprep.subr.mxu0 0.0
  %95 = vmatpush1.msra.mxu0 %v39
  %96 = vmatprep.subr.mxu0 0.0
  %97 = vmatpush1.msra.mxu0 0.0
  %98 = vmatprep.subr.mxu0 0.0
  %99 = vmatpush1.msra.mxu0 0.0
  %100 = vmatprep.subr.mxu0 0.0
  %101 = vmatpush1.msra.mxu0 0.0
  %102 = vmatprep.subr.mxu0 0.0
  %103 = vmatpush1.msra.mxu0 0.0
  %104 = vmatprep.subr.mxu0 0.0
  %105 = vmatpush1.msra.mxu0 0.0
  %106 = vmatprep.subr.mxu0 0.0
  %107 = vmatpush1.msra.mxu0 0.0
  %108 = vmatprep.subr.mxu0 0.0
  %109 = vmatpush1.msra.mxu0 0.0
  %110 = vmatprep.subr.mxu0 0.0
  %111 = vmatpush1.msra.mxu0 0.0
  %112 = vmatprep.subr.mxu0 0.0
  %113 = vmatpush1.msra.mxu0 0.0
  %114 = vmatprep.subr.mxu0 0.0
  %115 = vmatpush1.msra.mxu0 0.0
  %116 = vmatprep.subr.mxu0 0.0
  %117 = vmatpush1.msra.mxu0 0.0
  %118 = vmatprep.subr.mxu0 0.0
  %119 = vmatpush1.msra.mxu0 0.0
  %120 = vmatprep.subr.mxu0 0.0
  %121 = vmatpush1.msra.mxu0 0.0
  %122 = vmatprep.subr.mxu0 0.0
  %123 = vmatpush1.msra.mxu0 0.0
  %124 = vmatprep.mubr.f32.mxu0 %v49
  %125 = vmatmul.mubr.f32.gmra.mrb[0].mxu0 %v14
  %v126 = vpop.f32.mrb[0].mxu0
  %v127 = vadd.f32 %v45, %v126
  %v128 = vpop.f32.mrb[0].mxu0
  %129 = vmatprep.mubr.f32.mxu0 %v52
  %130 = vmatmul.mubr.f32.gmra.mrb[0].mxu0 %v16
  %v131 = vpop.f32.mrb[0].mxu0
  %v132 = vadd.f32 %v45, %v131
  %v133 = vpop.f32.mrb[0].mxu0
  %134 = vmatprep.mubr.f32.mxu0 %v55
  %135 = vmatmul.mubr.f32.gmra.mrb[0].mxu0 %v18
  %v136 = vpop.f32.mrb[0].mxu0
  %v137 = vadd.f32 %v45, %v136
  %v138 = vpop.f32.mrb[0].mxu0
  %139 = vmatprep.mubr.f32.mxu0 %v58
  %140 = vmatmul.mubr.f32.gmra.mrb[0].mxu0 %v20
  %v141 = vpop.f32.mrb[0].mxu0
  %v142 = vadd.f32 %v45, %v141
  %v143 = vpop.f32.mrb[0].mxu0
  %144 = vdwg.mxu0
  %v145 = vmax.f32 %v127, 0.0
  %v146 = vmax.f32 %v132, 0.0
  %v147 = vmax.f32 %v137, 0.0
  %v148 = vmax.f32 %v142, 0.0
  %vm149 = vcmask 523264
  %150 = vst.msk [vmem:[%s3] sm:$0xff] %vm149, %v145
  %151 = vst.msk [vmem:[%s3 + $0x8] sm:$0xff] %vm149, %v146
  %152 = vst.msk [vmem:[%s3 + $0x10] sm:$0xff] %vm149, %v147
  %153 = vst.msk [vmem:[%s3 + $0x18] sm:$0xff] %vm149, %v148
  // Predicated region
  $region14: #{encoder_decoder_forward.4} parent=0 // pred_check
    _
  $region15: #{encoder_decoder_forward.4} parent=0 // pred_check_branch
    %155 = sbr.rel (0) target = $region17
  $region16: #{encoder_decoder_forward.4} parent=0 // pred_region
    _
  $region17: #{encoder_decoder_forward.4} parent=0 // pred_fallthru
    _
  // Predicated region
  $region18: #{encoder_decoder_forward.4} parent=0 // pred_check
    _
  $region19: #{encoder_decoder_forward.4} parent=0 // pred_check_branch
    %157 = sbr.rel (0) target = $region21
  $region20: #{encoder_decoder_forward.4} parent=0 // pred_region
    _
  $region21: #{encoder_decoder_forward.4} parent=0 // pred_fallthru
    _

// kernel: encoder_decoder_forward.5
$region0: #{encoder_decoder_forward.5}
  #allocation0 [shape = 'u32[]', space=smem, size = 0x4, offset = 0x4, fixed_abs, tag = 'smem constant byte address 0x4 - core index']
  #allocation1 [shape = 'u32[144,128]{1,0:T(1,128)}', space=vmem, size = 0x12000, scoped, tag = 'internal scratch']
  #allocation2 [shape = 'f32[8,2,64]{2,1,0:T(2,128)}', space=vmem, size = 0x2000, scoped, tag = 'scratch operand']
  %s0 = inlined_call_operand.vmem [shape: f32[2,16,64], index: 0, kind: input, shape index: {}]
  %s1 = inlined_call_operand.vmem [shape: f32[8,2,32], index: 1, kind: input, shape index: {}]
  %s2 = inlined_call_operand.vmem [shape: f32[64,32], index: 2, kind: input, shape index: {}]
  %s3 = inlined_call_operand.vmem [shape: f32[1,32], index: 3, kind: input, shape index: {}]
  %s4 = inlined_call_operand.vmem [shape: f32[64,128], index: 4, kind: input, shape index: {}]
  %s5 = inlined_call_operand.vmem [shape: f32[1,128], index: 5, kind: input, shape index: {}]
  %s6 = inlined_call_operand.vmem [shape: f32[1,32], index: 6, kind: input, shape index: {}]
  %s7 = inlined_call_operand.vmem [shape: f32[1,32], index: 7, kind: input, shape index: {}]
  %s8 = inlined_call_operand.vmem [shape: f32[64,288], index: 8, kind: input, shape index: {}]
  %s9 = inlined_call_operand.vmem [shape: f32[32,256], index: 9, kind: input, shape index: {}]
  %s10 = inlined_call_operand.vmem [shape: f32[64,256], index: 10, kind: input, shape index: {}]
  %s11 = inlined_call_operand.vmem [shape: f32[1,256], index: 11, kind: input, shape index: {}]
  %s12 = inlined_call_operand.vmem [shape: f32[64,128], index: 12, kind: input, shape index: {}]
  %s13 = inlined_call_operand.vmem [shape: f32[1,128], index: 13, kind: input, shape index: {}]
  %s14 = inlined_call_operand.vmem [shape: f32[16,128], index: 14, kind: output, shape index: {0}]
  %s15 = inlined_call_operand.vmem [shape: f32[8,2,16], index: 15, kind: output, shape index: {1}]
  %16 = xla_tuple %s14, %s15
  %s17 = sld [smem:[#allocation0]]
  $region74: #{encoder_decoder_forward.5} parent=0
    _
  %s19 = ssub.s32 1, %s17
  %s20 = scalar_select 0, %s19, %s17
  // Predicated region
  $region2: #{encoder_decoder_forward.5} parent=0 // pred_check
    _
  $region3: #{encoder_decoder_forward.5} parent=0 // pred_check_branch
    %22 = sbr.rel (0) target = $region5
  $region4: #{encoder_decoder_forward.5} parent=0 // pred_region
    _
  $region5: #{encoder_decoder_forward.5} parent=0 // pred_fallthru
    _
  // Predicated region
  $region6: #{encoder_decoder_forward.5} parent=0 // pred_check
    _
  $region7: #{encoder_decoder_forward.5} parent=0 // pred_check_branch
    %24 = sbr.rel (0) target = $region9
  $region8: #{encoder_decoder_forward.5} parent=0 // pred_region
    _
  $region9: #{encoder_decoder_forward.5} parent=0 // pred_fallthru
    _
  // Predicated region
  $region10: #{encoder_decoder_forward.5} parent=0 // pred_check
    _
  $region11: #{encoder_decoder_forward.5} parent=0 // pred_check_branch
    %26 = sbr.rel (0) target = $region13
  $region12: #{encoder_decoder_forward.5} parent=0 // pred_region
    _
  $region13: #{encoder_decoder_forward.5} parent=0 // pred_fallthru
    _
  // Predicated region
  $region14: #{encoder_decoder_forward.5} parent=0 // pred_check
    _
  $region15: #{encoder_decoder_forward.5} parent=0 // pred_check_branch
    %28 = sbr.rel (0) target = $region17
  $region16: #{encoder_decoder_forward.5} parent=0 // pred_region
    _
  $region17: #{encoder_decoder_forward.5} parent=0 // pred_fallthru
    _
  // Predicated region
  $region18: #{encoder_decoder_forward.5} parent=0 // pred_check
    _
  $region19: #{encoder_decoder_forward.5} parent=0 // pred_check_branch
    %30 = sbr.rel (0) target = $region21
  $region20: #{encoder_decoder_forward.5} parent=0 // pred_region
    _
  $region21: #{encoder_decoder_forward.5} parent=0 // pred_fallthru
    _
  // Predicated region
  $region22: #{encoder_decoder_forward.5} parent=0 // pred_check
    _
  $region23: #{encoder_decoder_forward.5} parent=0 // pred_check_branch
    %32 = sbr.rel (0) target = $region25
  $region24: #{encoder_decoder_forward.5} parent=0 // pred_region
    _
  $region25: #{encoder_decoder_forward.5} parent=0 // pred_fallthru
    _
  // Predicated region
  $region26: #{encoder_decoder_forward.5} parent=0 // pred_check
    _
  $region27: #{encoder_decoder_forward.5} parent=0 // pred_check_branch
    %34 = sbr.rel (0) target = $region29
  $region28: #{encoder_decoder_forward.5} parent=0 // pred_region
    _
  $region29: #{encoder_decoder_forward.5} parent=0 // pred_fallthru
    _
  // Predicated region
  $region30: #{encoder_decoder_forward.5} parent=0 // pred_check
    _
  $region31: #{encoder_decoder_forward.5} parent=0 // pred_check_branch
    %36 = sbr.rel (0) target = $region33
  $region32: #{encoder_decoder_forward.5} parent=0 // pred_region
    _
  $region33: #{encoder_decoder_forward.5} parent=0 // pred_fallthru
    _
  // Predicated region
  $region34: #{encoder_decoder_forward.5} parent=0 // pred_check
    _
  $region35: #{encoder_decoder_forward.5} parent=0 // pred_check_branch
    %38 = sbr.rel (0) target = $region37
  $region36: #{encoder_decoder_forward.5} parent=0 // pred_region
    _
  $region37: #{encoder_decoder_forward.5} parent=0 // pred_fallthru
    _
  // Predicated region
  $region38: #{encoder_decoder_forward.5} parent=0 // pred_check
    _
  $region39: #{encoder_decoder_forward.5} parent=0 // pred_check_branch
    %40 = sbr.rel (0) target = $region41
  $region40: #{encoder_decoder_forward.5} parent=0 // pred_region
    _
  $region41: #{encoder_decoder_forward.5} parent=0 // pred_fallthru
    _
  // Predicated region
  $region42: #{encoder_decoder_forward.5} parent=0 // pred_check
    _
  $region43: #{encoder_decoder_forward.5} parent=0 // pred_check_branch
    %42 = sbr.rel (0) target = $region45
  $region44: #{encoder_decoder_forward.5} parent=0 // pred_region
    _
  $region45: #{encoder_decoder_forward.5} parent=0 // pred_fallthru
    _
  // Predicated region
  $region46: #{encoder_decoder_forward.5} parent=0 // pred_check
    _
  $region47: #{encoder_decoder_forward.5} parent=0 // pred_check_branch
    %44 = sbr.rel (0) target = $region49
  $region48: #{encoder_decoder_forward.5} parent=0 // pred_region
    _
  $region49: #{encoder_decoder_forward.5} parent=0 // pred_fallthru
    _
  // Predicated region
  $region50: #{encoder_decoder_forward.5} parent=0 // pred_check
    _
  $region51: #{encoder_decoder_forward.5} parent=0 // pred_check_branch
    %46 = sbr.rel (0) target = $region53
  $region52: #{encoder_decoder_forward.5} parent=0 // pred_region
    _
  $region53: #{encoder_decoder_forward.5} parent=0 // pred_fallthru
    _
  // Predicated region
  $region54: #{encoder_decoder_forward.5} parent=0 // pred_check
    _
  $region55: #{encoder_decoder_forward.5} parent=0 // pred_check_branch
    %48 = sbr.rel (0) target = $region57
  $region56: #{encoder_decoder_forward.5} parent=0 // pred_region
    _
  $region57: #{encoder_decoder_forward.5} parent=0 // pred_fallthru
    _
  %v49 = vld [vmem:[%s0] sm:$0xff]
  %v50 = vld [vmem:[%s0 + $0x8] sm:$0xff]
  %v51 = vld [vmem:[%s0 + $0x10] sm:$0xff]
  %v52 = vld [vmem:[%s0 + $0x18] sm:$0xff]
  %vm53 = vcmask 523264
  %v54 = vsel %vm53, %v49, 0.0
  %v55 = vsel %vm53, %v50, 0.0
  %v56 = vadd.f32 %v54, %v55
  %v57 = vrot.slane %v56, 4
  %v58 = vadd.f32 %v56, %v57
  %v59 = vrot.slane %v58, 2
  %v60 = vadd.f32 %v58, %v59
  %v61 = vrot.slane %v60, 1
  %v62 = vadd.f32 %v60, %v61
  %v63 = vsel %vm53, %v51, 0.0
  %v64 = vsel %vm53, %v52, 0.0
  %v65 = vadd.f32 %v63, %v64
  %v66 = vrot.slane %v65, 4
  %v67 = vadd.f32 %v65, %v66
  %v68 = vrot.slane %v67, 2
  %v69 = vadd.f32 %v67, %v68
  %v70 = vrot.slane %v69, 1
  %v71 = vadd.f32 %v69, %v70
  %v72 = vrcp.pop 16.0
  %v73 = vmul.f32 %v62, %v72
  %v74 = vmul.f32 %v71, %v72
  %v75 = vld [vmem:[%s4] sm:$0xff]
  %v76 = vld [vmem:[%s4 + $0x8] sm:$0xff]
  %v77 = vld [vmem:[%s4 + $0x10] sm:$0xff]
  %v78 = vld [vmem:[%s4 + $0x18] sm:$0xff]
  %v79 = vld [vmem:[%s4 + $0x20] sm:$0xff]
  %v80 = vld [vmem:[%s4 + $0x28] sm:$0xff]
  %v81 = vld [vmem:[%s4 + $0x30] sm:$0xff]
  %v82 = vld [vmem:[%s4 + $0x38] sm:$0xff]
  %v83 = vld [vmem:[%s5] sm:$0x1]
  %v85 = vlaneseq
  %v86 = vshrl.u32 %v85, 7
  %v87 = vsub.s32 0, %v86
  %v88 = vrot.slane %v83, %v87
  %vm92 = vcmask 1041409
  %v93 = vsel %vm92, %v74, %v73
  %v94 = vsel %vm53, %v93, 0
  %96 = vmatprep.subr.mxu0 0.0
  %97 = vmatpush1.msra.mxu0 %v75
  %98 = vmatprep.subr.mxu0 0.0
  %99 = vmatpush1.msra.mxu0 %v76
  %100 = vmatprep.subr.mxu0 0.0
  %101 = vmatpush1.msra.mxu0 %v77
  %102 = vmatprep.subr.mxu0 0.0
  %103 = vmatpush1.msra.mxu0 %v78
  %104 = vmatprep.subr.mxu0 0.0
  %105 = vmatpush1.msra.mxu0 %v79
  %106 = vmatprep.subr.mxu0 0.0
  %107 = vmatpush1.msra.mxu0 %v80
  %108 = vmatprep.subr.mxu0 0.0
  %109 = vmatpush1.msra.mxu0 %v81
  %110 = vmatprep.subr.mxu0 0.0
  %111 = vmatpush1.msra.mxu0 %v82
  %112 = vmatprep.subr.mxu0 0.0
  %113 = vmatpush1.msra.mxu0 0.0
  %114 = vmatprep.subr.mxu0 0.0
  %115 = vmatpush1.msra.mxu0 0.0
  %116 = vmatprep.subr.mxu0 0.0
  %117 = vmatpush1.msra.mxu0 0.0
  %118 = vmatprep.subr.mxu0 0.0
  %119 = vmatpush1.msra.mxu0 0.0
  %120 = vmatprep.subr.mxu0 0.0
  %121 = vmatpush1.msra.mxu0 0.0
  %122 = vmatprep.subr.mxu0 0.0
  %123 = vmatpush1.msra.mxu0 0.0
  %124 = vmatprep.subr.mxu0 0.0
  %125 = vmatpush1.msra.mxu0 0.0
  %126 = vmatprep.subr.mxu0 0.0
  %127 = vmatpush1.msra.mxu0 0.0
  %128 = vmatprep.subr.mxu0 0.0
  %129 = vmatpush1.msra.mxu0 0.0
  %130 = vmatprep.subr.mxu0 0.0
  %131 = vmatpush1.msra.mxu0 0.0
  %132 = vmatprep.subr.mxu0 0.0
  %133 = vmatpush1.msra.mxu0 0.0
  %134 = vmatprep.subr.mxu0 0.0
  %135 = vmatpush1.msra.mxu0 0.0
  %136 = vmatprep.subr.mxu0 0.0
  %137 = vmatpush1.msra.mxu0 0.0
  %138 = vmatprep.subr.mxu0 0.0
  %139 = vmatpush1.msra.mxu0 0.0
  %140 = vmatprep.subr.mxu0 0.0
  %141 = vmatpush1.msra.mxu0 0.0
  %142 = vmatprep.subr.mxu0 0.0
  %143 = vmatpush1.msra.mxu0 0.0
  %144 = vmatprep.subr.mxu0 0.0
  %145 = vmatpush1.msra.mxu0 0.0
  %146 = vmatprep.subr.mxu0 0.0
  %147 = vmatpush1.msra.mxu0 0.0
  %148 = vmatprep.subr.mxu0 0.0
  %149 = vmatpush1.msra.mxu0 0.0
  %150 = vmatprep.subr.mxu0 0.0
  %151 = vmatpush1.msra.mxu0 0.0
  %152 = vmatprep.subr.mxu0 0.0
  %153 = vmatpush1.msra.mxu0 0.0
  %154 = vmatprep.subr.mxu0 0.0
  %155 = vmatpush1.msra.mxu0 0.0
  %156 = vmatprep.subr.mxu0 0.0
  %157 = vmatpush1.msra.mxu0 0.0
  %158 = vmatprep.subr.mxu0 0.0
  %159 = vmatpush1.msra.mxu0 0.0
  %160 = vmatprep.mubr.f32.mxu0 0.0
  %161 = vmatmul.mubr.f32.gmra.mrb[0].mxu0 %v94
  %v162 = vpop.f32.mrb[0].mxu0
  %v163 = vadd.f32 %v88, %v162
  %v164 = vpop.f32.mrb[0].mxu0
  %165 = vdwg.mxu0
  %v166 = vld [vmem:[%s2] sm:$0xff]
  %v167 = vld [vmem:[%s2 + $0x8] sm:$0xff]
  %v168 = vld [vmem:[%s2 + $0x10] sm:$0xff]
  %v169 = vld [vmem:[%s2 + $0x18] sm:$0xff]
  %v170 = vld [vmem:[%s2 + $0x20] sm:$0xff]
  %v171 = vld [vmem:[%s2 + $0x28] sm:$0xff]
  %v172 = vld [vmem:[%s2 + $0x30] sm:$0xff]
  %v173 = vld [vmem:[%s2 + $0x38] sm:$0xff]
  %v174 = vld [vmem:[%s3] sm:$0x1]
  %v176 = vlaneseq
  %v177 = vshrl.u32 %v176, 7
  %v178 = vsub.s32 0, %v177
  %v179 = vrot.slane %v174, %v178
  %v182 = vsel %vm53, %v49, 0
  %v185 = vsel %vm53, %v50, 0
  %v188 = vsel %vm53, %v51, 0
  %v191 = vsel %vm53, %v52, 0
  %193 = vmatprep.subr.mxu0 0.0
  %194 = vmatpush1.msra.mxu0 %v166
  %195 = vmatprep.subr.mxu0 0.0
  %196 = vmatpush1.msra.mxu0 %v167
  %197 = vmatprep.subr.mxu0 0.0
  %198 = vmatpush1.msra.mxu0 %v168
  %199 = vmatprep.subr.mxu0 0.0
  %200 = vmatpush1.msra.mxu0 %v169
  %201 = vmatprep.subr.mxu0 0.0
  %202 = vmatpush1.msra.mxu0 %v170
  %203 = vmatprep.subr.mxu0 0.0
  %204 = vmatpush1.msra.mxu0 %v171
  %205 = vmatprep.subr.mxu0 0.0
  %206 = vmatpush1.msra.mxu0 %v172
  %207 = vmatprep.subr.mxu0 0.0
  %208 = vmatpush1.msra.mxu0 %v173
  %209 = vmatprep.subr.mxu0 0.0
  %210 = vmatpush1.msra.mxu0 0.0
  %211 = vmatprep.subr.mxu0 0.0
  %212 = vmatpush1.msra.mxu0 0.0
  %213 = vmatprep.subr.mxu0 0.0
  %214 = vmatpush1.msra.mxu0 0.0
  %215 = vmatprep.subr.mxu0 0.0
  %216 = vmatpush1.msra.mxu0 0.0
  %217 = vmatprep.subr.mxu0 0.0
  %218 = vmatpush1.msra.mxu0 0.0
  %219 = vmatprep.subr.mxu0 0.0
  %220 = vmatpush1.msra.mxu0 0.0
  %221 = vmatprep.subr.mxu0 0.0
  %222 = vmatpush1.msra.mxu0 0.0
  %223 = vmatprep.subr.mxu0 0.0
  %224 = vmatpush1.msra.mxu0 0.0
  %225 = vmatprep.subr.mxu0 0.0
  %226 = vmatpush1.msra.mxu0 0.0
  %227 = vmatprep.subr.mxu0 0.0
  %228 = vmatpush1.msra.mxu0 0.0
  %229 = vmatprep.subr.mxu0 0.0
  %230 = vmatpush1.msra.mxu0 0.0
  %231 = vmatprep.subr.mxu0 0.0
  %232 = vmatpush1.msra.mxu0 0.0
  %233 = vmatprep.subr.mxu0 0.0
  %234 = vmatpush1.msra.mxu0 0.0
  %235 = vmatprep.subr.mxu0 0.0
  %236 = vmatpush1.msra.mxu0 0.0
  %237 = vmatprep.subr.mxu0 0.0
  %238 = vmatpush1.msra.mxu0 0.0
  %239 = vmatprep.subr.mxu0 0.0
  %240 = vmatpush1.msra.mxu0 0.0
  %241 = vmatprep.subr.mxu0 0.0
  %242 = vmatpush1.msra.mxu0 0.0
  %243 = vmatprep.subr.mxu0 0.0
  %244 = vmatpush1.msra.mxu0 0.0
  %245 = vmatprep.subr.mxu0 0.0
  %246 = vmatpush1.msra.mxu0 0.0
  %247 = vmatprep.subr.mxu0 0.0
  %248 = vmatpush1.msra.mxu0 0.0
  %249 = vmatprep.subr.mxu0 0.0
  %250 = vmatpush1.msra.mxu0 0.0
  %251 = vmatprep.subr.mxu0 0.0
  %252 = vmatpush1.msra.mxu0 0.0
  %253 = vmatprep.subr.mxu0 0.0
  %254 = vmatpush1.msra.mxu0 0.0
  %255 = vmatprep.subr.mxu0 0.0
  %256 = vmatpush1.msra.mxu0 0.0
  %257 = vmatprep.mubr.f32.mxu0 0.0
  %258 = vmatmul.mubr.f32.gmra.mrb[0].mxu0 %v182
  %v259 = vpop.f32.mrb[0].mxu0
  %v260 = vadd.f32 %v179, %v259
  %v261 = vpop.f32.mrb[0].mxu0
  %262 = vmatprep.mubr.f32.mxu0 0.0
  %263 = vmatmul.mubr.f32.gmra.mrb[0].mxu0 %v185
  %v264 = vpop.f32.mrb[0].mxu0
  %v265 = vadd.f32 %v179, %v264
  %v266 = vpop.f32.mrb[0].mxu0
  %267 = vmatprep.mubr.f32.mxu0 0.0
  %268 = vmatmul.mubr.f32.gmra.mrb[0].mxu0 %v188
  %v269 = vpop.f32.mrb[0].mxu0
  %v270 = vadd.f32 %v179, %v269
  %v271 = vpop.f32.mrb[0].mxu0
  %272 = vmatprep.mubr.f32.mxu0 0.0
  %273 = vmatmul.mubr.f32.gmra.mrb[0].mxu0 %v191
  %v274 = vpop.f32.mrb[0].mxu0
  %v275 = vadd.f32 %v179, %v274
  %v276 = vpop.f32.mrb[0].mxu0
  %277 = vdwg.mxu0
  %v278 = vld [vmem:[%s1] sm:$0x3]
  %v279 = vld [vmem:[%s1 + $0x2] sm:$0x3]
  %v280 = vld [vmem:[%s1 + $0x4] sm:$0x3]
  %v281 = vld [vmem:[%s1 + $0x6] sm:$0x3]
  %v282 = vld [vmem:[%s1 + $0x8] sm:$0x3]
  %v283 = vld [vmem:[%s1 + $0xa] sm:$0x3]
  %v284 = vld [vmem:[%s1 + $0xc] sm:$0x3]
  %v285 = vld [vmem:[%s1 + $0xe] sm:$0x3]
  %v286 = vld [vmem:[%s9] sm:$0xff]
  %v287 = vld [vmem:[%s9 + $0x8] sm:$0xff]
  %v288 = vld [vmem:[%s9 + $0x10] sm:$0xff]
  %v289 = vld [vmem:[%s9 + $0x18] sm:$0xff]
  %v290 = vld [vmem:[%s9 + $0x20] sm:$0xff]
  %v291 = vld [vmem:[%s9 + $0x28] sm:$0xff]
  %v292 = vld [vmem:[%s9 + $0x30] sm:$0xff]
  %v293 = vld [vmem:[%s9 + $0x38] sm:$0xff]
  %v294 = vld [vmem:[%s11] sm:$0x3]
  %v296 = vlaneseq
  %v297 = vshrl.u32 %v296, 7
  %v298 = vsub.s32 0, %v297
  %v299 = vrot.slane %v294, %v298
  %v300 = vlaneseq
  %v301 = vshrl.u32 %v300, 7
  %v302 = vsub.s32 1, %v301
  %v303 = vrot.slane %v294, %v302
  %v314 = vcombine.low %v278, %v279
  %v315 = vcombine.low %v280, %v281
  %v317 = vunpack.c.l.s4 1983009808
  %v318 = vunpack.c.0.s8 %v317
  %v319 = vlaneseq
  %v320 = vshrl.u32 %v319, 7
  %v321 = vsub.s32 %v318, %v320
  %v322 = vrot.slane %v314, %v321
  %v324 = vunpack.c.l.s4 1983009808
  %v325 = vunpack.c.0.s8 %v324
  %v326 = vlaneseq
  %v327 = vshrl.u32 %v326, 7
  %v328 = vsub.s32 %v325, %v327
  %v329 = vrot.slane %v315, %v328
  %v330 = vcombine.low %v322, %v329
  %v331 = vcombine.low %v282, %v283
  %v332 = vcombine.low %v284, %v285
  %v334 = vunpack.c.l.s4 1983009808
  %v335 = vunpack.c.0.s8 %v334
  %v336 = vlaneseq
  %v337 = vshrl.u32 %v336, 7
  %v338 = vsub.s32 %v335, %v337
  %v339 = vrot.slane %v331, %v338
  %v341 = vunpack.c.l.s4 1983009808
  %v342 = vunpack.c.0.s8 %v341
  %v343 = vlaneseq
  %v344 = vshrl.u32 %v343, 7
  %v345 = vsub.s32 %v342, %v344
  %v346 = vrot.slane %v332, %v345
  %v347 = vcombine.low %v339, %v346
  %vm348 = vcmask 261120
  %v349 = vsel %vm348, %v330, 0
  %v351 = vsel %vm348, %v347, 0
  %353 = vmatprep.subr.mxu0 %v287
  %354 = vmatpush1.msra.mxu0 %v286
  %355 = vmatprep.subr.mxu0 %v289
  %356 = vmatpush1.msra.mxu0 %v288
  %357 = vmatprep.subr.mxu0 %v291
  %358 = vmatpush1.msra.mxu0 %v290
  %359 = vmatprep.subr.mxu0 %v293
  %360 = vmatpush1.msra.mxu0 %v292
  %361 = vmatprep.subr.mxu0 0.0
  %362 = vmatpush1.msra.mxu0 0.0
  %363 = vmatprep.subr.mxu0 0.0
  %364 = vmatpush1.msra.mxu0 0.0
  %365 = vmatprep.subr.mxu0 0.0
  %366 = vmatpush1.msra.mxu0 0.0
  %367 = vmatprep.subr.mxu0 0.0
  %368 = vmatpush1.msra.mxu0 0.0
  %369 = vmatprep.subr.mxu0 0.0
  %370 = vmatpush1.msra.mxu0 0.0
  %371 = vmatprep.subr.mxu0 0.0
  %372 = vmatpush1.msra.mxu0 0.0
  %373 = vmatprep.subr.mxu0 0.0
  %374 = vmatpush1.msra.mxu0 0.0
  %375 = vmatprep.subr.mxu0 0.0
  %376 = vmatpush1.msra.mxu0 0.0
  %377 = vmatprep.subr.mxu0 0.0
  %378 = vmatpush1.msra.mxu0 0.0
  %379 = vmatprep.subr.mxu0 0.0
  %380 = vmatpush1.msra.mxu0 0.0
  %381 = vmatprep.subr.mxu0 0.0
  %382 = vmatpush1.msra.mxu0 0.0
  %383 = vmatprep.subr.mxu0 0.0
  %384 = vmatpush1.msra.mxu0 0.0
  %385 = vmatprep.subr.mxu0 0.0
  %386 = vmatpush1.msra.mxu0 0.0
  %387 = vmatprep.subr.mxu0 0.0
  %388 = vmatpush1.msra.mxu0 0.0
  %389 = vmatprep.subr.mxu0 0.0
  %390 = vmatpush1.msra.mxu0 0.0
  %391 = vmatprep.subr.mxu0 0.0
  %392 = vmatpush1.msra.mxu0 0.0
  %393 = vmatprep.subr.mxu0 0.0
  %394 = vmatpush1.msra.mxu0 0.0
  %395 = vmatprep.subr.mxu0 0.0
  %396 = vmatpush1.msra.mxu0 0.0
  %397 = vmatprep.subr.mxu0 0.0
  %398 = vmatpush1.msra.mxu0 0.0
  %399 = vmatprep.subr.mxu0 0.0
  %400 = vmatpush1.msra.mxu0 0.0
  %401 = vmatprep.subr.mxu0 0.0
  %402 = vmatpush1.msra.mxu0 0.0
  %403 = vmatprep.subr.mxu0 0.0
  %404 = vmatpush1.msra.mxu0 0.0
  %405 = vmatprep.subr.mxu0 0.0
  %406 = vmatpush1.msra.mxu0 0.0
  %407 = vmatprep.subr.mxu0 0.0
  %408 = vmatpush1.msra.mxu0 0.0
  %409 = vmatprep.subr.mxu0 0.0
  %410 = vmatpush1.msra.mxu0 0.0
  %411 = vmatprep.subr.mxu0 0.0
  %412 = vmatpush1.msra.mxu0 0.0
  %413 = vmatprep.subr.mxu0 0.0
  %414 = vmatpush1.msra.mxu0 0.0
  %415 = vmatprep.subr.mxu0 0.0
  %416 = vmatpush1.msra.mxu0 0.0
  %417 = vmatprep.mubr.f32.mxu0 0.0
  %418 = vmatmul.mubr.f32.gmra.mrb[0].mxu0 %v349
  %v419 = vpop.f32.mrb[0].mxu0
  %v420 = vadd.f32 %v299, %v419
  %v421 = vpop.f32.mrb[0].mxu0
  %v422 = vadd.f32 %v303, %v421
  %423 = vmatprep.mubr.f32.mxu0 0.0
  %424 = vmatmul.mubr.f32.gmra.mrb[0].mxu0 %v351
  %v425 = vpop.f32.mrb[0].mxu0
  %v426 = vadd.f32 %v299, %v425
  %v427 = vpop.f32.mrb[0].mxu0
  %v428 = vadd.f32 %v303, %v427
  %429 = vdwg.mxu0
  %v434 = vcombine.low %v420, %v422
  %v435 = vcombine.high %v420, %v422
  %v437 = vunpack.c.l.s4 1983009808
  %v438 = vunpack.c.0.s8 %v437
  %v439 = vlaneseq
  %v440 = vshrl.u32 %v439, 7
  %v441 = vsub.s32 %v438, %v440
  %v442 = vrot.slane %v434, %v441
  %v444 = vunpack.c.l.s4 1983009808
  %v445 = vunpack.c.0.s8 %v444
  %v446 = vlaneseq
  %v447 = vshrl.u32 %v446, 7
  %v448 = vsub.s32 %v445, %v447
  %v449 = vrot.slane %v435, %v448
  %v450 = vcombine.high %v442, %v442
  %v451 = vcombine.high %v449, %v449
  %v452 = vcombine.low %v426, %v428
  %v453 = vcombine.high %v426, %v428
  %v455 = vunpack.c.l.s4 1983009808
  %v456 = vunpack.c.0.s8 %v455
  %v457 = vlaneseq
  %v458 = vshrl.u32 %v457, 7
  %v459 = vsub.s32 %v456, %v458
  %v460 = vrot.slane %v452, %v459
  %v462 = vunpack.c.l.s4 1983009808
  %v463 = vunpack.c.0.s8 %v462
  %v464 = vlaneseq
  %v465 = vshrl.u32 %v464, 7
  %v466 = vsub.s32 %v463, %v465
  %v467 = vrot.slane %v453, %v466
  %v468 = vcombine.high %v460, %v460
  %v469 = vcombine.high %v467, %v467
  %v470 = vld [vmem:[%s6] sm:$0x1]
  %v471 = vld [vmem:[%s7] sm:$0x1]
  %v472 = vld [vmem:[%s8] sm:$0xff]
  %v473 = vld [vmem:[%s8 + $0x8] sm:$0xff]
  %v474 = vld [vmem:[%s8 + $0x10] sm:$0xff]
  %v475 = vld [vmem:[%s8 + $0x18] sm:$0xff]
  %v476 = vld [vmem:[%s8 + $0x20] sm:$0xff]
  %v477 = vld [vmem:[%s8 + $0x28] sm:$0xff]
  %v478 = vld [vmem:[%s8 + $0x30] sm:$0xff]
  %v479 = vld [vmem:[%s8 + $0x38] sm:$0xff]
  %v480 = vld [vmem:[%s8 + $0x40] sm:$0xff]
  %v481 = vld [vmem:[%s8 + $0x48] sm:$0xff]
  %v482 = vld [vmem:[%s8 + $0x50] sm:$0xff]
  %v483 = vld [vmem:[%s8 + $0x58] sm:$0xff]
  %v484 = vld [vmem:[%s8 + $0x60] sm:$0xff]
  %v485 = vld [vmem:[%s8 + $0x68] sm:$0xff]
  %v486 = vld [vmem:[%s8 + $0x70] sm:$0xff]
  %v487 = vld [vmem:[%s8 + $0x78] sm:$0xff]
  %v488 = vld [vmem:[%s8 + $0x80] sm:$0xff]
  %v489 = vld [vmem:[%s8 + $0x88] sm:$0xff]
  %v490 = vld [vmem:[%s8 + $0x90] sm:$0xff]
  %v491 = vld [vmem:[%s8 + $0x98] sm:$0xff]
  %v492 = vld [vmem:[%s8 + $0xa0] sm:$0xff]
  %v493 = vld [vmem:[%s8 + $0xa8] sm:$0xff]
  %v494 = vld [vmem:[%s8 + $0xb0] sm:$0xff]
  %v495 = vld [vmem:[%s8 + $0xb8] sm:$0xff]
  %v496 = vld [vmem:[%s10] sm:$0xff]
  %v497 = vld [vmem:[%s10 + $0x8] sm:$0xff]
  %v498 = vld [vmem:[%s10 + $0x10] sm:$0xff]
  %v499 = vld [vmem:[%s10 + $0x18] sm:$0xff]
  %v500 = vld [vmem:[%s10 + $0x20] sm:$0xff]
  %v501 = vld [vmem:[%s10 + $0x28] sm:$0xff]
  %v502 = vld [vmem:[%s10 + $0x30] sm:$0xff]
  %v503 = vld [vmem:[%s10 + $0x38] sm:$0xff]
  %v504 = vld [vmem:[%s10 + $0x40] sm:$0xff]
  %v505 = vld [vmem:[%s10 + $0x48] sm:$0xff]
  %v506 = vld [vmem:[%s10 + $0x50] sm:$0xff]
  %v507 = vld [vmem:[%s10 + $0x58] sm:$0xff]
  %v508 = vld [vmem:[%s10 + $0x60] sm:$0xff]
  %v509 = vld [vmem:[%s10 + $0x68] sm:$0xff]
  %v510 = vld [vmem:[%s10 + $0x70] sm:$0xff]
  %v511 = vld [vmem:[%s10 + $0x78] sm:$0xff]
  %v513 = vsel %vm53, %v163, 0
  %515 = vmatprep.subr.mxu0 %v473
  %516 = vmatpush1.msra.mxu0 %v472
  %517 = vmatprep.subr.mxu0 %v476
  %518 = vmatpush1.msra.mxu0 %v475
  %519 = vmatprep.subr.mxu0 %v479
  %520 = vmatpush1.msra.mxu0 %v478
  %521 = vmatprep.subr.mxu0 %v482
  %522 = vmatpush1.msra.mxu0 %v481
  %523 = vmatprep.subr.mxu0 %v485
  %524 = vmatpush1.msra.mxu0 %v484
  %525 = vmatprep.subr.mxu0 %v488
  %526 = vmatpush1.msra.mxu0 %v487
  %527 = vmatprep.subr.mxu0 %v491
  %528 = vmatpush1.msra.mxu0 %v490
  %529 = vmatprep.subr.mxu0 %v494
  %530 = vmatpush1.msra.mxu0 %v493
  %531 = vmatprep.subr.mxu0 0.0
  %532 = vmatpush1.msra.mxu0 0.0
  %533 = vmatprep.subr.mxu0 0.0
  %534 = vmatpush1.msra.mxu0 0.0
  %535 = vmatprep.subr.mxu0 0.0
  %536 = vmatpush1.msra.mxu0 0.0
  %537 = vmatprep.subr.mxu0 0.0
  %538 = vmatpush1.msra.mxu0 0.0
  %539 = vmatprep.subr.mxu0 0.0
  %540 = vmatpush1.msra.mxu0 0.0
  %541 = vmatprep.subr.mxu0 0.0
  %542 = vmatpush1.msra.mxu0 0.0
  %543 = vmatprep.subr.mxu0 0.0
  %544 = vmatpush1.msra.mxu0 0.0
  %545 = vmatprep.subr.mxu0 0.0
  %546 = vmatpush1.msra.mxu0 0.0
  %547 = vmatprep.subr.mxu0 0.0
  %548 = vmatpush1.msra.mxu0 0.0
  %549 = vmatprep.subr.mxu0 0.0
  %550 = vmatpush1.msra.mxu0 0.0
  %551 = vmatprep.subr.mxu0 0.0
  %552 = vmatpush1.msra.mxu0 0.0
  %553 = vmatprep.subr.mxu0 0.0
  %554 = vmatpush1.msra.mxu0 0.0
  %555 = vmatprep.subr.mxu0 0.0
  %556 = vmatpush1.msra.mxu0 0.0
  %557 = vmatprep.subr.mxu0 0.0
  %558 = vmatpush1.msra.mxu0 0.0
  %559 = vmatprep.subr.mxu0 0.0
  %560 = vmatpush1.msra.mxu0 0.0
  %561 = vmatprep.subr.mxu0 0.0
  %562 = vmatpush1.msra.mxu0 0.0
  %563 = vmatprep.subr.mxu0 0.0
  %564 = vmatpush1.msra.mxu0 0.0
  %565 = vmatprep.subr.mxu0 0.0
  %566 = vmatpush1.msra.mxu0 0.0
  %567 = vmatprep.subr.mxu0 0.0
  %568 = vmatpush1.msra.mxu0 0.0
  %569 = vmatprep.subr.mxu0 0.0
  %570 = vmatpush1.msra.mxu0 0.0
  %571 = vmatprep.subr.mxu0 0.0
  %572 = vmatpush1.msra.mxu0 0.0
  %573 = vmatprep.subr.mxu0 0.0
  %574 = vmatpush1.msra.mxu0 0.0
  %575 = vmatprep.subr.mxu0 0.0
  %576 = vmatpush1.msra.mxu0 0.0
  %577 = vmatprep.subr.mxu0 0.0
  %578 = vmatpush1.msra.mxu0 0.0
  %579 = vmatprep.mubr.f32.mxu0 0.0
  %580 = vmatmul.mubr.f32.gmra.mrb[0].mxu0 %v513
  %v581 = vpop.f32.mrb[0].mxu0
  %v582 = vadd.f32 0.0, %v581
  %v583 = vpop.f32.mrb[0].mxu0
  %v584 = vadd.f32 0.0, %v583
  %585 = vdwg.mxu0
  %586 = vmatprep.subr.mxu0 0.0
  %587 = vmatpush1.msra.mxu0 %v474
  %588 = vmatprep.subr.mxu0 0.0
  %589 = vmatpush1.msra.mxu0 %v477
  %590 = vmatprep.subr.mxu0 0.0
  %591 = vmatpush1.msra.mxu0 %v480
  %592 = vmatprep.subr.mxu0 0.0
  %593 = vmatpush1.msra.mxu0 %v483
  %594 = vmatprep.subr.mxu0 0.0
  %595 = vmatpush1.msra.mxu0 %v486
  %596 = vmatprep.subr.mxu0 0.0
  %597 = vmatpush1.msra.mxu0 %v489
  %598 = vmatprep.subr.mxu0 0.0
  %599 = vmatpush1.msra.mxu0 %v492
  %600 = vmatprep.subr.mxu0 0.0
  %601 = vmatpush1.msra.mxu0 %v495
  %602 = vmatprep.subr.mxu0 0.0
  %603 = vmatpush1.msra.mxu0 0.0
  %604 = vmatprep.subr.mxu0 0.0
  %605 = vmatpush1.msra.mxu0 0.0
  %606 = vmatprep.subr.mxu0 0.0
  %607 = vmatpush1.msra.mxu0 0.0
  %608 = vmatprep.subr.mxu0 0.0
  %609 = vmatpush1.msra.mxu0 0.0
  %610 = vmatprep.subr.mxu0 0.0
  %611 = vmatpush1.msra.mxu0 0.0
  %612 = vmatprep.subr.mxu0 0.0
  %613 = vmatpush1.msra.mxu0 0.0
  %614 = vmatprep.subr.mxu0 0.0
  %615 = vmatpush1.msra.mxu0 0.0
  %616 = vmatprep.subr.mxu0 0.0
  %617 = vmatpush1.msra.mxu0 0.0
  %618 = vmatprep.subr.mxu0 0.0
  %619 = vmatpush1.msra.mxu0 0.0
  %620 = vmatprep.subr.mxu0 0.0
  %621 = vmatpush1.msra.mxu0 0.0
  %622 = vmatprep.subr.mxu0 0.0
  %623 = vmatpush1.msra.mxu0 0.0
  %624 = vmatprep.subr.mxu0 0.0
  %625 = vmatpush1.msra.mxu0 0.0
  %626 = vmatprep.subr.mxu0 0.0
  %627 = vmatpush1.msra.mxu0 0.0
  %628 = vmatprep.subr.mxu0 0.0
  %629 = vmatpush1.msra.mxu0 0.0
  %630 = vmatprep.subr.mxu0 0.0
  %631 = vmatpush1.msra.mxu0 0.0
  %632 = vmatprep.subr.mxu0 0.0
  %633 = vmatpush1.msra.mxu0 0.0
  %634 = vmatprep.subr.mxu0 0.0
  %635 = vmatpush1.msra.mxu0 0.0
  %636 = vmatprep.subr.mxu0 0.0
  %637 = vmatpush1.msra.mxu0 0.0
  %638 = vmatprep.subr.mxu0 0.0
  %639 = vmatpush1.msra.mxu0 0.0
  %640 = vmatprep.subr.mxu0 0.0
  %641 = vmatpush1.msra.mxu0 0.0
  %642 = vmatprep.subr.mxu0 0.0
  %643 = vmatpush1.msra.mxu0 0.0
  %644 = vmatprep.subr.mxu0 0.0
  %645 = vmatpush1.msra.mxu0 0.0
  %646 = vmatprep.subr.mxu0 0.0
  %647 = vmatpush1.msra.mxu0 0.0
  %648 = vmatprep.subr.mxu0 0.0
  %649 = vmatpush1.msra.mxu0 0.0
  %650 = vmatprep.mubr.f32.mxu0 0.0
  %651 = vmatmul.mubr.f32.gmra.mrb[0].mxu0 %v513
  %v652 = vpop.f32.mrb[0].mxu0
  %v653 = vadd.f32 0.0, %v652
  %v654 = vpop.f32.mrb[0].mxu0
  %655 = vdwg.mxu0
  %v657 = vlaneseq
  %v658 = vshrl.u32 %v657, 7
  %v659 = vsub.s32 0, %v658
  %v660 = vrot.slane %v471, %v659
  %v662 = vadd.f32 %v653, %v660
  %v665 = vunpack.c.l.s4 1966171168
  %v666 = vunpack.c.0.s8 %v665
  %v667 = vlaneseq
  %v668 = vshrl.u32 %v667, 7
  %v669 = vsub.s32 %v666, %v668
  %v670 = vrot.slane %v662, %v669
  %v671 = vcombine.high %v670, %v670
  %v673 = vunpack.c.l.s4 1966171168
  %v674 = vunpack.c.0.s8 %v673
  %v675 = vlaneseq
  %v676 = vshrl.u32 %v675, 7
  %v677 = vsub.s32 %v674, %v676
  %v678 = vrot.slane %v670, %v677
  %v680 = vunpack.c.l.s4 1966171168
  %v681 = vunpack.c.0.s8 %v680
  %v682 = vlaneseq
  %v683 = vshrl.u32 %v682, 7
  %v684 = vsub.s32 %v681, %v683
  %v685 = vrot.slane %v671, %v684
  %v686 = vlaneseq
  %v687 = vshrl.u32 %v686, 7
  %v688 = vsub.s32 0, %v687
  %v689 = vrot.slane %v678, %v688
  %v690 = vlaneseq
  %v691 = vshrl.u32 %v690, 7
  %v692 = vsub.s32 0, %v691
  %v693 = vrot.slane %v685, %v692
  %v696 = vadd.f32 %v260, %v689
  %v697 = vadd.f32 %v265, %v689
  %v698 = vadd.f32 %v270, %v693
  %v699 = vadd.f32 %v275, %v693
  %v700 = vmax.f32 %v696, 0.0
  %v701 = vmax.f32 %v697, 0.0
  %v702 = vmax.f32 %v698, 0.0
  %v703 = vmax.f32 %v699, 0.0
  %v705 = vlaneseq
  %v706 = vshrl.u32 %v705, 7
  %v707 = vsub.s32 0, %v706
  %v708 = vrot.slane %v470, %v707
  %v710 = vmul.f32 %v700, %v708
  %v711 = vmul.f32 %v701, %v708
  %v712 = vmul.f32 %v702, %v708
  %v713 = vmul.f32 %v703, %v708
  %v714 = vsel %vm348, %v710, 0.0
  %715 = vadd.xlane.f32.xlu0 %v714
  %v716 = vpop.xlane.xlu0 %715
  %v717 = vsel %vm348, %v711, 0.0
  %718 = vadd.xlane.f32.xlu0 %v717
  %v719 = vpop.xlane.xlu0 %718
  %v720 = vsel %vm348, %v712, 0.0
  %721 = vadd.xlane.f32.xlu0 %v720
  %v722 = vpop.xlane.xlu0 %721
  %v723 = vsel %vm348, %v713, 0.0
  %724 = vadd.xlane.f32.xlu0 %v723
  %v725 = vpop.xlane.xlu0 %724
  %v730 = vlaneseq
  %v731 = vand.u32 %v730, 127
  %v732 = vlaneseq
  %v733 = vshrl.u32 %v732, 7
  %v734 = vsub.s32 %v731, %v733
  %v735 = vrot.slane %v716, %v734
  %v736 = vadd.s32 %v731, 4294967288
  %v737 = vlaneseq
  %v738 = vshrl.u32 %v737, 7
  %v739 = vsub.s32 %v736, %v738
  %v740 = vrot.slane %v719, %v739
  %vm741 = vcmask 130112
  %v742 = vsel %vm741, %v740, %v735
  %v743 = vlaneseq
  %v744 = vshrl.u32 %v743, 7
  %v745 = vsub.s32 %v731, %v744
  %v746 = vrot.slane %v722, %v745
  %v747 = vlaneseq
  %v748 = vshrl.u32 %v747, 7
  %v749 = vsub.s32 %v736, %v748
  %v750 = vrot.slane %v725, %v749
  %v751 = vsel %vm741, %v750, %v746
  %v752 = vsel %vm92, %v751, %v742
  %vm754 = vcmask 123904
  %v755 = vsel %vm754, %v752, -inf
  %756 = vmax.xlane.f32.xlu0 %v755
  %v757 = vpop.xlane.xlu0 %756
  %v759 = vlaneseq
  %v760 = vshrl.u32 %v759, 7
  %v761 = vsub.s32 0, %v760
  %v762 = vrot.slane %v757, %v761
  %v763 = vlaneseq
  %v764 = vshrl.u32 %v763, 7
  %v765 = vsub.s32 1, %v764
  %v766 = vrot.slane %v757, %v765
  %v769 = vsub.f32 %v716, %v762
  %v770 = vsub.f32 %v719, %v762
  %v771 = vsub.f32 %v722, %v766
  %v772 = vsub.f32 %v725, %v766
  %v773 = vmul.f32 %v769, 1.442695
  %v774 = vpow.pop %v773
  %v775 = vmul.f32 %v770, 1.442695
  %v776 = vpow.pop %v775
  %v777 = vmul.f32 %v771, 1.442695
  %v778 = vpow.pop %v777
  %v779 = vmul.f32 %v772, 1.442695
  %v780 = vpow.pop %v779
  %785 = vset.pattern.permute.xlu0 0
  %786 = vperm.xlu0 %785, %v774
  %v787 = vpop.permute.xlu0 %786
  %788 = vset.pattern.permute.xlu0 0
  %789 = vperm.xlu0 %788, %v776
  %v790 = vpop.permute.xlu0 %789
  %791 = vset.pattern.permute.xlu0 0
  %792 = vperm.xlu0 %791, %v778
  %v793 = vpop.permute.xlu0 %792
  %794 = vset.pattern.permute.xlu0 0
  %795 = vperm.xlu0 %794, %v780
  %v796 = vpop.permute.xlu0 %795
  %v797 = vlaneseq
  %v798 = vshrl.u32 %v797, 7
  %v799 = vsub.s32 %v731, %v798
  %v800 = vrot.slane %v787, %v799
  %v801 = vlaneseq
  %v802 = vshrl.u32 %v801, 7
  %v803 = vsub.s32 %v736, %v802
  %v804 = vrot.slane %v790, %v803
  %v805 = vsel %vm741, %v804, %v800
  %v806 = vlaneseq
  %v807 = vshrl.u32 %v806, 7
  %v808 = vsub.s32 %v731, %v807
  %v809 = vrot.slane %v793, %v808
  %v810 = vlaneseq
  %v811 = vshrl.u32 %v810, 7
  %v812 = vsub.s32 %v736, %v811
  %v813 = vrot.slane %v796, %v812
  %v814 = vsel %vm741, %v813, %v809
  %v815 = vsel %vm92, %v814, %v805
  %v817 = vsel %vm754, %v815, 0.0
  %818 = vadd.xlane.f32.xlu0 %v817
  %v819 = vpop.xlane.xlu0 %818
  %v821 = vlaneseq
  %v822 = vshrl.u32 %v821, 7
  %v823 = vsub.s32 0, %v822
  %v824 = vrot.slane %v819, %v823
  %v825 = vlaneseq
  %v826 = vshrl.u32 %v825, 7
  %v827 = vsub.s32 1, %v826
  %v828 = vrot.slane %v819, %v827
  %v831 = vrcp.pop %v824
  %v832 = vmul.f32 %v774, %v831
  %v833 = vmul.f32 %v776, %v831
  %v834 = vrcp.pop %v828
  %v835 = vmul.f32 %v778, %v834
  %v836 = vmul.f32 %v780, %v834
  %838 = vset.pattern.permute.xlu0 0
  %839 = vperm.xlu0 %838, %v832
  %v840 = vpop.permute.xlu0 %839
  %843 = vset.pattern.permute.xlu0 0
  %844 = vperm.xlu0 %843, %v833
  %v845 = vpop.permute.xlu0 %844
  %848 = vset.pattern.permute.xlu0 0
  %849 = vperm.xlu0 %848, %v835
  %v850 = vpop.permute.xlu0 %849
  %853 = vset.pattern.permute.xlu0 0
  %854 = vperm.xlu0 %853, %v836
  %v855 = vpop.permute.xlu0 %854
  %v857 = vmul.f32 %v840, %v49
  %v858 = vmul.f32 %v845, %v50
  %v859 = vmul.f32 %v850, %v51
  %v860 = vmul.f32 %v855, %v52
  %v861 = vsel %vm53, %v857, 0.0
  %v862 = vsel %vm53, %v858, 0.0
  %v863 = vadd.f32 %v861, %v862
  %v864 = vrot.slane %v863, 4
  %v865 = vadd.f32 %v863, %v864
  %v866 = vrot.slane %v865, 2
  %v867 = vadd.f32 %v865, %v866
  %v868 = vrot.slane %v867, 1
  %v869 = vadd.f32 %v867, %v868
  %v870 = vsel %vm53, %v859, 0.0
  %v871 = vsel %vm53, %v860, 0.0
  %v872 = vadd.f32 %v870, %v871
  %v873 = vrot.slane %v872, 4
  %v874 = vadd.f32 %v872, %v873
  %v875 = vrot.slane %v874, 2
  %v876 = vadd.f32 %v874, %v875
  %v877 = vrot.slane %v876, 1
  %v878 = vadd.f32 %v876, %v877
  %v881 = vsel %vm92, %v878, %v869
  %v882 = vsel %vm53, %v881, 0
  %884 = vmatprep.subr.mxu0 %v497
  %885 = vmatpush1.msra.mxu0 %v496
  %886 = vmatprep.subr.mxu0 %v499
  %887 = vmatpush1.msra.mxu0 %v498
  %888 = vmatprep.subr.mxu0 %v501
  %889 = vmatpush1.msra.mxu0 %v500
  %890 = vmatprep.subr.mxu0 %v503
  %891 = vmatpush1.msra.mxu0 %v502
  %892 = vmatprep.subr.mxu0 %v505
  %893 = vmatpush1.msra.mxu0 %v504
  %894 = vmatprep.subr.mxu0 %v507
  %895 = vmatpush1.msra.mxu0 %v506
  %896 = vmatprep.subr.mxu0 %v509
  %897 = vmatpush1.msra.mxu0 %v508
  %898 = vmatprep.subr.mxu0 %v511
  %899 = vmatpush1.msra.mxu0 %v510
  %900 = vmatprep.subr.mxu0 0.0
  %901 = vmatpush1.msra.mxu0 0.0
  %902 = vmatprep.subr.mxu0 0.0
  %903 = vmatpush1.msra.mxu0 0.0
  %904 = vmatprep.subr.mxu0 0.0
  %905 = vmatpush1.msra.mxu0 0.0
  %906 = vmatprep.subr.mxu0 0.0
  %907 = vmatpush1.msra.mxu0 0.0
  %908 = vmatprep.subr.mxu0 0.0
  %909 = vmatpush1.msra.mxu0 0.0
  %910 = vmatprep.subr.mxu0 0.0
  %911 = vmatpush1.msra.mxu0 0.0
  %912 = vmatprep.subr.mxu0 0.0
  %913 = vmatpush1.msra.mxu0 0.0
  %914 = vmatprep.subr.mxu0 0.0
  %915 = vmatpush1.msra.mxu0 0.0
  %916 = vmatprep.subr.mxu0 0.0
  %917 = vmatpush1.msra.mxu0 0.0
  %918 = vmatprep.subr.mxu0 0.0
  %919 = vmatpush1.msra.mxu0 0.0
  %920 = vmatprep.subr.mxu0 0.0
  %921 = vmatpush1.msra.mxu0 0.0
  %922 = vmatprep.subr.mxu0 0.0
  %923 = vmatpush1.msra.mxu0 0.0
  %924 = vmatprep.subr.mxu0 0.0
  %925 = vmatpush1.msra.mxu0 0.0
  %926 = vmatprep.subr.mxu0 0.0
  %927 = vmatpush1.msra.mxu0 0.0
  %928 = vmatprep.subr.mxu0 0.0
  %929 = vmatpush1.msra.mxu0 0.0
  %930 = vmatprep.subr.mxu0 0.0
  %931 = vmatpush1.msra.mxu0 0.0
  %932 = vmatprep.subr.mxu0 0.0
  %933 = vmatpush1.msra.mxu0 0.0
  %934 = vmatprep.subr.mxu0 0.0
  %935 = vmatpush1.msra.mxu0 0.0
  %936 = vmatprep.subr.mxu0 0.0
  %937 = vmatpush1.msra.mxu0 0.0
  %938 = vmatprep.subr.mxu0 0.0
  %939 = vmatpush1.msra.mxu0 0.0
  %940 = vmatprep.subr.mxu0 0.0
  %941 = vmatpush1.msra.mxu0 0.0
  %942 = vmatprep.subr.mxu0 0.0
  %943 = vmatpush1.msra.mxu0 0.0
  %944 = vmatprep.subr.mxu0 0.0
  %945 = vmatpush1.msra.mxu0 0.0
  %946 = vmatprep.subr.mxu0 0.0
  %947 = vmatpush1.msra.mxu0 0.0
  %948 = vmatprep.mubr.f32.mxu0 0.0
  %949 = vmatmul.mubr.f32.gmra.mrb[0].mxu0 %v882
  %v950 = vpop.f32.mrb[0].mxu0
  %v951 = vadd.f32 0.0, %v950
  %v952 = vpop.f32.mrb[0].mxu0
  %v953 = vadd.f32 0.0, %v952
  %954 = vdwg.mxu0
  %v955 = vadd.f32 %v582, %v951
  %v956 = vadd.f32 %v584, %v953
  %v958 = vunpack.c.l.s4 1983009808
  %v959 = vunpack.c.0.s8 %v958
  %v960 = vlaneseq
  %v961 = vshrl.u32 %v960, 7
  %v962 = vsub.s32 %v959, %v961
  %v963 = vrot.slane %v442, %v962
  %v964 = vcombine.high %v963, %v963
  %v967 = vadd.f32 %v955, %v963
  %v968 = vadd.f32 %v956, %v964
  %v969 = vxor.u32 %v967, 2147483648
  %v970 = vxor.u32 %v968, 2147483648
  %v971 = vmul.f32 %v969, 1.442695
  %v972 = vpow.pop %v971
  %v973 = vmul.f32 %v970, 1.442695
  %v974 = vpow.pop %v973
  %v975 = vadd.f32 %v972, 1.0
  %v976 = vadd.f32 %v974, 1.0
  %v977 = vrcp.pop %v975
  %v978 = vmul.f32 1.0, %v977
  %v979 = vrcp.pop %v976
  %v980 = vmul.f32 1.0, %v979
  %v981 = vtanh.pop %v968
  %v982 = vmul.f32 %v978, %v163
  %984 = vrot.lane.b32.xlu0 %v981, 64
  %v985 = vpop.permute.xlu0 %984
  %v987 = vmul.f32 %v978, %v985
  %989 = vrot.lane.b32.xlu0 %v987, 64
  %v990 = vpop.permute.xlu0 %989
  %v992 = vadd.f32 %v982, %v990
  %v993 = vtanh.pop %v992
  %995 = vrot.lane.b32.xlu0 %v993, 64
  %v996 = vpop.permute.xlu0 %995
  %v998 = vmul.f32 %v980, %v996
  %vm999 = vcmask 517120
  %1000 = vst.msk [vmem:[#allocation2] sm:$0x3] %vm999, %v998
  %v1001 = vlaneseq
  %v1002 = vshrl.u32 %v1001, 7
  %v1003 = vsub.s32 %v731, %v1002
  %v1004 = vrot.slane %v840, %v1003
  %v1005 = vlaneseq
  %v1006 = vshrl.u32 %v1005, 7
  %v1007 = vsub.s32 %v736, %v1006
  %v1008 = vrot.slane %v845, %v1007
  %v1009 = vsel %vm741, %v1008, %v1004
  %v1010 = vlaneseq
  %v1011 = vshrl.u32 %v1010, 7
  %v1012 = vsub.s32 %v731, %v1011
  %v1013 = vrot.slane %v850, %v1012
  %v1014 = vlaneseq
  %v1015 = vshrl.u32 %v1014, 7
  %v1016 = vsub.s32 %v736, %v1015
  %v1017 = vrot.slane %v855, %v1016
  %v1018 = vsel %vm741, %v1017, %v1013
  %v1019 = vsel %vm92, %v1018, %v1009
  %1021 = vst.msk [vmem:[%s15] sm:$0x3] %vm754, %v1019
  %v1023 = vsel %vm53, %v998, 0
  %1025 = vmatprep.subr.mxu0 %v473
  %1026 = vmatpush1.msra.mxu0 %v472
  %1027 = vmatprep.subr.mxu0 %v476
  %1028 = vmatpush1.msra.mxu0 %v475
  %1029 = vmatprep.subr.mxu0 %v479
  %1030 = vmatpush1.msra.mxu0 %v478
  %1031 = vmatprep.subr.mxu0 %v482
  %1032 = vmatpush1.msra.mxu0 %v481
  %1033 = vmatprep.subr.mxu0 %v485
  %1034 = vmatpush1.msra.mxu0 %v484
  %1035 = vmatprep.subr.mxu0 %v488
  %1036 = vmatpush1.msra.mxu0 %v487
  %1037 = vmatprep.subr.mxu0 %v491
  %1038 = vmatpush1.msra.mxu0 %v490
  %1039 = vmatprep.subr.mxu0 %v494
  %1040 = vmatpush1.msra.mxu0 %v493
  %1041 = vmatprep.subr.mxu0 0.0
  %1042 = vmatpush1.msra.mxu0 0.0
  %1043 = vmatprep.subr.mxu0 0.0
  %1044 = vmatpush1.msra.mxu0 0.0
  %1045 = vmatprep.subr.mxu0 0.0
  %1046 = vmatpush1.msra.mxu0 0.0
  %1047 = vmatprep.subr.mxu0 0.0
  %1048 = vmatpush1.msra.mxu0 0.0
  %1049 = vmatprep.subr.mxu0 0.0
  %1050 = vmatpush1.msra.mxu0 0.0
  %1051 = vmatprep.subr.mxu0 0.0
  %1052 = vmatpush1.msra.mxu0 0.0
  %1053 = vmatprep.subr.mxu0 0.0
  %1054 = vmatpush1.msra.mxu0 0.0
  %1055 = vmatprep.subr.mxu0 0.0
  %1056 = vmatpush1.msra.mxu0 0.0
  %1057 = vmatprep.subr.mxu0 0.0
  %1058 = vmatpush1.msra.mxu0 0.0
  %1059 = vmatprep.subr.mxu0 0.0
  %1060 = vmatpush1.msra.mxu0 0.0
  %1061 = vmatprep.subr.mxu0 0.0
  %1062 = vmatpush1.msra.mxu0 0.0
  %1063 = vmatprep.subr.mxu0 0.0
  %1064 = vmatpush1.msra.mxu0 0.0
  %1065 = vmatprep.subr.mxu0 0.0
  %1066 = vmatpush1.msra.mxu0 0.0
  %1067 = vmatprep.subr.mxu0 0.0
  %1068 = vmatpush1.msra.mxu0 0.0
  %1069 = vmatprep.subr.mxu0 0.0
  %1070 = vmatpush1.msra.mxu0 0.0
  %1071 = vmatprep.subr.mxu0 0.0
  %1072 = vmatpush1.msra.mxu0 0.0
  %1073 = vmatprep.subr.mxu0 0.0
  %1074 = vmatpush1.msra.mxu0 0.0
  %1075 = vmatprep.subr.mxu0 0.0
  %1076 = vmatpush1.msra.mxu0 0.0
  %1077 = vmatprep.subr.mxu0 0.0
  %1078 = vmatpush1.msra.mxu0 0.0
  %1079 = vmatprep.subr.mxu0 0.0
  %1080 = vmatpush1.msra.mxu0 0.0
  %1081 = vmatprep.subr.mxu0 0.0
  %1082 = vmatpush1.msra.mxu0 0.0
  %1083 = vmatprep.subr.mxu0 0.0
  %1084 = vmatpush1.msra.mxu0 0.0
  %1085 = vmatprep.subr.mxu0 0.0
  %1086 = vmatpush1.msra.mxu0 0.0
  %1087 = vmatprep.subr.mxu0 0.0
  %1088 = vmatpush1.msra.mxu0 0.0
  %1089 = vmatprep.mubr.f32.mxu0 0.0
  %1090 = vmatmul.mubr.f32.gmra.mrb[0].mxu0 %v1023
  %v1091 = vpop.f32.mrb[0].mxu0
  %v1092 = vadd.f32 0.0, %v1091
  %v1093 = vpop.f32.mrb[0].mxu0
  %v1094 = vadd.f32 0.0, %v1093
  %1095 = vdwg.mxu0
  %1096 = vmatprep.subr.mxu0 0.0
  %1097 = vmatpush1.msra.mxu0 %v474
  %1098 = vmatprep.subr.mxu0 0.0
  %1099 = vmatpush1.msra.mxu0 %v477
  %1100 = vmatprep.subr.mxu0 0.0
  %1101 = vmatpush1.msra.mxu0 %v480
  %1102 = vmatprep.subr.mxu0 0.0
  %1103 = vmatpush1.msra.mxu0 %v483
  %1104 = vmatprep.subr.mxu0 0.0
  %1105 = vmatpush1.msra.mxu0 %v486
  %1106 = vmatprep.subr.mxu0 0.0
  %1107 = vmatpush1.msra.mxu0 %v489
  %1108 = vmatprep.subr.mxu0 0.0
  %1109 = vmatpush1.msra.mxu0 %v492
  %1110 = vmatprep.subr.mxu0 0.0
  %1111 = vmatpush1.msra.mxu0 %v495
  %1112 = vmatprep.subr.mxu0 0.0
  %1113 = vmatpush1.msra.mxu0 0.0
  %1114 = vmatprep.subr.mxu0 0.0
  %1115 = vmatpush1.msra.mxu0 0.0
  %1116 = vmatprep.subr.mxu0 0.0
  %1117 = vmatpush1.msra.mxu0 0.0
  %1118 = vmatprep.subr.mxu0 0.0
  %1119 = vmatpush1.msra.mxu0 0.0
  %1120 = vmatprep.subr.mxu0 0.0
  %1121 = vmatpush1.msra.mxu0 0.0
  %1122 = vmatprep.subr.mxu0 0.0
  %1123 = vmatpush1.msra.mxu0 0.0
  %1124 = vmatprep.subr.mxu0 0.0
  %1125 = vmatpush1.msra.mxu0 0.0
  %1126 = vmatprep.subr.mxu0 0.0
  %1127 = vmatpush1.msra.mxu0 0.0
  %1128 = vmatprep.subr.mxu0 0.0
  %1129 = vmatpush1.msra.mxu0 0.0
  %1130 = vmatprep.subr.mxu0 0.0
  %1131 = vmatpush1.msra.mxu0 0.0
  %1132 = vmatprep.subr.mxu0 0.0
  %1133 = vmatpush1.msra.mxu0 0.0
  %1134 = vmatprep.subr.mxu0 0.0
  %1135 = vmatpush1.msra.mxu0 0.0
  %1136 = vmatprep.subr.mxu0 0.0
  %1137 = vmatpush1.msra.mxu0 0.0
  %1138 = vmatprep.subr.mxu0 0.0
  %1139 = vmatpush1.msra.mxu0 0.0
  %1140 = vmatprep.subr.mxu0 0.0
  %1141 = vmatpush1.msra.mxu0 0.0
  %1142 = vmatprep.subr.mxu0 0.0
  %1143 = vmatpush1.msra.mxu0 0.0
  %1144 = vmatprep.subr.mxu0 0.0
  %1145 = vmatpush1.msra.mxu0 0.0
  %1146 = vmatprep.subr.mxu0 0.0
  %1147 = vmatpush1.msra.mxu0 0.0
  %1148 = vmatprep.subr.mxu0 0.0
  %1149 = vmatpush1.msra.mxu0 0.0
  %1150 = vmatprep.subr.mxu0 0.0
  %1151 = vmatpush1.msra.mxu0 0.0
  %1152 = vmatprep.subr.mxu0 0.0
  %1153 = vmatpush1.msra.mxu0 0.0
  %1154 = vmatprep.subr.mxu0 0.0
  %1155 = vmatpush1.msra.mxu0 0.0
  %1156 = vmatprep.subr.mxu0 0.0
  %1157 = vmatpush1.msra.mxu0 0.0
  %1158 = vmatprep.subr.mxu0 0.0
  %1159 = vmatpush1.msra.mxu0 0.0
  %1160 = vmatprep.mubr.f32.mxu0 0.0
  %1161 = vmatmul.mubr.f32.gmra.mrb[0].mxu0 %v1023
  %v1162 = vpop.f32.mrb[0].mxu0
  %v1163 = vadd.f32 0.0, %v1162
  %v1164 = vpop.f32.mrb[0].mxu0
  %1165 = vdwg.mxu0
  %v1166 = vadd.f32 %v1163, %v660
  %v1169 = vunpack.c.l.s4 1966171168
  %v1170 = vunpack.c.0.s8 %v1169
  %v1171 = vlaneseq
  %v1172 = vshrl.u32 %v1171, 7
  %v1173 = vsub.s32 %v1170, %v1172
  %v1174 = vrot.slane %v1166, %v1173
  %v1175 = vcombine.high %v1174, %v1174
  %v1177 = vunpack.c.l.s4 1966171168
  %v1178 = vunpack.c.0.s8 %v1177
  %v1179 = vlaneseq
  %v1180 = vshrl.u32 %v1179, 7
  %v1181 = vsub.s32 %v1178, %v1180
  %v1182 = vrot.slane %v1174, %v1181
  %v1184 = vunpack.c.l.s4 1966171168
  %v1185 = vunpack.c.0.s8 %v1184
  %v1186 = vlaneseq
  %v1187 = vshrl.u32 %v1186, 7
  %v1188 = vsub.s32 %v1185, %v1187
  %v1189 = vrot.slane %v1175, %v1188
  %v1190 = vlaneseq
  %v1191 = vshrl.u32 %v1190, 7
  %v1192 = vsub.s32 0, %v1191
  %v1193 = vrot.slane %v1182, %v1192
  %v1194 = vlaneseq
  %v1195 = vshrl.u32 %v1194, 7
  %v1196 = vsub.s32 0, %v1195
  %v1197 = vrot.slane %v1189, %v1196
  %v1200 = vadd.f32 %v260, %v1193
  %v1201 = vadd.f32 %v265, %v1193
  %v1202 = vadd.f32 %v270, %v1197
  %v1203 = vadd.f32 %v275, %v1197
  %v1204 = vmax.f32 %v1200, 0.0
  %v1205 = vmax.f32 %v1201, 0.0
  %v1206 = vmax.f32 %v1202, 0.0
  %v1207 = vmax.f32 %v1203, 0.0
  %v1208 = vmul.f32 %v1204, %v708
  %v1209 = vmul.f32 %v1205, %v708
  %v1210 = vmul.f32 %v1206, %v708
  %v1211 = vmul.f32 %v1207, %v708
  %v1212 = vsel %vm348, %v1208, 0.0
  %1213 = vadd.xlane.f32.xlu0 %v1212
  %v1214 = vpop.xlane.xlu0 %1213
  %v1215 = vsel %vm348, %v1209, 0.0
  %1216 = vadd.xlane.f32.xlu0 %v1215
  %v1217 = vpop.xlane.xlu0 %1216
  %v1218 = vsel %vm348, %v1210, 0.0
  %1219 = vadd.xlane.f32.xlu0 %v1218
  %v1220 = vpop.xlane.xlu0 %1219
  %v1221 = vsel %vm348, %v1211, 0.0
  %1222 = vadd.xlane.f32.xlu0 %v1221
  %v1223 = vpop.xlane.xlu0 %1222
  %v1228 = vlaneseq
  %v1229 = vshrl.u32 %v1228, 7
  %v1230 = vsub.s32 %v731, %v1229
  %v1231 = vrot.slane %v1214, %v1230
  %v1232 = vlaneseq
  %v1233 = vshrl.u32 %v1232, 7
  %v1234 = vsub.s32 %v736, %v1233
  %v1235 = vrot.slane %v1217, %v1234
  %v1236 = vsel %vm741, %v1235, %v1231
  %v1237 = vlaneseq
  %v1238 = vshrl.u32 %v1237, 7
  %v1239 = vsub.s32 %v731, %v1238
  %v1240 = vrot.slane %v1220, %v1239
  %v1241 = vlaneseq
  %v1242 = vshrl.u32 %v1241, 7
  %v1243 = vsub.s32 %v736, %v1242
  %v1244 = vrot.slane %v1223, %v1243
  %v1245 = vsel %vm741, %v1244, %v1240
  %v1246 = vsel %vm92, %v1245, %v1236
  %v1248 = vsel %vm754, %v1246, -inf
  %1249 = vmax.xlane.f32.xlu0 %v1248
  %v1250 = vpop.xlane.xlu0 %1249
  %v1252 = vlaneseq
  %v1253 = vshrl.u32 %v1252, 7
  %v1254 = vsub.s32 0, %v1253
  %v1255 = vrot.slane %v1250, %v1254
  %v1256 = vlaneseq
  %v1257 = vshrl.u32 %v1256, 7
  %v1258 = vsub.s32 1, %v1257
  %v1259 = vrot.slane %v1250, %v1258
  %v1262 = vsub.f32 %v1214, %v1255
  %v1263 = vsub.f32 %v1217, %v1255
  %v1264 = vsub.f32 %v1220, %v1259
  %v1265 = vsub.f32 %v1223, %v1259
  %v1266 = vmul.f32 %v1262, 1.442695
  %v1267 = vpow.pop %v1266
  %v1268 = vmul.f32 %v1263, 1.442695
  %v1269 = vpow.pop %v1268
  %v1270 = vmul.f32 %v1264, 1.442695
  %v1271 = vpow.pop %v1270
  %v1272 = vmul.f32 %v1265, 1.442695
  %v1273 = vpow.pop %v1272
  %1278 = vset.pattern.permute.xlu0 0
  %1279 = vperm.xlu0 %1278, %v1267
  %v1280 = vpop.permute.xlu0 %1279
  %1281 = vset.pattern.permute.xlu0 0
  %1282 = vperm.xlu0 %1281, %v1269
  %v1283 = vpop.permute.xlu0 %1282
  %1284 = vset.pattern.permute.xlu0 0
  %1285 = vperm.xlu0 %1284, %v1271
  %v1286 = vpop.permute.xlu0 %1285
  %1287 = vset.pattern.permute.xlu0 0
  %1288 = vperm.xlu0 %1287, %v1273
  %v1289 = vpop.permute.xlu0 %1288
  %v1290 = vlaneseq
  %v1291 = vshrl.u32 %v1290, 7
  %v1292 = vsub.s32 %v731, %v1291
  %v1293 = vrot.slane %v1280, %v1292
  %v1294 = vlaneseq
  %v1295 = vshrl.u32 %v1294, 7
  %v1296 = vsub.s32 %v736, %v1295
  %v1297 = vrot.slane %v1283, %v1296
  %v1298 = vsel %vm741, %v1297, %v1293
  %v1299 = vlaneseq
  %v1300 = vshrl.u32 %v1299, 7
  %v1301 = vsub.s32 %v731, %v1300
  %v1302 = vrot.slane %v1286, %v1301
  %v1303 = vlaneseq
  %v1304 = vshrl.u32 %v1303, 7
  %v1305 = vsub.s32 %v736, %v1304
  %v1306 = vrot.slane %v1289, %v1305
  %v1307 = vsel %vm741, %v1306, %v1302
  %v1308 = vsel %vm92, %v1307, %v1298
  %v1310 = vsel %vm754, %v1308, 0.0
  %1311 = vadd.xlane.f32.xlu0 %v1310
  %v1312 = vpop.xlane.xlu0 %1311
  %v1314 = vlaneseq
  %v1315 = vshrl.u32 %v1314, 7
  %v1316 = vsub.s32 0, %v1315
  %v1317 = vrot.slane %v1312, %v1316
  %v1318 = vlaneseq
  %v1319 = vshrl.u32 %v1318, 7
  %v1320 = vsub.s32 1, %v1319
  %v1321 = vrot.slane %v1312, %v1320
  %v1324 = vrcp.pop %v1317
  %v1325 = vmul.f32 %v1267, %v1324
  %v1326 = vmul.f32 %v1269, %v1324
  %v1327 = vrcp.pop %v1321
  %v1328 = vmul.f32 %v1271, %v1327
  %v1329 = vmul.f32 %v1273, %v1327
  %1331 = vset.pattern.permute.xlu0 0
  %1332 = vperm.xlu0 %1331, %v1325
  %v1333 = vpop.permute.xlu0 %1332
  %1336 = vset.pattern.permute.xlu0 0
  %1337 = vperm.xlu0 %1336, %v1326
  %v1338 = vpop.permute.xlu0 %1337
  %1341 = vset.pattern.permute.xlu0 0
  %1342 = vperm.xlu0 %1341, %v1328
  %v1343 = vpop.permute.xlu0 %1342
  %1346 = vset.pattern.permute.xlu0 0
  %1347 = vperm.xlu0 %1346, %v1329
  %v1348 = vpop.permute.xlu0 %1347
  %v1350 = vmul.f32 %v1333, %v49
  %v1351 = vmul.f32 %v1338, %v50
  %v1352 = vmul.f32 %v1343, %v51
  %v1353 = vmul.f32 %v1348, %v52
  %v1354 = vsel %vm53, %v1350, 0.0
  %v1355 = vsel %vm53, %v1351, 0.0
  %v1356 = vadd.f32 %v1354, %v1355
  %v1357 = vrot.slane %v1356, 4
  %v1358 = vadd.f32 %v1356, %v1357
  %v1359 = vrot.slane %v1358, 2
  %v1360 = vadd.f32 %v1358, %v1359
  %v1361 = vrot.slane %v1360, 1
  %v1362 = vadd.f32 %v1360, %v1361
  %v1363 = vsel %vm53, %v1352, 0.0
  %v1364 = vsel %vm53, %v1353, 0.0
  %v1365 = vadd.f32 %v1363, %v1364
  %v1366 = vrot.slane %v1365, 4
  %v1367 = vadd.f32 %v1365, %v1366
  %v1368 = vrot.slane %v1367, 2
  %v1369 = vadd.f32 %v1367, %v1368
  %v1370 = vrot.slane %v1369, 1
  %v1371 = vadd.f32 %v1369, %v1370
  %v1374 = vsel %vm92, %v1371, %v1362
  %v1375 = vsel %vm53, %v1374, 0
  %1377 = vmatprep.subr.mxu0 %v497
  %1378 = vmatpush1.msra.mxu0 %v496
  %1379 = vmatprep.subr.mxu0 %v499
  %1380 = vmatpush1.msra.mxu0 %v498
  %1381 = vmatprep.subr.mxu0 %v501
  %1382 = vmatpush1.msra.mxu0 %v500
  %1383 = vmatprep.subr.mxu0 %v503
  %1384 = vmatpush1.msra.mxu0 %v502
  %1385 = vmatprep.subr.mxu0 %v505
  %1386 = vmatpush1.msra.mxu0 %v504
  %1387 = vmatprep.subr.mxu0 %v507
  %1388 = vmatpush1.msra.mxu0 %v506
  %1389 = vmatprep.subr.mxu0 %v509
  %1390 = vmatpush1.msra.mxu0 %v508
  %1391 = vmatprep.subr.mxu0 %v511
  %1392 = vmatpush1.msra.mxu0 %v510
  %1393 = vmatprep.subr.mxu0 0.0
  %1394 = vmatpush1.msra.mxu0 0.0
  %1395 = vmatprep.subr.mxu0 0.0
  %1396 = vmatpush1.msra.mxu0 0.0
  %1397 = vmatprep.subr.mxu0 0.0
  %1398 = vmatpush1.msra.mxu0 0.0
  %1399 = vmatprep.subr.mxu0 0.0
  %1400 = vmatpush1.msra.mxu0 0.0
  %1401 = vmatprep.subr.mxu0 0.0
  %1402 = vmatpush1.msra.mxu0 0.0
  %1403 = vmatprep.subr.mxu0 0.0
  %1404 = vmatpush1.msra.mxu0 0.0
  %1405 = vmatprep.subr.mxu0 0.0
  %1406 = vmatpush1.msra.mxu0 0.0
  %1407 = vmatprep.subr.mxu0 0.0
  %1408 = vmatpush1.msra.mxu0 0.0
  %1409 = vmatprep.subr.mxu0 0.0
  %1410 = vmatpush1.msra.mxu0 0.0
  %1411 = vmatprep.subr.mxu0 0.0
  %1412 = vmatpush1.msra.mxu0 0.0
  %1413 = vmatprep.subr.mxu0 0.0
  %1414 = vmatpush1.msra.mxu0 0.0
  %1415 = vmatprep.subr.mxu0 0.0
  %1416 = vmatpush1.msra.mxu0 0.0
  %1417 = vmatprep.subr.mxu0 0.0
  %1418 = vmatpush1.msra.mxu0 0.0
  %1419 = vmatprep.subr.mxu0 0.0
  %1420 = vmatpush1.msra.mxu0 0.0
  %1421 = vmatprep.subr.mxu0 0.0
  %1422 = vmatpush1.msra.mxu0 0.0
  %1423 = vmatprep.subr.mxu0 0.0
  %1424 = vmatpush1.msra.mxu0 0.0
  %1425 = vmatprep.subr.mxu0 0.0
  %1426 = vmatpush1.msra.mxu0 0.0
  %1427 = vmatprep.subr.mxu0 0.0
  %1428 = vmatpush1.msra.mxu0 0.0
  %1429 = vmatprep.subr.mxu0 0.0
  %1430 = vmatpush1.msra.mxu0 0.0
  %1431 = vmatprep.subr.mxu0 0.0
  %1432 = vmatpush1.msra.mxu0 0.0
  %1433 = vmatprep.subr.mxu0 0.0
  %1434 = vmatpush1.msra.mxu0 0.0
  %1435 = vmatprep.subr.mxu0 0.0
  %1436 = vmatpush1.msra.mxu0 0.0
  %1437 = vmatprep.subr.mxu0 0.0
  %1438 = vmatpush1.msra.mxu0 0.0
  %1439 = vmatprep.subr.mxu0 0.0
  %1440 = vmatpush1.msra.mxu0 0.0
  %1441 = vmatprep.mubr.f32.mxu0 0.0
  %1442 = vmatmul.mubr.f32.gmra.mrb[0].mxu0 %v1375
  %v1443 = vpop.f32.mrb[0].mxu0
  %v1444 = vadd.f32 0.0, %v1443
  %v1445 = vpop.f32.mrb[0].mxu0
  %v1446 = vadd.f32 0.0, %v1445
  %1447 = vdwg.mxu0
  %v1448 = vadd.f32 %v1092, %v1444
  %v1449 = vadd.f32 %v1094, %v1446
  %v1451 = vunpack.c.l.s4 1983009808
  %v1452 = vunpack.c.0.s8 %v1451
  %v1453 = vlaneseq
  %v1454 = vshrl.u32 %v1453, 7
  %v1455 = vsub.s32 %v1452, %v1454
  %v1456 = vrot.slane %v450, %v1455
  %v1457 = vcombine.high %v1456, %v1456
  %v1460 = vadd.f32 %v1448, %v1456
  %v1461 = vadd.f32 %v1449, %v1457
  %v1462 = vxor.u32 %v1460, 2147483648
  %v1463 = vxor.u32 %v1461, 2147483648
  %v1464 = vmul.f32 %v1462, 1.442695
  %v1465 = vpow.pop %v1464
  %v1466 = vmul.f32 %v1463, 1.442695
  %v1467 = vpow.pop %v1466
  %v1468 = vadd.f32 %v1465, 1.0
  %v1469 = vadd.f32 %v1467, 1.0
  %v1470 = vrcp.pop %v1468
  %v1471 = vmul.f32 1.0, %v1470
  %v1472 = vrcp.pop %v1469
  %v1473 = vmul.f32 1.0, %v1472
  %v1474 = vtanh.pop %v1461
  %v1475 = vmul.f32 %v1471, %v992
  %1477 = vrot.lane.b32.xlu0 %v1474, 64
  %v1478 = vpop.permute.xlu0 %1477
  %v1480 = vmul.f32 %v1471, %v1478
  %1482 = vrot.lane.b32.xlu0 %v1480, 64
  %v1483 = vpop.permute.xlu0 %1482
  %v1485 = vadd.f32 %v1475, %v1483
  %v1486 = vtanh.pop %v1485
  %1488 = vrot.lane.b32.xlu0 %v1486, 64
  %v1489 = vpop.permute.xlu0 %1488
  %v1491 = vmul.f32 %v1473, %v1489
  %s1492 = scalar_lea.vmem [#allocation2], 2
  %1493 = vst.msk [vmem:[%s1492] sm:$0x3] %vm999, %v1491
  %v1494 = vlaneseq
  %v1495 = vshrl.u32 %v1494, 7
  %v1496 = vsub.s32 %v731, %v1495
  %v1497 = vrot.slane %v1333, %v1496
  %v1498 = vlaneseq
  %v1499 = vshrl.u32 %v1498, 7
  %v1500 = vsub.s32 %v736, %v1499
  %v1501 = vrot.slane %v1338, %v1500
  %v1502 = vsel %vm741, %v1501, %v1497
  %v1503 = vlaneseq
  %v1504 = vshrl.u32 %v1503, 7
  %v1505 = vsub.s32 %v731, %v1504
  %v1506 = vrot.slane %v1343, %v1505
  %v1507 = vlaneseq
  %v1508 = vshrl.u32 %v1507, 7
  %v1509 = vsub.s32 %v736, %v1508
  %v1510 = vrot.slane %v1348, %v1509
  %v1511 = vsel %vm741, %v1510, %v1506
  %v1512 = vsel %vm92, %v1511, %v1502
  %s1514 = scalar_lea.vmem %s15, 2
  %1515 = vst.msk [vmem:[%s1514] sm:$0x3] %vm754, %v1512
  %v1517 = vsel %vm53, %v1491, 0
  %1519 = vmatprep.subr.mxu0 %v473
  %1520 = vmatpush1.msra.mxu0 %v472
  %1521 = vmatprep.subr.mxu0 %v476
  %1522 = vmatpush1.msra.mxu0 %v475
  %1523 = vmatprep.subr.mxu0 %v479
  %1524 = vmatpush1.msra.mxu0 %v478
  %1525 = vmatprep.subr.mxu0 %v482
  %1526 = vmatpush1.msra.mxu0 %v481
  %1527 = vmatprep.subr.mxu0 %v485
  %1528 = vmatpush1.msra.mxu0 %v484
  %1529 = vmatprep.subr.mxu0 %v488
  %1530 = vmatpush1.msra.mxu0 %v487
  %1531 = vmatprep.subr.mxu0 %v491
  %1532 = vmatpush1.msra.mxu0 %v490
  %1533 = vmatprep.subr.mxu0 %v494
  %1534 = vmatpush1.msra.mxu0 %v493
  %1535 = vmatprep.subr.mxu0 0.0
  %1536 = vmatpush1.msra.mxu0 0.0
  %1537 = vmatprep.subr.mxu0 0.0
  %1538 = vmatpush1.msra.mxu0 0.0
  %1539 = vmatprep.subr.mxu0 0.0
  %1540 = vmatpush1.msra.mxu0 0.0
  %1541 = vmatprep.subr.mxu0 0.0
  %1542 = vmatpush1.msra.mxu0 0.0
  %1543 = vmatprep.subr.mxu0 0.0
  %1544 = vmatpush1.msra.mxu0 0.0
  %1545 = vmatprep.subr.mxu0 0.0
  %1546 = vmatpush1.msra.mxu0 0.0
  %1547 = vmatprep.subr.mxu0 0.0
  %1548 = vmatpush1.msra.mxu0 0.0
  %1549 = vmatprep.subr.mxu0 0.0
  %1550 = vmatpush1.msra.mxu0 0.0
  %1551 = vmatprep.subr.mxu0 0.0
  %1552 = vmatpush1.msra.mxu0 0.0
  %1553 = vmatprep.subr.mxu0 0.0
  %1554 = vmatpush1.msra.mxu0 0.0
  %1555 = vmatprep.subr.mxu0 0.0
  %1556 = vmatpush1.msra.mxu0 0.0
  %1557 = vmatprep.subr.mxu0 0.0
  %1558 = vmatpush1.msra.mxu0 0.0
  %1559 = vmatprep.subr.mxu0 0.0
  %1560 = vmatpush1.msra.mxu0 0.0
  %1561 = vmatprep.subr.mxu0 0.0
  %1562 = vmatpush1.msra.mxu0 0.0
  %1563 = vmatprep.subr.mxu0 0.0
  %1564 = vmatpush1.msra.mxu0 0.0
  %1565 = vmatprep.subr.mxu0 0.0
  %1566 = vmatpush1.msra.mxu0 0.0
  %1567 = vmatprep.subr.mxu0 0.0
  %1568 = vmatpush1.msra.mxu0 0.0
  %1569 = vmatprep.subr.mxu0 0.0
  %1570 = vmatpush1.msra.mxu0 0.0
  %1571 = vmatprep.subr.mxu0 0.0
  %1572 = vmatpush1.msra.mxu0 0.0
  %1573 = vmatprep.subr.mxu0 0.0
  %1574 = vmatpush1.msra.mxu0 0.0
  %1575 = vmatprep.subr.mxu0 0.0
  %1576 = vmatpush1.msra.mxu0 0.0
  %1577 = vmatprep.subr.mxu0 0.0
  %1578 = vmatpush1.msra.mxu0 0.0
  %1579 = vmatprep.subr.mxu0 0.0
  %1580 = vmatpush1.msra.mxu0 0.0
  %1581 = vmatprep.subr.mxu0 0.0
  %1582 = vmatpush1.msra.mxu0 0.0
  %1583 = vmatprep.mubr.f32.mxu0 0.0
  %1584 = vmatmul.mubr.f32.gmra.mrb[0].mxu0 %v1517
  %v1585 = vpop.f32.mrb[0].mxu0
  %v1586 = vadd.f32 0.0, %v1585
  %v1587 = vpop.f32.mrb[0].mxu0
  %v1588 = vadd.f32 0.0, %v1587
  %1589 = vdwg.mxu0
  %1590 = vmatprep.subr.mxu0 0.0
  %1591 = vmatpush1.msra.mxu0 %v474
  %1592 = vmatprep.subr.mxu0 0.0
  %1593 = vmatpush1.msra.mxu0 %v477
  %1594 = vmatprep.subr.mxu0 0.0
  %1595 = vmatpush1.msra.mxu0 %v480
  %1596 = vmatprep.subr.mxu0 0.0
  %1597 = vmatpush1.msra.mxu0 %v483
  %1598 = vmatprep.subr.mxu0 0.0
  %1599 = vmatpush1.msra.mxu0 %v486
  %1600 = vmatprep.subr.mxu0 0.0
  %1601 = vmatpush1.msra.mxu0 %v489
  %1602 = vmatprep.subr.mxu0 0.0
  %1603 = vmatpush1.msra.mxu0 %v492
  %1604 = vmatprep.subr.mxu0 0.0
  %1605 = vmatpush1.msra.mxu0 %v495
  %1606 = vmatprep.subr.mxu0 0.0
  %1607 = vmatpush1.msra.mxu0 0.0
  %1608 = vmatprep.subr.mxu0 0.0
  %1609 = vmatpush1.msra.mxu0 0.0
  %1610 = vmatprep.subr.mxu0 0.0
  %1611 = vmatpush1.msra.mxu0 0.0
  %1612 = vmatprep.subr.mxu0 0.0
  %1613 = vmatpush1.msra.mxu0 0.0
  %1614 = vmatprep.subr.mxu0 0.0
  %1615 = vmatpush1.msra.mxu0 0.0
  %1616 = vmatprep.subr.mxu0 0.0
  %1617 = vmatpush1.msra.mxu0 0.0
  %1618 = vmatprep.subr.mxu0 0.0
  %1619 = vmatpush1.msra.mxu0 0.0
  %1620 = vmatprep.subr.mxu0 0.0
  %1621 = vmatpush1.msra.mxu0 0.0
  %1622 = vmatprep.subr.mxu0 0.0
  %1623 = vmatpush1.msra.mxu0 0.0
  %1624 = vmatprep.subr.mxu0 0.0
  %1625 = vmatpush1.msra.mxu0 0.0
  %1626 = vmatprep.subr.mxu0 0.0
  %1627 = vmatpush1.msra.mxu0 0.0
  %1628 = vmatprep.subr.mxu0 0.0
  %1629 = vmatpush1.msra.mxu0 0.0
  %1630 = vmatprep.subr.mxu0 0.0
  %1631 = vmatpush1.msra.mxu0 0.0
  %1632 = vmatprep.subr.mxu0 0.0
  %1633 = vmatpush1.msra.mxu0 0.0
  %1634 = vmatprep.subr.mxu0 0.0
  %1635 = vmatpush1.msra.mxu0 0.0
  %1636 = vmatprep.subr.mxu0 0.0
  %1637 = vmatpush1.msra.mxu0 0.0
  %1638 = vmatprep.subr.mxu0 0.0
  %1639 = vmatpush1.msra.mxu0 0.0
  %1640 = vmatprep.subr.mxu0 0.0
  %1641 = vmatpush1.msra.mxu0 0.0
  %1642 = vmatprep.subr.mxu0 0.0
  %1643 = vmatpush1.msra.mxu0 0.0
  %1644 = vmatprep.subr.mxu0 0.0
  %1645 = vmatpush1.msra.mxu0 0.0
  %1646 = vmatprep.subr.mxu0 0.0
  %1647 = vmatpush1.msra.mxu0 0.0
  %1648 = vmatprep.subr.mxu0 0.0
  %1649 = vmatpush1.msra.mxu0 0.0
  %1650 = vmatprep.subr.mxu0 0.0
  %1651 = vmatpush1.msra.mxu0 0.0
  %1652 = vmatprep.subr.mxu0 0.0
  %1653 = vmatpush1.msra.mxu0 0.0
  %1654 = vmatprep.mubr.f32.mxu0 0.0
  %1655 = vmatmul.mubr.f32.gmra.mrb[0].mxu0 %v1517
  %v1656 = vpop.f32.mrb[0].mxu0
  %v1657 = vadd.f32 0.0, %v1656
  %v1658 = vpop.f32.mrb[0].mxu0
  %1659 = vdwg.mxu0
  %v1660 = vadd.f32 %v1657, %v660
  %v1663 = vunpack.c.l.s4 1966171168
  %v1664 = vunpack.c.0.s8 %v1663
  %v1665 = vlaneseq
  %v1666 = vshrl.u32 %v1665, 7
  %v1667 = vsub.s32 %v1664, %v1666
  %v1668 = vrot.slane %v1660, %v1667
  %v1669 = vcombine.high %v1668, %v1668
  %v1671 = vunpack.c.l.s4 1966171168
  %v1672 = vunpack.c.0.s8 %v1671
  %v1673 = vlaneseq
  %v1674 = vshrl.u32 %v1673, 7
  %v1675 = vsub.s32 %v1672, %v1674
  %v1676 = vrot.slane %v1668, %v1675
  %v1678 = vunpack.c.l.s4 1966171168
  %v1679 = vunpack.c.0.s8 %v1678
  %v1680 = vlaneseq
  %v1681 = vshrl.u32 %v1680, 7
  %v1682 = vsub.s32 %v1679, %v1681
  %v1683 = vrot.slane %v1669, %v1682
  %v1684 = vlaneseq
  %v1685 = vshrl.u32 %v1684, 7
  %v1686 = vsub.s32 0, %v1685
  %v1687 = vrot.slane %v1676, %v1686
  %v1688 = vlaneseq
  %v1689 = vshrl.u32 %v1688, 7
  %v1690 = vsub.s32 0, %v1689
  %v1691 = vrot.slane %v1683, %v1690
  %v1694 = vadd.f32 %v260, %v1687
  %v1695 = vadd.f32 %v265, %v1687
  %v1696 = vadd.f32 %v270, %v1691
  %v1697 = vadd.f32 %v275, %v1691
  %v1698 = vmax.f32 %v1694, 0.0
  %v1699 = vmax.f32 %v1695, 0.0
  %v1700 = vmax.f32 %v1696, 0.0
  %v1701 = vmax.f32 %v1697, 0.0
  %v1702 = vmul.f32 %v1698, %v708
  %v1703 = vmul.f32 %v1699, %v708
  %v1704 = vmul.f32 %v1700, %v708
  %v1705 = vmul.f32 %v1701, %v708
  %v1706 = vsel %vm348, %v1702, 0.0
  %1707 = vadd.xlane.f32.xlu0 %v1706
  %v1708 = vpop.xlane.xlu0 %1707
  %v1709 = vsel %vm348, %v1703, 0.0
  %1710 = vadd.xlane.f32.xlu0 %v1709
  %v1711 = vpop.xlane.xlu0 %1710
  %v1712 = vsel %vm348, %v1704, 0.0
  %1713 = vadd.xlane.f32.xlu0 %v1712
  %v1714 = vpop.xlane.xlu0 %1713
  %v1715 = vsel %vm348, %v1705, 0.0
  %1716 = vadd.xlane.f32.xlu0 %v1715
  %v1717 = vpop.xlane.xlu0 %1716
  %v1722 = vlaneseq
  %v1723 = vshrl.u32 %v1722, 7
  %v1724 = vsub.s32 %v731, %v1723
  %v1725 = vrot.slane %v1708, %v1724
  %v1726 = vlaneseq
  %v1727 = vshrl.u32 %v1726, 7
  %v1728 = vsub.s32 %v736, %v1727
  %v1729 = vrot.slane %v1711, %v1728
  %v1730 = vsel %vm741, %v1729, %v1725
  %v1731 = vlaneseq
  %v1732 = vshrl.u32 %v1731, 7
  %v1733 = vsub.s32 %v731, %v1732
  %v1734 = vrot.slane %v1714, %v1733
  %v1735 = vlaneseq
  %v1736 = vshrl.u32 %v1735, 7
  %v1737 = vsub.s32 %v736, %v1736
  %v1738 = vrot.slane %v1717, %v1737
  %v1739 = vsel %vm741, %v1738, %v1734
  %v1740 = vsel %vm92, %v1739, %v1730
  %v1742 = vsel %vm754, %v1740, -inf
  %1743 = vmax.xlane.f32.xlu0 %v1742
  %v1744 = vpop.xlane.xlu0 %1743
  %v1746 = vlaneseq
  %v1747 = vshrl.u32 %v1746, 7
  %v1748 = vsub.s32 0, %v1747
  %v1749 = vrot.slane %v1744, %v1748
  %v1750 = vlaneseq
  %v1751 = vshrl.u32 %v1750, 7
  %v1752 = vsub.s32 1, %v1751
  %v1753 = vrot.slane %v1744, %v1752
  %v1756 = vsub.f32 %v1708, %v1749
  %v1757 = vsub.f32 %v1711, %v1749
  %v1758 = vsub.f32 %v1714, %v1753
  %v1759 = vsub.f32 %v1717, %v1753
  %v1760 = vmul.f32 %v1756, 1.442695
  %v1761 = vpow.pop %v1760
  %v1762 = vmul.f32 %v1757, 1.442695
  %v1763 = vpow.pop %v1762
  %v1764 = vmul.f32 %v1758, 1.442695
  %v1765 = vpow.pop %v1764
  %v1766 = vmul.f32 %v1759, 1.442695
  %v1767 = vpow.pop %v1766
  %1772 = vset.pattern.permute.xlu0 0
  %1773 = vperm.xlu0 %1772, %v1761
  %v1774 = vpop.permute.xlu0 %1773
  %1775 = vset.pattern.permute.xlu0 0
  %1776 = vperm.xlu0 %1775, %v1763
  %v1777 = vpop.permute.xlu0 %1776
  %1778 = vset.pattern.permute.xlu0 0
  %1779 = vperm.xlu0 %1778, %v1765
  %v1780 = vpop.permute.xlu0 %1779
  %1781 = vset.pattern.permute.xlu0 0
  %1782 = vperm.xlu0 %1781, %v1767
  %v1783 = vpop.permute.xlu0 %1782
  %v1784 = vlaneseq
  %v1785 = vshrl.u32 %v1784, 7
  %v1786 = vsub.s32 %v731, %v1785
  %v1787 = vrot.slane %v1774, %v1786
  %v1788 = vlaneseq
  %v1789 = vshrl.u32 %v1788, 7
  %v1790 = vsub.s32 %v736, %v1789
  %v1791 = vrot.slane %v1777, %v1790
  %v1792 = vsel %vm741, %v1791, %v1787
  %v1793 = vlaneseq
  %v1794 = vshrl.u32 %v1793, 7
  %v1795 = vsub.s32 %v731, %v1794
  %v1796 = vrot.slane %v1780, %v1795
  %v1797 = vlaneseq
  %v1798 = vshrl.u32 %v1797, 7
  %v1799 = vsub.s32 %v736, %v1798
  %v1800 = vrot.slane %v1783, %v1799
  %v1801 = vsel %vm741, %v1800, %v1796
  %v1802 = vsel %vm92, %v1801, %v1792
  %v1804 = vsel %vm754, %v1802, 0.0
  %1805 = vadd.xlane.f32.xlu0 %v1804
  %v1806 = vpop.xlane.xlu0 %1805
  %v1808 = vlaneseq
  %v1809 = vshrl.u32 %v1808, 7
  %v1810 = vsub.s32 0, %v1809
  %v1811 = vrot.slane %v1806, %v1810
  %v1812 = vlaneseq
  %v1813 = vshrl.u32 %v1812, 7
  %v1814 = vsub.s32 1, %v1813
  %v1815 = vrot.slane %v1806, %v1814
  %v1818 = vrcp.pop %v1811
  %v1819 = vmul.f32 %v1761, %v1818
  %v1820 = vmul.f32 %v1763, %v1818
  %v1821 = vrcp.pop %v1815
  %v1822 = vmul.f32 %v1765, %v1821
  %v1823 = vmul.f32 %v1767, %v1821
  %1825 = vset.pattern.permute.xlu0 0
  %1826 = vperm.xlu0 %1825, %v1819
  %v1827 = vpop.permute.xlu0 %1826
  %1830 = vset.pattern.permute.xlu0 0
  %1831 = vperm.xlu0 %1830, %v1820
  %v1832 = vpop.permute.xlu0 %1831
  %1835 = vset.pattern.permute.xlu0 0
  %1836 = vperm.xlu0 %1835, %v1822
  %v1837 = vpop.permute.xlu0 %1836
  %1840 = vset.pattern.permute.xlu0 0
  %1841 = vperm.xlu0 %1840, %v1823
  %v1842 = vpop.permute.xlu0 %1841
  %v1844 = vmul.f32 %v1827, %v49
  %v1845 = vmul.f32 %v1832, %v50
  %v1846 = vmul.f32 %v1837, %v51
  %v1847 = vmul.f32 %v1842, %v52
  %v1848 = vsel %vm53, %v1844, 0.0
  %v1849 = vsel %vm53, %v1845, 0.0
  %v1850 = vadd.f32 %v1848, %v1849
  %v1851 = vrot.slane %v1850, 4
  %v1852 = vadd.f32 %v1850, %v1851
  %v1853 = vrot.slane %v1852, 2
  %v1854 = vadd.f32 %v1852, %v1853
  %v1855 = vrot.slane %v1854, 1
  %v1856 = vadd.f32 %v1854, %v1855
  %v1857 = vsel %vm53, %v1846, 0.0
  %v1858 = vsel %vm53, %v1847, 0.0
  %v1859 = vadd.f32 %v1857, %v1858
  %v1860 = vrot.slane %v1859, 4
  %v1861 = vadd.f32 %v1859, %v1860
  %v1862 = vrot.slane %v1861, 2
  %v1863 = vadd.f32 %v1861, %v1862
  %v1864 = vrot.slane %v1863, 1
  %v1865 = vadd.f32 %v1863, %v1864
  %v1868 = vsel %vm92, %v1865, %v1856
  %v1869 = vsel %vm53, %v1868, 0
  %1871 = vmatprep.subr.mxu0 %v497
  %1872 = vmatpush1.msra.mxu0 %v496
  %1873 = vmatprep.subr.mxu0 %v499
  %1874 = vmatpush1.msra.mxu0 %v498
  %1875 = vmatprep.subr.mxu0 %v501
  %1876 = vmatpush1.msra.mxu0 %v500
  %1877 = vmatprep.subr.mxu0 %v503
  %1878 = vmatpush1.msra.mxu0 %v502
  %1879 = vmatprep.subr.mxu0 %v505
  %1880 = vmatpush1.msra.mxu0 %v504
  %1881 = vmatprep.subr.mxu0 %v507
  %1882 = vmatpush1.msra.mxu0 %v506
  %1883 = vmatprep.subr.mxu0 %v509
  %1884 = vmatpush1.msra.mxu0 %v508
  %1885 = vmatprep.subr.mxu0 %v511
  %1886 = vmatpush1.msra.mxu0 %v510
  %1887 = vmatprep.subr.mxu0 0.0
  %1888 = vmatpush1.msra.mxu0 0.0
  %1889 = vmatprep.subr.mxu0 0.0
  %1890 = vmatpush1.msra.mxu0 0.0
  %1891 = vmatprep.subr.mxu0 0.0
  %1892 = vmatpush1.msra.mxu0 0.0
  %1893 = vmatprep.subr.mxu0 0.0
  %1894 = vmatpush1.msra.mxu0 0.0
  %1895 = vmatprep.subr.mxu0 0.0
  %1896 = vmatpush1.msra.mxu0 0.0
  %1897 = vmatprep.subr.mxu0 0.0
  %1898 = vmatpush1.msra.mxu0 0.0
  %1899 = vmatprep.subr.mxu0 0.0
  %1900 = vmatpush1.msra.mxu0 0.0
  %1901 = vmatprep.subr.mxu0 0.0
  %1902 = vmatpush1.msra.mxu0 0.0
  %1903 = vmatprep.subr.mxu0 0.0
  %1904 = vmatpush1.msra.mxu0 0.0
  %1905 = vmatprep.subr.mxu0 0.0
  %1906 = vmatpush1.msra.mxu0 0.0
  %1907 = vmatprep.subr.mxu0 0.0
  %1908 = vmatpush1.msra.mxu0 0.0
  %1909 = vmatprep.subr.mxu0 0.0
  %1910 = vmatpush1.msra.mxu0 0.0
  %1911 = vmatprep.subr.mxu0 0.0
  %1912 = vmatpush1.msra.mxu0 0.0
  %1913 = vmatprep.subr.mxu0 0.0
  %1914 = vmatpush1.msra.mxu0 0.0
  %1915 = vmatprep.subr.mxu0 0.0
  %1916 = vmatpush1.msra.mxu0 0.0
  %1917 = vmatprep.subr.mxu0 0.0
  %1918 = vmatpush1.msra.mxu0 0.0
  %1919 = vmatprep.subr.mxu0 0.0
  %1920 = vmatpush1.msra.mxu0 0.0
  %1921 = vmatprep.subr.mxu0 0.0
  %1922 = vmatpush1.msra.mxu0 0.0
  %1923 = vmatprep.subr.mxu0 0.0
  %1924 = vmatpush1.msra.mxu0 0.0
  %1925 = vmatprep.subr.mxu0 0.0
  %1926 = vmatpush1.msra.mxu0 0.0
  %1927 = vmatprep.subr.mxu0 0.0
  %1928 = vmatpush1.msra.mxu0 0.0
  %1929 = vmatprep.subr.mxu0 0.0
  %1930 = vmatpush1.msra.mxu0 0.0
  %1931 = vmatprep.subr.mxu0 0.0
  %1932 = vmatpush1.msra.mxu0 0.0
  %1933 = vmatprep.subr.mxu0 0.0
  %1934 = vmatpush1.msra.mxu0 0.0
  %1935 = vmatprep.mubr.f32.mxu0 0.0
  %1936 = vmatmul.mubr.f32.gmra.mrb[0].mxu0 %v1869
  %v1937 = vpop.f32.mrb[0].mxu0
  %v1938 = vadd.f32 0.0, %v1937
  %v1939 = vpop.f32.mrb[0].mxu0
  %v1940 = vadd.f32 0.0, %v1939
  %1941 = vdwg.mxu0
  %v1942 = vadd.f32 %v1586, %v1938
  %v1943 = vadd.f32 %v1588, %v1940
  %v1945 = vunpack.c.l.s4 1983009808
  %v1946 = vunpack.c.0.s8 %v1945
  %v1947 = vlaneseq
  %v1948 = vshrl.u32 %v1947, 7
  %v1949 = vsub.s32 %v1946, %v1948
  %v1950 = vrot.slane %v449, %v1949
  %v1951 = vcombine.high %v1950, %v1950
  %v1954 = vadd.f32 %v1942, %v1950
  %v1955 = vadd.f32 %v1943, %v1951
  %v1956 = vxor.u32 %v1954, 2147483648
  %v1957 = vxor.u32 %v1955, 2147483648
  %v1958 = vmul.f32 %v1956, 1.442695
  %v1959 = vpow.pop %v1958
  %v1960 = vmul.f32 %v1957, 1.442695
  %v1961 = vpow.pop %v1960
  %v1962 = vadd.f32 %v1959, 1.0
  %v1963 = vadd.f32 %v1961, 1.0
  %v1964 = vrcp.pop %v1962
  %v1965 = vmul.f32 1.0, %v1964
  %v1966 = vrcp.pop %v1963
  %v1967 = vmul.f32 1.0, %v1966
  %v1968 = vtanh.pop %v1955
  %v1969 = vmul.f32 %v1965, %v1485
  %1971 = vrot.lane.b32.xlu0 %v1968, 64
  %v1972 = vpop.permute.xlu0 %1971
  %v1974 = vmul.f32 %v1965, %v1972
  %1976 = vrot.lane.b32.xlu0 %v1974, 64
  %v1977 = vpop.permute.xlu0 %1976
  %v1979 = vadd.f32 %v1969, %v1977
  %v1980 = vtanh.pop %v1979
  %1982 = vrot.lane.b32.xlu0 %v1980, 64
  %v1983 = vpop.permute.xlu0 %1982
  %v1985 = vmul.f32 %v1967, %v1983
  %s1986 = scalar_lea.vmem [#allocation2], 4
  %1987 = vst.msk [vmem:[%s1986] sm:$0x3] %vm999, %v1985
  %v1988 = vlaneseq
  %v1989 = vshrl.u32 %v1988, 7
  %v1990 = vsub.s32 %v731, %v1989
  %v1991 = vrot.slane %v1827, %v1990
  %v1992 = vlaneseq
  %v1993 = vshrl.u32 %v1992, 7
  %v1994 = vsub.s32 %v736, %v1993
  %v1995 = vrot.slane %v1832, %v1994
  %v1996 = vsel %vm741, %v1995, %v1991
  %v1997 = vlaneseq
  %v1998 = vshrl.u32 %v1997, 7
  %v1999 = vsub.s32 %v731, %v1998
  %v2000 = vrot.slane %v1837, %v1999
  %v2001 = vlaneseq
  %v2002 = vshrl.u32 %v2001, 7
  %v2003 = vsub.s32 %v736, %v2002
  %v2004 = vrot.slane %v1842, %v2003
  %v2005 = vsel %vm741, %v2004, %v2000
  %v2006 = vsel %vm92, %v2005, %v1996
  %s2008 = scalar_lea.vmem %s15, 4
  %2009 = vst.msk [vmem:[%s2008] sm:$0x3] %vm754, %v2006
  %v2011 = vsel %vm53, %v1985, 0
  %2013 = vmatprep.subr.mxu0 %v473
  %2014 = vmatpush1.msra.mxu0 %v472
  %2015 = vmatprep.subr.mxu0 %v476
  %2016 = vmatpush1.msra.mxu0 %v475
  %2017 = vmatprep.subr.mxu0 %v479
  %2018 = vmatpush1.msra.mxu0 %v478
  %2019 = vmatprep.subr.mxu0 %v482
  %2020 = vmatpush1.msra.mxu0 %v481
  %2021 = vmatprep.subr.mxu0 %v485
  %2022 = vmatpush1.msra.mxu0 %v484
  %2023 = vmatprep.subr.mxu0 %v488
  %2024 = vmatpush1.msra.mxu0 %v487
  %2025 = vmatprep.subr.mxu0 %v491
  %2026 = vmatpush1.msra.mxu0 %v490
  %2027 = vmatprep.subr.mxu0 %v494
  %2028 = vmatpush1.msra.mxu0 %v493
  %2029 = vmatprep.subr.mxu0 0.0
  %2030 = vmatpush1.msra.mxu0 0.0
  %2031 = vmatprep.subr.mxu0 0.0
  %2032 = vmatpush1.msra.mxu0 0.0
  %2033 = vmatprep.subr.mxu0 0.0
  %2034 = vmatpush1.msra.mxu0 0.0
  %2035 = vmatprep.subr.mxu0 0.0
  %2036 = vmatpush1.msra.mxu0 0.0
  %2037 = vmatprep.subr.mxu0 0.0
  %2038 = vmatpush1.msra.mxu0 0.0
  %2039 = vmatprep.subr.mxu0 0.0
  %2040 = vmatpush1.msra.mxu0 0.0
  %2041 = vmatprep.subr.mxu0 0.0
  %2042 = vmatpush1.msra.mxu0 0.0
  %2043 = vmatprep.subr.mxu0 0.0
  %2044 = vmatpush1.msra.mxu0 0.0
  %2045 = vmatprep.subr.mxu0 0.0
  %2046 = vmatpush1.msra.mxu0 0.0
  %2047 = vmatprep.subr.mxu0 0.0
  %2048 = vmatpush1.msra.mxu0 0.0
  %2049 = vmatprep.subr.mxu0 0.0
  %2050 = vmatpush1.msra.mxu0 0.0
  %2051 = vmatprep.subr.mxu0 0.0
  %2052 = vmatpush1.msra.mxu0 0.0
  %2053 = vmatprep.subr.mxu0 0.0
  %2054 = vmatpush1.msra.mxu0 0.0
  %2055 = vmatprep.subr.mxu0 0.0
  %2056 = vmatpush1.msra.mxu0 0.0
  %2057 = vmatprep.subr.mxu0 0.0
  %2058 = vmatpush1.msra.mxu0 0.0
  %2059 = vmatprep.subr.mxu0 0.0
  %2060 = vmatpush1.msra.mxu0 0.0
  %2061 = vmatprep.subr.mxu0 0.0
  %2062 = vmatpush1.msra.mxu0 0.0
  %2063 = vmatprep.subr.mxu0 0.0
  %2064 = vmatpush1.msra.mxu0 0.0
  %2065 = vmatprep.subr.mxu0 0.0
  %2066 = vmatpush1.msra.mxu0 0.0
  %2067 = vmatprep.subr.mxu0 0.0
  %2068 = vmatpush1.msra.mxu0 0.0
  %2069 = vmatprep.subr.mxu0 0.0
  %2070 = vmatpush1.msra.mxu0 0.0
  %2071 = vmatprep.subr.mxu0 0.0
  %2072 = vmatpush1.msra.mxu0 0.0
  %2073 = vmatprep.subr.mxu0 0.0
  %2074 = vmatpush1.msra.mxu0 0.0
  %2075 = vmatprep.subr.mxu0 0.0
  %2076 = vmatpush1.msra.mxu0 0.0
  %2077 = vmatprep.mubr.f32.mxu0 0.0
  %2078 = vmatmul.mubr.f32.gmra.mrb[0].mxu0 %v2011
  %v2079 = vpop.f32.mrb[0].mxu0
  %v2080 = vadd.f32 0.0, %v2079
  %v2081 = vpop.f32.mrb[0].mxu0
  %v2082 = vadd.f32 0.0, %v2081
  %2083 = vdwg.mxu0
  %2084 = vmatprep.subr.mxu0 0.0
  %2085 = vmatpush1.msra.mxu0 %v474
  %2086 = vmatprep.subr.mxu0 0.0
  %2087 = vmatpush1.msra.mxu0 %v477
  %2088 = vmatprep.subr.mxu0 0.0
  %2089 = vmatpush1.msra.mxu0 %v480
  %2090 = vmatprep.subr.mxu0 0.0
  %2091 = vmatpush1.msra.mxu0 %v483
  %2092 = vmatprep.subr.mxu0 0.0
  %2093 = vmatpush1.msra.mxu0 %v486
  %2094 = vmatprep.subr.mxu0 0.0
  %2095 = vmatpush1.msra.mxu0 %v489
  %2096 = vmatprep.subr.mxu0 0.0
  %2097 = vmatpush1.msra.mxu0 %v492
  %2098 = vmatprep.subr.mxu0 0.0
  %2099 = vmatpush1.msra.mxu0 %v495
  %2100 = vmatprep.subr.mxu0 0.0
  %2101 = vmatpush1.msra.mxu0 0.0
  %2102 = vmatprep.subr.mxu0 0.0
  %2103 = vmatpush1.msra.mxu0 0.0
  %2104 = vmatprep.subr.mxu0 0.0
  %2105 = vmatpush1.msra.mxu0 0.0
  %2106 = vmatprep.subr.mxu0 0.0
  %2107 = vmatpush1.msra.mxu0 0.0
  %2108 = vmatprep.subr.mxu0 0.0
  %2109 = vmatpush1.msra.mxu0 0.0
  %2110 = vmatprep.subr.mxu0 0.0
  %2111 = vmatpush1.msra.mxu0 0.0
  %2112 = vmatprep.subr.mxu0 0.0
  %2113 = vmatpush1.msra.mxu0 0.0
  %2114 = vmatprep.subr.mxu0 0.0
  %2115 = vmatpush1.msra.mxu0 0.0
  %2116 = vmatprep.subr.mxu0 0.0
  %2117 = vmatpush1.msra.mxu0 0.0
  %2118 = vmatprep.subr.mxu0 0.0
  %2119 = vmatpush1.msra.mxu0 0.0
  %2120 = vmatprep.subr.mxu0 0.0
  %2121 = vmatpush1.msra.mxu0 0.0
  %2122 = vmatprep.subr.mxu0 0.0
  %2123 = vmatpush1.msra.mxu0 0.0
  %2124 = vmatprep.subr.mxu0 0.0
  %2125 = vmatpush1.msra.mxu0 0.0
  %2126 = vmatprep.subr.mxu0 0.0
  %2127 = vmatpush1.msra.mxu0 0.0
  %2128 = vmatprep.subr.mxu0 0.0
  %2129 = vmatpush1.msra.mxu0 0.0
  %2130 = vmatprep.subr.mxu0 0.0
  %2131 = vmatpush1.msra.mxu0 0.0
  %2132 = vmatprep.subr.mxu0 0.0
  %2133 = vmatpush1.msra.mxu0 0.0
  %2134 = vmatprep.subr.mxu0 0.0
  %2135 = vmatpush1.msra.mxu0 0.0
  %2136 = vmatprep.subr.mxu0 0.0
  %2137 = vmatpush1.msra.mxu0 0.0
  %2138 = vmatprep.subr.mxu0 0.0
  %2139 = vmatpush1.msra.mxu0 0.0
  %2140 = vmatprep.subr.mxu0 0.0
  %2141 = vmatpush1.msra.mxu0 0.0
  %2142 = vmatprep.subr.mxu0 0.0
  %2143 = vmatpush1.msra.mxu0 0.0
  %2144 = vmatprep.subr.mxu0 0.0
  %2145 = vmatpush1.msra.mxu0 0.0
  %2146 = vmatprep.subr.mxu0 0.0
  %2147 = vmatpush1.msra.mxu0 0.0
  %2148 = vmatprep.mubr.f32.mxu0 0.0
  %2149 = vmatmul.mubr.f32.gmra.mrb[0].mxu0 %v2011
  %v2150 = vpop.f32.mrb[0].mxu0
  %v2151 = vadd.f32 0.0, %v2150
  %v2152 = vpop.f32.mrb[0].mxu0
  %2153 = vdwg.mxu0
  %v2154 = vadd.f32 %v2151, %v660
  %v2157 = vunpack.c.l.s4 1966171168
  %v2158 = vunpack.c.0.s8 %v2157
  %v2159 = vlaneseq
  %v2160 = vshrl.u32 %v2159, 7
  %v2161 = vsub.s32 %v2158, %v2160
  %v2162 = vrot.slane %v2154, %v2161
  %v2163 = vcombine.high %v2162, %v2162
  %v2165 = vunpack.c.l.s4 1966171168
  %v2166 = vunpack.c.0.s8 %v2165
  %v2167 = vlaneseq
  %v2168 = vshrl.u32 %v2167, 7
  %v2169 = vsub.s32 %v2166, %v2168
  %v2170 = vrot.slane %v2162, %v2169
  %v2172 = vunpack.c.l.s4 1966171168
  %v2173 = vunpack.c.0.s8 %v2172
  %v2174 = vlaneseq
  %v2175 = vshrl.u32 %v2174, 7
  %v2176 = vsub.s32 %v2173, %v2175
  %v2177 = vrot.slane %v2163, %v2176
  %v2178 = vlaneseq
  %v2179 = vshrl.u32 %v2178, 7
  %v2180 = vsub.s32 0, %v2179
  %v2181 = vrot.slane %v2170, %v2180
  %v2182 = vlaneseq
  %v2183 = vshrl.u32 %v2182, 7
  %v2184 = vsub.s32 0, %v2183
  %v2185 = vrot.slane %v2177, %v2184
  %v2188 = vadd.f32 %v260, %v2181
  %v2189 = vadd.f32 %v265, %v2181
  %v2190 = vadd.f32 %v270, %v2185
  %v2191 = vadd.f32 %v275, %v2185
  %v2192 = vmax.f32 %v2188, 0.0
  %v2193 = vmax.f32 %v2189, 0.0
  %v2194 = vmax.f32 %v2190, 0.0
  %v2195 = vmax.f32 %v2191, 0.0
  %v2196 = vmul.f32 %v2192, %v708
  %v2197 = vmul.f32 %v2193, %v708
  %v2198 = vmul.f32 %v2194, %v708
  %v2199 = vmul.f32 %v2195, %v708
  %v2200 = vsel %vm348, %v2196, 0.0
  %2201 = vadd.xlane.f32.xlu0 %v2200
  %v2202 = vpop.xlane.xlu0 %2201
  %v2203 = vsel %vm348, %v2197, 0.0
  %2204 = vadd.xlane.f32.xlu0 %v2203
  %v2205 = vpop.xlane.xlu0 %2204
  %v2206 = vsel %vm348, %v2198, 0.0
  %2207 = vadd.xlane.f32.xlu0 %v2206
  %v2208 = vpop.xlane.xlu0 %2207
  %v2209 = vsel %vm348, %v2199, 0.0
  %2210 = vadd.xlane.f32.xlu0 %v2209
  %v2211 = vpop.xlane.xlu0 %2210
  %v2216 = vlaneseq
  %v2217 = vshrl.u32 %v2216, 7
  %v2218 = vsub.s32 %v731, %v2217
  %v2219 = vrot.slane %v2202, %v2218
  %v2220 = vlaneseq
  %v2221 = vshrl.u32 %v2220, 7
  %v2222 = vsub.s32 %v736, %v2221
  %v2223 = vrot.slane %v2205, %v2222
  %v2224 = vsel %vm741, %v2223, %v2219
  %v2225 = vlaneseq
  %v2226 = vshrl.u32 %v2225, 7
  %v2227 = vsub.s32 %v731, %v2226
  %v2228 = vrot.slane %v2208, %v2227
  %v2229 = vlaneseq
  %v2230 = vshrl.u32 %v2229, 7
  %v2231 = vsub.s32 %v736, %v2230
  %v2232 = vrot.slane %v2211, %v2231
  %v2233 = vsel %vm741, %v2232, %v2228
  %v2234 = vsel %vm92, %v2233, %v2224
  %v2236 = vsel %vm754, %v2234, -inf
  %2237 = vmax.xlane.f32.xlu0 %v2236
  %v2238 = vpop.xlane.xlu0 %2237
  %v2240 = vlaneseq
  %v2241 = vshrl.u32 %v2240, 7
  %v2242 = vsub.s32 0, %v2241
  %v2243 = vrot.slane %v2238, %v2242
  %v2244 = vlaneseq
  %v2245 = vshrl.u32 %v2244, 7
  %v2246 = vsub.s32 1, %v2245
  %v2247 = vrot.slane %v2238, %v2246
  %v2250 = vsub.f32 %v2202, %v2243
  %v2251 = vsub.f32 %v2205, %v2243
  %v2252 = vsub.f32 %v2208, %v2247
  %v2253 = vsub.f32 %v2211, %v2247
  %v2254 = vmul.f32 %v2250, 1.442695
  %v2255 = vpow.pop %v2254
  %v2256 = vmul.f32 %v2251, 1.442695
  %v2257 = vpow.pop %v2256
  %v2258 = vmul.f32 %v2252, 1.442695
  %v2259 = vpow.pop %v2258
  %v2260 = vmul.f32 %v2253, 1.442695
  %v2261 = vpow.pop %v2260
  %2266 = vset.pattern.permute.xlu0 0
  %2267 = vperm.xlu0 %2266, %v2255
  %v2268 = vpop.permute.xlu0 %2267
  %2269 = vset.pattern.permute.xlu0 0
  %2270 = vperm.xlu0 %2269, %v2257
  %v2271 = vpop.permute.xlu0 %2270
  %2272 = vset.pattern.permute.xlu0 0
  %2273 = vperm.xlu0 %2272, %v2259
  %v2274 = vpop.permute.xlu0 %2273
  %2275 = vset.pattern.permute.xlu0 0
  %2276 = vperm.xlu0 %2275, %v2261
  %v2277 = vpop.permute.xlu0 %2276
  %v2278 = vlaneseq
  %v2279 = vshrl.u32 %v2278, 7
  %v2280 = vsub.s32 %v731, %v2279
  %v2281 = vrot.slane %v2268, %v2280
  %v2282 = vlaneseq
  %v2283 = vshrl.u32 %v2282, 7
  %v2284 = vsub.s32 %v736, %v2283
  %v2285 = vrot.slane %v2271, %v2284
  %v2286 = vsel %vm741, %v2285, %v2281
  %v2287 = vlaneseq
  %v2288 = vshrl.u32 %v2287, 7
  %v2289 = vsub.s32 %v731, %v2288
  %v2290 = vrot.slane %v2274, %v2289
  %v2291 = vlaneseq
  %v2292 = vshrl.u32 %v2291, 7
  %v2293 = vsub.s32 %v736, %v2292
  %v2294 = vrot.slane %v2277, %v2293
  %v2295 = vsel %vm741, %v2294, %v2290
  %v2296 = vsel %vm92, %v2295, %v2286
  %v2298 = vsel %vm754, %v2296, 0.0
  %2299 = vadd.xlane.f32.xlu0 %v2298
  %v2300 = vpop.xlane.xlu0 %2299
  %v2302 = vlaneseq
  %v2303 = vshrl.u32 %v2302, 7
  %v2304 = vsub.s32 0, %v2303
  %v2305 = vrot.slane %v2300, %v2304
  %v2306 = vlaneseq
  %v2307 = vshrl.u32 %v2306, 7
  %v2308 = vsub.s32 1, %v2307
  %v2309 = vrot.slane %v2300, %v2308
  %v2312 = vrcp.pop %v2305
  %v2313 = vmul.f32 %v2255, %v2312
  %v2314 = vmul.f32 %v2257, %v2312
  %v2315 = vrcp.pop %v2309
  %v2316 = vmul.f32 %v2259, %v2315
  %v2317 = vmul.f32 %v2261, %v2315
  %2319 = vset.pattern.permute.xlu0 0
  %2320 = vperm.xlu0 %2319, %v2313
  %v2321 = vpop.permute.xlu0 %2320
  %2324 = vset.pattern.permute.xlu0 0
  %2325 = vperm.xlu0 %2324, %v2314
  %v2326 = vpop.permute.xlu0 %2325
  %2329 = vset.pattern.permute.xlu0 0
  %2330 = vperm.xlu0 %2329, %v2316
  %v2331 = vpop.permute.xlu0 %2330
  %2334 = vset.pattern.permute.xlu0 0
  %2335 = vperm.xlu0 %2334, %v2317
  %v2336 = vpop.permute.xlu0 %2335
  %v2338 = vmul.f32 %v2321, %v49
  %v2339 = vmul.f32 %v2326, %v50
  %v2340 = vmul.f32 %v2331, %v51
  %v2341 = vmul.f32 %v2336, %v52
  %v2342 = vsel %vm53, %v2338, 0.0
  %v2343 = vsel %vm53, %v2339, 0.0
  %v2344 = vadd.f32 %v2342, %v2343
  %v2345 = vrot.slane %v2344, 4
  %v2346 = vadd.f32 %v2344, %v2345
  %v2347 = vrot.slane %v2346, 2
  %v2348 = vadd.f32 %v2346, %v2347
  %v2349 = vrot.slane %v2348, 1
  %v2350 = vadd.f32 %v2348, %v2349
  %v2351 = vsel %vm53, %v2340, 0.0
  %v2352 = vsel %vm53, %v2341, 0.0
  %v2353 = vadd.f32 %v2351, %v2352
  %v2354 = vrot.slane %v2353, 4
  %v2355 = vadd.f32 %v2353, %v2354
  %v2356 = vrot.slane %v2355, 2
  %v2357 = vadd.f32 %v2355, %v2356
  %v2358 = vrot.slane %v2357, 1
  %v2359 = vadd.f32 %v2357, %v2358
  %v2362 = vsel %vm92, %v2359, %v2350
  %v2363 = vsel %vm53, %v2362, 0
  %2365 = vmatprep.subr.mxu0 %v497
  %2366 = vmatpush1.msra.mxu0 %v496
  %2367 = vmatprep.subr.mxu0 %v499
  %2368 = vmatpush1.msra.mxu0 %v498
  %2369 = vmatprep.subr.mxu0 %v501
  %2370 = vmatpush1.msra.mxu0 %v500
  %2371 = vmatprep.subr.mxu0 %v503
  %2372 = vmatpush1.msra.mxu0 %v502
  %2373 = vmatprep.subr.mxu0 %v505
  %2374 = vmatpush1.msra.mxu0 %v504
  %2375 = vmatprep.subr.mxu0 %v507
  %2376 = vmatpush1.msra.mxu0 %v506
  %2377 = vmatprep.subr.mxu0 %v509
  %2378 = vmatpush1.msra.mxu0 %v508
  %2379 = vmatprep.subr.mxu0 %v511
  %2380 = vmatpush1.msra.mxu0 %v510
  %2381 = vmatprep.subr.mxu0 0.0
  %2382 = vmatpush1.msra.mxu0 0.0
  %2383 = vmatprep.subr.mxu0 0.0
  %2384 = vmatpush1.msra.mxu0 0.0
  %2385 = vmatprep.subr.mxu0 0.0
  %2386 = vmatpush1.msra.mxu0 0.0
  %2387 = vmatprep.subr.mxu0 0.0
  %2388 = vmatpush1.msra.mxu0 0.0
  %2389 = vmatprep.subr.mxu0 0.0
  %2390 = vmatpush1.msra.mxu0 0.0
  %2391 = vmatprep.subr.mxu0 0.0
  %2392 = vmatpush1.msra.mxu0 0.0
  %2393 = vmatprep.subr.mxu0 0.0
  %2394 = vmatpush1.msra.mxu0 0.0
  %2395 = vmatprep.subr.mxu0 0.0
  %2396 = vmatpush1.msra.mxu0 0.0
  %2397 = vmatprep.subr.mxu0 0.0
  %2398 = vmatpush1.msra.mxu0 0.0
  %2399 = vmatprep.subr.mxu0 0.0
  %2400 = vmatpush1.msra.mxu0 0.0
  %2401 = vmatprep.subr.mxu0 0.0
  %2402 = vmatpush1.msra.mxu0 0.0
  %2403 = vmatprep.subr.mxu0 0.0
  %2404 = vmatpush1.msra.mxu0 0.0
  %2405 = vmatprep.subr.mxu0 0.0
  %2406 = vmatpush1.msra.mxu0 0.0
  %2407 = vmatprep.subr.mxu0 0.0
  %2408 = vmatpush1.msra.mxu0 0.0
  %2409 = vmatprep.subr.mxu0 0.0
  %2410 = vmatpush1.msra.mxu0 0.0
  %2411 = vmatprep.subr.mxu0 0.0
  %2412 = vmatpush1.msra.mxu0 0.0
  %2413 = vmatprep.subr.mxu0 0.0
  %2414 = vmatpush1.msra.mxu0 0.0
  %2415 = vmatprep.subr.mxu0 0.0
  %2416 = vmatpush1.msra.mxu0 0.0
  %2417 = vmatprep.subr.mxu0 0.0
  %2418 = vmatpush1.msra.mxu0 0.0
  %2419 = vmatprep.subr.mxu0 0.0
  %2420 = vmatpush1.msra.mxu0 0.0
  %2421 = vmatprep.subr.mxu0 0.0
  %2422 = vmatpush1.msra.mxu0 0.0
  %2423 = vmatprep.subr.mxu0 0.0
  %2424 = vmatpush1.msra.mxu0 0.0
  %2425 = vmatprep.subr.mxu0 0.0
  %2426 = vmatpush1.msra.mxu0 0.0
  %2427 = vmatprep.subr.mxu0 0.0
  %2428 = vmatpush1.msra.mxu0 0.0
  %2429 = vmatprep.mubr.f32.mxu0 0.0
  %2430 = vmatmul.mubr.f32.gmra.mrb[0].mxu0 %v2363
  %v2431 = vpop.f32.mrb[0].mxu0
  %v2432 = vadd.f32 0.0, %v2431
  %v2433 = vpop.f32.mrb[0].mxu0
  %v2434 = vadd.f32 0.0, %v2433
  %2435 = vdwg.mxu0
  %v2436 = vadd.f32 %v2080, %v2432
  %v2437 = vadd.f32 %v2082, %v2434
  %v2439 = vunpack.c.l.s4 1983009808
  %v2440 = vunpack.c.0.s8 %v2439
  %v2441 = vlaneseq
  %v2442 = vshrl.u32 %v2441, 7
  %v2443 = vsub.s32 %v2440, %v2442
  %v2444 = vrot.slane %v451, %v2443
  %v2445 = vcombine.high %v2444, %v2444
  %v2448 = vadd.f32 %v2436, %v2444
  %v2449 = vadd.f32 %v2437, %v2445
  %v2450 = vxor.u32 %v2448, 2147483648
  %v2451 = vxor.u32 %v2449, 2147483648
  %v2452 = vmul.f32 %v2450, 1.442695
  %v2453 = vpow.pop %v2452
  %v2454 = vmul.f32 %v2451, 1.442695
  %v2455 = vpow.pop %v2454
  %v2456 = vadd.f32 %v2453, 1.0
  %v2457 = vadd.f32 %v2455, 1.0
  %v2458 = vrcp.pop %v2456
  %v2459 = vmul.f32 1.0, %v2458
  %v2460 = vrcp.pop %v2457
  %v2461 = vmul.f32 1.0, %v2460
  %v2462 = vtanh.pop %v2449
  %v2463 = vmul.f32 %v2459, %v1979
  %2465 = vrot.lane.b32.xlu0 %v2462, 64
  %v2466 = vpop.permute.xlu0 %2465
  %v2468 = vmul.f32 %v2459, %v2466
  %2470 = vrot.lane.b32.xlu0 %v2468, 64
  %v2471 = vpop.permute.xlu0 %2470
  %v2473 = vadd.f32 %v2463, %v2471
  %v2474 = vtanh.pop %v2473
  %2476 = vrot.lane.b32.xlu0 %v2474, 64
  %v2477 = vpop.permute.xlu0 %2476
  %v2479 = vmul.f32 %v2461, %v2477
  %s2480 = scalar_lea.vmem [#allocation2], 6
  %2481 = vst.msk [vmem:[%s2480] sm:$0x3] %vm999, %v2479
  %v2482 = vlaneseq
  %v2483 = vshrl.u32 %v2482, 7
  %v2484 = vsub.s32 %v731, %v2483
  %v2485 = vrot.slane %v2321, %v2484
  %v2486 = vlaneseq
  %v2487 = vshrl.u32 %v2486, 7
  %v2488 = vsub.s32 %v736, %v2487
  %v2489 = vrot.slane %v2326, %v2488
  %v2490 = vsel %vm741, %v2489, %v2485
  %v2491 = vlaneseq
  %v2492 = vshrl.u32 %v2491, 7
  %v2493 = vsub.s32 %v731, %v2492
  %v2494 = vrot.slane %v2331, %v2493
  %v2495 = vlaneseq
  %v2496 = vshrl.u32 %v2495, 7
  %v2497 = vsub.s32 %v736, %v2496
  %v2498 = vrot.slane %v2336, %v2497
  %v2499 = vsel %vm741, %v2498, %v2494
  %v2500 = vsel %vm92, %v2499, %v2490
  %s2502 = scalar_lea.vmem %s15, 6
  %2503 = vst.msk [vmem:[%s2502] sm:$0x3] %vm754, %v2500
  %v2505 = vsel %vm53, %v2479, 0
  %2507 = vmatprep.subr.mxu0 %v473
  %2508 = vmatpush1.msra.mxu0 %v472
  %2509 = vmatprep.subr.mxu0 %v476
  %2510 = vmatpush1.msra.mxu0 %v475
  %2511 = vmatprep.subr.mxu0 %v479
  %2512 = vmatpush1.msra.mxu0 %v478
  %2513 = vmatprep.subr.mxu0 %v482
  %2514 = vmatpush1.msra.mxu0 %v481
  %2515 = vmatprep.subr.mxu0 %v485
  %2516 = vmatpush1.msra.mxu0 %v484
  %2517 = vmatprep.subr.mxu0 %v488
  %2518 = vmatpush1.msra.mxu0 %v487
  %2519 = vmatprep.subr.mxu0 %v491
  %2520 = vmatpush1.msra.mxu0 %v490
  %2521 = vmatprep.subr.mxu0 %v494
  %2522 = vmatpush1.msra.mxu0 %v493
  %2523 = vmatprep.subr.mxu0 0.0
  %2524 = vmatpush1.msra.mxu0 0.0
  %2525 = vmatprep.subr.mxu0 0.0
  %2526 = vmatpush1.msra.mxu0 0.0
  %2527 = vmatprep.subr.mxu0 0.0
  %2528 = vmatpush1.msra.mxu0 0.0
  %2529 = vmatprep.subr.mxu0 0.0
  %2530 = vmatpush1.msra.mxu0 0.0
  %2531 = vmatprep.subr.mxu0 0.0
  %2532 = vmatpush1.msra.mxu0 0.0
  %2533 = vmatprep.subr.mxu0 0.0
  %2534 = vmatpush1.msra.mxu0 0.0
  %2535 = vmatprep.subr.mxu0 0.0
  %2536 = vmatpush1.msra.mxu0 0.0
  %2537 = vmatprep.subr.mxu0 0.0
  %2538 = vmatpush1.msra.mxu0 0.0
  %2539 = vmatprep.subr.mxu0 0.0
  %2540 = vmatpush1.msra.mxu0 0.0
  %2541 = vmatprep.subr.mxu0 0.0
  %2542 = vmatpush1.msra.mxu0 0.0
  %2543 = vmatprep.subr.mxu0 0.0
  %2544 = vmatpush1.msra.mxu0 0.0
  %2545 = vmatprep.subr.mxu0 0.0
  %2546 = vmatpush1.msra.mxu0 0.0
  %2547 = vmatprep.subr.mxu0 0.0
  %2548 = vmatpush1.msra.mxu0 0.0
  %2549 = vmatprep.subr.mxu0 0.0
  %2550 = vmatpush1.msra.mxu0 0.0
  %2551 = vmatprep.subr.mxu0 0.0
  %2552 = vmatpush1.msra.mxu0 0.0
  %2553 = vmatprep.subr.mxu0 0.0
  %2554 = vmatpush1.msra.mxu0 0.0
  %2555 = vmatprep.subr.mxu0 0.0
  %2556 = vmatpush1.msra.mxu0 0.0
  %2557 = vmatprep.subr.mxu0 0.0
  %2558 = vmatpush1.msra.mxu0 0.0
  %2559 = vmatprep.subr.mxu0 0.0
  %2560 = vmatpush1.msra.mxu0 0.0
  %2561 = vmatprep.subr.mxu0 0.0
  %2562 = vmatpush1.msra.mxu0 0.0
  %2563 = vmatprep.subr.mxu0 0.0
  %2564 = vmatpush1.msra.mxu0 0.0
  %2565 = vmatprep.subr.mxu0 0.0
  %2566 = vmatpush1.msra.mxu0 0.0
  %2567 = vmatprep.subr.mxu0 0.0
  %2568 = vmatpush1.msra.mxu0 0.0
  %2569 = vmatprep.subr.mxu0 0.0
  %2570 = vmatpush1.msra.mxu0 0.0
  %2571 = vmatprep.mubr.f32.mxu0 0.0
  %2572 = vmatmul.mubr.f32.gmra.mrb[0].mxu0 %v2505
  %v2573 = vpop.f32.mrb[0].mxu0
  %v2574 = vadd.f32 0.0, %v2573
  %v2575 = vpop.f32.mrb[0].mxu0
  %v2576 = vadd.f32 0.0, %v2575
  %2577 = vdwg.mxu0
  %2578 = vmatprep.subr.mxu0 0.0
  %2579 = vmatpush1.msra.mxu0 %v474
  %2580 = vmatprep.subr.mxu0 0.0
  %2581 = vmatpush1.msra.mxu0 %v477
  %2582 = vmatprep.subr.mxu0 0.0
  %2583 = vmatpush1.msra.mxu0 %v480
  %2584 = vmatprep.subr.mxu0 0.0
  %2585 = vmatpush1.msra.mxu0 %v483
  %2586 = vmatprep.subr.mxu0 0.0
  %2587 = vmatpush1.msra.mxu0 %v486
  %2588 = vmatprep.subr.mxu0 0.0
  %2589 = vmatpush1.msra.mxu0 %v489
  %2590 = vmatprep.subr.mxu0 0.0
  %2591 = vmatpush1.msra.mxu0 %v492
  %2592 = vmatprep.subr.mxu0 0.0
  %2593 = vmatpush1.msra.mxu0 %v495
  %2594 = vmatprep.subr.mxu0 0.0
  %2595 = vmatpush1.msra.mxu0 0.0
  %2596 = vmatprep.subr.mxu0 0.0
  %2597 = vmatpush1.msra.mxu0 0.0
  %2598 = vmatprep.subr.mxu0 0.0
  %2599 = vmatpush1.msra.mxu0 0.0
  %2600 = vmatprep.subr.mxu0 0.0
  %2601 = vmatpush1.msra.mxu0 0.0
  %2602 = vmatprep.subr.mxu0 0.0
  %2603 = vmatpush1.msra.mxu0 0.0
  %2604 = vmatprep.subr.mxu0 0.0
  %2605 = vmatpush1.msra.mxu0 0.0
  %2606 = vmatprep.subr.mxu0 0.0
  %2607 = vmatpush1.msra.mxu0 0.0
  %2608 = vmatprep.subr.mxu0 0.0
  %2609 = vmatpush1.msra.mxu0 0.0
  %2610 = vmatprep.subr.mxu0 0.0
  %2611 = vmatpush1.msra.mxu0 0.0
  %2612 = vmatprep.subr.mxu0 0.0
  %2613 = vmatpush1.msra.mxu0 0.0
  %2614 = vmatprep.subr.mxu0 0.0
  %2615 = vmatpush1.msra.mxu0 0.0
  %2616 = vmatprep.subr.mxu0 0.0
  %2617 = vmatpush1.msra.mxu0 0.0
  %2618 = vmatprep.subr.mxu0 0.0
  %2619 = vmatpush1.msra.mxu0 0.0
  %2620 = vmatprep.subr.mxu0 0.0
  %2621 = vmatpush1.msra.mxu0 0.0
  %2622 = vmatprep.subr.mxu0 0.0
  %2623 = vmatpush1.msra.mxu0 0.0
  %2624 = vmatprep.subr.mxu0 0.0
  %2625 = vmatpush1.msra.mxu0 0.0
  %2626 = vmatprep.subr.mxu0 0.0
  %2627 = vmatpush1.msra.mxu0 0.0
  %2628 = vmatprep.subr.mxu0 0.0
  %2629 = vmatpush1.msra.mxu0 0.0
  %2630 = vmatprep.subr.mxu0 0.0
  %2631 = vmatpush1.msra.mxu0 0.0
  %2632 = vmatprep.subr.mxu0 0.0
  %2633 = vmatpush1.msra.mxu0 0.0
  %2634 = vmatprep.subr.mxu0 0.0
  %2635 = vmatpush1.msra.mxu0 0.0
  %2636 = vmatprep.subr.mxu0 0.0
  %2637 = vmatpush1.msra.mxu0 0.0
  %2638 = vmatprep.subr.mxu0 0.0
  %2639 = vmatpush1.msra.mxu0 0.0
  %2640 = vmatprep.subr.mxu0 0.0
  %2641 = vmatpush1.msra.mxu0 0.0
  %2642 = vmatprep.mubr.f32.mxu0 0.0
  %2643 = vmatmul.mubr.f32.gmra.mrb[0].mxu0 %v2505
  %v2644 = vpop.f32.mrb[0].mxu0
  %v2645 = vadd.f32 0.0, %v2644
  %v2646 = vpop.f32.mrb[0].mxu0
  %2647 = vdwg.mxu0
  %v2648 = vadd.f32 %v2645, %v660
  %v2651 = vunpack.c.l.s4 1966171168
  %v2652 = vunpack.c.0.s8 %v2651
  %v2653 = vlaneseq
  %v2654 = vshrl.u32 %v2653, 7
  %v2655 = vsub.s32 %v2652, %v2654
  %v2656 = vrot.slane %v2648, %v2655
  %v2657 = vcombine.high %v2656, %v2656
  %v2659 = vunpack.c.l.s4 1966171168
  %v2660 = vunpack.c.0.s8 %v2659
  %v2661 = vlaneseq
  %v2662 = vshrl.u32 %v2661, 7
  %v2663 = vsub.s32 %v2660, %v2662
  %v2664 = vrot.slane %v2656, %v2663
  %v2666 = vunpack.c.l.s4 1966171168
  %v2667 = vunpack.c.0.s8 %v2666
  %v2668 = vlaneseq
  %v2669 = vshrl.u32 %v2668, 7
  %v2670 = vsub.s32 %v2667, %v2669
  %v2671 = vrot.slane %v2657, %v2670
  %v2672 = vlaneseq
  %v2673 = vshrl.u32 %v2672, 7
  %v2674 = vsub.s32 0, %v2673
  %v2675 = vrot.slane %v2664, %v2674
  %v2676 = vlaneseq
  %v2677 = vshrl.u32 %v2676, 7
  %v2678 = vsub.s32 0, %v2677
  %v2679 = vrot.slane %v2671, %v2678
  %v2682 = vadd.f32 %v260, %v2675
  %v2683 = vadd.f32 %v265, %v2675
  %v2684 = vadd.f32 %v270, %v2679
  %v2685 = vadd.f32 %v275, %v2679
  %v2686 = vmax.f32 %v2682, 0.0
  %v2687 = vmax.f32 %v2683, 0.0
  %v2688 = vmax.f32 %v2684, 0.0
  %v2689 = vmax.f32 %v2685, 0.0
  %v2690 = vmul.f32 %v2686, %v708
  %v2691 = vmul.f32 %v2687, %v708
  %v2692 = vmul.f32 %v2688, %v708
  %v2693 = vmul.f32 %v2689, %v708
  %v2694 = vsel %vm348, %v2690, 0.0
  %2695 = vadd.xlane.f32.xlu0 %v2694
  %v2696 = vpop.xlane.xlu0 %2695
  %v2697 = vsel %vm348, %v2691, 0.0
  %2698 = vadd.xlane.f32.xlu0 %v2697
  %v2699 = vpop.xlane.xlu0 %2698
  %v2700 = vsel %vm348, %v2692, 0.0
  %2701 = vadd.xlane.f32.xlu0 %v2700
  %v2702 = vpop.xlane.xlu0 %2701
  %v2703 = vsel %vm348, %v2693, 0.0
  %2704 = vadd.xlane.f32.xlu0 %v2703
  %v2705 = vpop.xlane.xlu0 %2704
  %v2710 = vlaneseq
  %v2711 = vshrl.u32 %v2710, 7
  %v2712 = vsub.s32 %v731, %v2711
  %v2713 = vrot.slane %v2696, %v2712
  %v2714 = vlaneseq
  %v2715 = vshrl.u32 %v2714, 7
  %v2716 = vsub.s32 %v736, %v2715
  %v2717 = vrot.slane %v2699, %v2716
  %v2718 = vsel %vm741, %v2717, %v2713
  %v2719 = vlaneseq
  %v2720 = vshrl.u32 %v2719, 7
  %v2721 = vsub.s32 %v731, %v2720
  %v2722 = vrot.slane %v2702, %v2721
  %v2723 = vlaneseq
  %v2724 = vshrl.u32 %v2723, 7
  %v2725 = vsub.s32 %v736, %v2724
  %v2726 = vrot.slane %v2705, %v2725
  %v2727 = vsel %vm741, %v2726, %v2722
  %v2728 = vsel %vm92, %v2727, %v2718
  %v2730 = vsel %vm754, %v2728, -inf
  %2731 = vmax.xlane.f32.xlu0 %v2730
  %v2732 = vpop.xlane.xlu0 %2731
  %v2734 = vlaneseq
  %v2735 = vshrl.u32 %v2734, 7
  %v2736 = vsub.s32 0, %v2735
  %v2737 = vrot.slane %v2732, %v2736
  %v2738 = vlaneseq
  %v2739 = vshrl.u32 %v2738, 7
  %v2740 = vsub.s32 1, %v2739
  %v2741 = vrot.slane %v2732, %v2740
  %v2744 = vsub.f32 %v2696, %v2737
  %v2745 = vsub.f32 %v2699, %v2737
  %v2746 = vsub.f32 %v2702, %v2741
  %v2747 = vsub.f32 %v2705, %v2741
  %v2748 = vmul.f32 %v2744, 1.442695
  %v2749 = vpow.pop %v2748
  %v2750 = vmul.f32 %v2745, 1.442695
  %v2751 = vpow.pop %v2750
  %v2752 = vmul.f32 %v2746, 1.442695
  %v2753 = vpow.pop %v2752
  %v2754 = vmul.f32 %v2747, 1.442695
  %v2755 = vpow.pop %v2754
  %2760 = vset.pattern.permute.xlu0 0
  %2761 = vperm.xlu0 %2760, %v2749
  %v2762 = vpop.permute.xlu0 %2761
  %2763 = vset.pattern.permute.xlu0 0
  %2764 = vperm.xlu0 %2763, %v2751
  %v2765 = vpop.permute.xlu0 %2764
  %2766 = vset.pattern.permute.xlu0 0
  %2767 = vperm.xlu0 %2766, %v2753
  %v2768 = vpop.permute.xlu0 %2767
  %2769 = vset.pattern.permute.xlu0 0
  %2770 = vperm.xlu0 %2769, %v2755
  %v2771 = vpop.permute.xlu0 %2770
  %v2772 = vlaneseq
  %v2773 = vshrl.u32 %v2772, 7
  %v2774 = vsub.s32 %v731, %v2773
  %v2775 = vrot.slane %v2762, %v2774
  %v2776 = vlaneseq
  %v2777 = vshrl.u32 %v2776, 7
  %v2778 = vsub.s32 %v736, %v2777
  %v2779 = vrot.slane %v2765, %v2778
  %v2780 = vsel %vm741, %v2779, %v2775
  %v2781 = vlaneseq
  %v2782 = vshrl.u32 %v2781, 7
  %v2783 = vsub.s32 %v731, %v2782
  %v2784 = vrot.slane %v2768, %v2783
  %v2785 = vlaneseq
  %v2786 = vshrl.u32 %v2785, 7
  %v2787 = vsub.s32 %v736, %v2786
  %v2788 = vrot.slane %v2771, %v2787
  %v2789 = vsel %vm741, %v2788, %v2784
  %v2790 = vsel %vm92, %v2789, %v2780
  %v2792 = vsel %vm754, %v2790, 0.0
  %2793 = vadd.xlane.f32.xlu0 %v2792
  %v2794 = vpop.xlane.xlu0 %2793
  %v2796 = vlaneseq
  %v2797 = vshrl.u32 %v2796, 7
  %v2798 = vsub.s32 0, %v2797
  %v2799 = vrot.slane %v2794, %v2798
  %v2800 = vlaneseq
  %v2801 = vshrl.u32 %v2800, 7
  %v2802 = vsub.s32 1, %v2801
  %v2803 = vrot.slane %v2794, %v2802
  %v2806 = vrcp.pop %v2799
  %v2807 = vmul.f32 %v2749, %v2806
  %v2808 = vmul.f32 %v2751, %v2806
  %v2809 = vrcp.pop %v2803
  %v2810 = vmul.f32 %v2753, %v2809
  %v2811 = vmul.f32 %v2755, %v2809
  %2813 = vset.pattern.permute.xlu0 0
  %2814 = vperm.xlu0 %2813, %v2807
  %v2815 = vpop.permute.xlu0 %2814
  %2818 = vset.pattern.permute.xlu0 0
  %2819 = vperm.xlu0 %2818, %v2808
  %v2820 = vpop.permute.xlu0 %2819
  %2823 = vset.pattern.permute.xlu0 0
  %2824 = vperm.xlu0 %2823, %v2810
  %v2825 = vpop.permute.xlu0 %2824
  %2828 = vset.pattern.permute.xlu0 0
  %2829 = vperm.xlu0 %2828, %v2811
  %v2830 = vpop.permute.xlu0 %2829
  %v2832 = vmul.f32 %v2815, %v49
  %v2833 = vmul.f32 %v2820, %v50
  %v2834 = vmul.f32 %v2825, %v51
  %v2835 = vmul.f32 %v2830, %v52
  %v2836 = vsel %vm53, %v2832, 0.0
  %v2837 = vsel %vm53, %v2833, 0.0
  %v2838 = vadd.f32 %v2836, %v2837
  %v2839 = vrot.slane %v2838, 4
  %v2840 = vadd.f32 %v2838, %v2839
  %v2841 = vrot.slane %v2840, 2
  %v2842 = vadd.f32 %v2840, %v2841
  %v2843 = vrot.slane %v2842, 1
  %v2844 = vadd.f32 %v2842, %v2843
  %v2845 = vsel %vm53, %v2834, 0.0
  %v2846 = vsel %vm53, %v2835, 0.0
  %v2847 = vadd.f32 %v2845, %v2846
  %v2848 = vrot.slane %v2847, 4
  %v2849 = vadd.f32 %v2847, %v2848
  %v2850 = vrot.slane %v2849, 2
  %v2851 = vadd.f32 %v2849, %v2850
  %v2852 = vrot.slane %v2851, 1
  %v2853 = vadd.f32 %v2851, %v2852
  %v2856 = vsel %vm92, %v2853, %v2844
  %v2857 = vsel %vm53, %v2856, 0
  %2859 = vmatprep.subr.mxu0 %v497
  %2860 = vmatpush1.msra.mxu0 %v496
  %2861 = vmatprep.subr.mxu0 %v499
  %2862 = vmatpush1.msra.mxu0 %v498
  %2863 = vmatprep.subr.mxu0 %v501
  %2864 = vmatpush1.msra.mxu0 %v500
  %2865 = vmatprep.subr.mxu0 %v503
  %2866 = vmatpush1.msra.mxu0 %v502
  %2867 = vmatprep.subr.mxu0 %v505
  %2868 = vmatpush1.msra.mxu0 %v504
  %2869 = vmatprep.subr.mxu0 %v507
  %2870 = vmatpush1.msra.mxu0 %v506
  %2871 = vmatprep.subr.mxu0 %v509
  %2872 = vmatpush1.msra.mxu0 %v508
  %2873 = vmatprep.subr.mxu0 %v511
  %2874 = vmatpush1.msra.mxu0 %v510
  %2875 = vmatprep.subr.mxu0 0.0
  %2876 = vmatpush1.msra.mxu0 0.0
  %2877 = vmatprep.subr.mxu0 0.0
  %2878 = vmatpush1.msra.mxu0 0.0
  %2879 = vmatprep.subr.mxu0 0.0
  %2880 = vmatpush1.msra.mxu0 0.0
  %2881 = vmatprep.subr.mxu0 0.0
  %2882 = vmatpush1.msra.mxu0 0.0
  %2883 = vmatprep.subr.mxu0 0.0
  %2884 = vmatpush1.msra.mxu0 0.0
  %2885 = vmatprep.subr.mxu0 0.0
  %2886 = vmatpush1.msra.mxu0 0.0
  %2887 = vmatprep.subr.mxu0 0.0
  %2888 = vmatpush1.msra.mxu0 0.0
  %2889 = vmatprep.subr.mxu0 0.0
  %2890 = vmatpush1.msra.mxu0 0.0
  %2891 = vmatprep.subr.mxu0 0.0
  %2892 = vmatpush1.msra.mxu0 0.0
  %2893 = vmatprep.subr.mxu0 0.0
  %2894 = vmatpush1.msra.mxu0 0.0
  %2895 = vmatprep.subr.mxu0 0.0
  %2896 = vmatpush1.msra.mxu0 0.0
  %2897 = vmatprep.subr.mxu0 0.0
  %2898 = vmatpush1.msra.mxu0 0.0
  %2899 = vmatprep.subr.mxu0 0.0
  %2900 = vmatpush1.msra.mxu0 0.0
  %2901 = vmatprep.subr.mxu0 0.0
  %2902 = vmatpush1.msra.mxu0 0.0
  %2903 = vmatprep.subr.mxu0 0.0
  %2904 = vmatpush1.msra.mxu0 0.0
  %2905 = vmatprep.subr.mxu0 0.0
  %2906 = vmatpush1.msra.mxu0 0.0
  %2907 = vmatprep.subr.mxu0 0.0
  %2908 = vmatpush1.msra.mxu0 0.0
  %2909 = vmatprep.subr.mxu0 0.0
  %2910 = vmatpush1.msra.mxu0 0.0
  %2911 = vmatprep.subr.mxu0 0.0
  %2912 = vmatpush1.msra.mxu0 0.0
  %2913 = vmatprep.subr.mxu0 0.0
  %2914 = vmatpush1.msra.mxu0 0.0
  %2915 = vmatprep.subr.mxu0 0.0
  %2916 = vmatpush1.msra.mxu0 0.0
  %2917 = vmatprep.subr.mxu0 0.0
  %2918 = vmatpush1.msra.mxu0 0.0
  %2919 = vmatprep.subr.mxu0 0.0
  %2920 = vmatpush1.msra.mxu0 0.0
  %2921 = vmatprep.subr.mxu0 0.0
  %2922 = vmatpush1.msra.mxu0 0.0
  %2923 = vmatprep.mubr.f32.mxu0 0.0
  %2924 = vmatmul.mubr.f32.gmra.mrb[0].mxu0 %v2857
  %v2925 = vpop.f32.mrb[0].mxu0
  %v2926 = vadd.f32 0.0, %v2925
  %v2927 = vpop.f32.mrb[0].mxu0
  %v2928 = vadd.f32 0.0, %v2927
  %2929 = vdwg.mxu0
  %v2930 = vadd.f32 %v2574, %v2926
  %v2931 = vadd.f32 %v2576, %v2928
  %v2933 = vunpack.c.l.s4 1983009808
  %v2934 = vunpack.c.0.s8 %v2933
  %v2935 = vlaneseq
  %v2936 = vshrl.u32 %v2935, 7
  %v2937 = vsub.s32 %v2934, %v2936
  %v2938 = vrot.slane %v460, %v2937
  %v2939 = vcombine.high %v2938, %v2938
  %v2942 = vadd.f32 %v2930, %v2938
  %v2943 = vadd.f32 %v2931, %v2939
  %v2944 = vxor.u32 %v2942, 2147483648
  %v2945 = vxor.u32 %v2943, 2147483648
  %v2946 = vmul.f32 %v2944, 1.442695
  %v2947 = vpow.pop %v2946
  %v2948 = vmul.f32 %v2945, 1.442695
  %v2949 = vpow.pop %v2948
  %v2950 = vadd.f32 %v2947, 1.0
  %v2951 = vadd.f32 %v2949, 1.0
  %v2952 = vrcp.pop %v2950
  %v2953 = vmul.f32 1.0, %v2952
  %v2954 = vrcp.pop %v2951
  %v2955 = vmul.f32 1.0, %v2954
  %v2956 = vtanh.pop %v2943
  %v2957 = vmul.f32 %v2953, %v2473
  %2959 = vrot.lane.b32.xlu0 %v2956, 64
  %v2960 = vpop.permute.xlu0 %2959
  %v2962 = vmul.f32 %v2953, %v2960
  %2964 = vrot.lane.b32.xlu0 %v2962, 64
  %v2965 = vpop.permute.xlu0 %2964
  %v2967 = vadd.f32 %v2957, %v2965
  %v2968 = vtanh.pop %v2967
  %2970 = vrot.lane.b32.xlu0 %v2968, 64
  %v2971 = vpop.permute.xlu0 %2970
  %v2973 = vmul.f32 %v2955, %v2971
  %s2974 = scalar_lea.vmem [#allocation2], 8
  %2975 = vst.msk [vmem:[%s2974] sm:$0x3] %vm999, %v2973
  %v2976 = vlaneseq
  %v2977 = vshrl.u32 %v2976, 7
  %v2978 = vsub.s32 %v731, %v2977
  %v2979 = vrot.slane %v2815, %v2978
  %v2980 = vlaneseq
  %v2981 = vshrl.u32 %v2980, 7
  %v2982 = vsub.s32 %v736, %v2981
  %v2983 = vrot.slane %v2820, %v2982
  %v2984 = vsel %vm741, %v2983, %v2979
  %v2985 = vlaneseq
  %v2986 = vshrl.u32 %v2985, 7
  %v2987 = vsub.s32 %v731, %v2986
  %v2988 = vrot.slane %v2825, %v2987
  %v2989 = vlaneseq
  %v2990 = vshrl.u32 %v2989, 7
  %v2991 = vsub.s32 %v736, %v2990
  %v2992 = vrot.slane %v2830, %v2991
  %v2993 = vsel %vm741, %v2992, %v2988
  %v2994 = vsel %vm92, %v2993, %v2984
  %s2996 = scalar_lea.vmem %s15, 8
  %2997 = vst.msk [vmem:[%s2996] sm:$0x3] %vm754, %v2994
  %v2999 = vsel %vm53, %v2973, 0
  %3001 = vmatprep.subr.mxu0 %v473
  %3002 = vmatpush1.msra.mxu0 %v472
  %3003 = vmatprep.subr.mxu0 %v476
  %3004 = vmatpush1.msra.mxu0 %v475
  %3005 = vmatprep.subr.mxu0 %v479
  %3006 = vmatpush1.msra.mxu0 %v478
  %3007 = vmatprep.subr.mxu0 %v482
  %3008 = vmatpush1.msra.mxu0 %v481
  %3009 = vmatprep.subr.mxu0 %v485
  %3010 = vmatpush1.msra.mxu0 %v484
  %3011 = vmatprep.subr.mxu0 %v488
  %3012 = vmatpush1.msra.mxu0 %v487
  %3013 = vmatprep.subr.mxu0 %v491
  %3014 = vmatpush1.msra.mxu0 %v490
  %3015 = vmatprep.subr.mxu0 %v494
  %3016 = vmatpush1.msra.mxu0 %v493
  %3017 = vmatprep.subr.mxu0 0.0
  %3018 = vmatpush1.msra.mxu0 0.0
  %3019 = vmatprep.subr.mxu0 0.0
  %3020 = vmatpush1.msra.mxu0 0.0
  %3021 = vmatprep.subr.mxu0 0.0
  %3022 = vmatpush1.msra.mxu0 0.0
  %3023 = vmatprep.subr.mxu0 0.0
  %3024 = vmatpush1.msra.mxu0 0.0
  %3025 = vmatprep.subr.mxu0 0.0
  %3026 = vmatpush1.msra.mxu0 0.0
  %3027 = vmatprep.subr.mxu0 0.0
  %3028 = vmatpush1.msra.mxu0 0.0
  %3029 = vmatprep.subr.mxu0 0.0
  %3030 = vmatpush1.msra.mxu0 0.0
  %3031 = vmatprep.subr.mxu0 0.0
  %3032 = vmatpush1.msra.mxu0 0.0
  %3033 = vmatprep.subr.mxu0 0.0
  %3034 = vmatpush1.msra.mxu0 0.0
  %3035 = vmatprep.subr.mxu0 0.0
  %3036 = vmatpush1.msra.mxu0 0.0
  %3037 = vmatprep.subr.mxu0 0.0
  %3038 = vmatpush1.msra.mxu0 0.0
  %3039 = vmatprep.subr.mxu0 0.0
  %3040 = vmatpush1.msra.mxu0 0.0
  %3041 = vmatprep.subr.mxu0 0.0
  %3042 = vmatpush1.msra.mxu0 0.0
  %3043 = vmatprep.subr.mxu0 0.0
  %3044 = vmatpush1.msra.mxu0 0.0
  %3045 = vmatprep.subr.mxu0 0.0
  %3046 = vmatpush1.msra.mxu0 0.0
  %3047 = vmatprep.subr.mxu0 0.0
  %3048 = vmatpush1.msra.mxu0 0.0
  %3049 = vmatprep.subr.mxu0 0.0
  %3050 = vmatpush1.msra.mxu0 0.0
  %3051 = vmatprep.subr.mxu0 0.0
  %3052 = vmatpush1.msra.mxu0 0.0
  %3053 = vmatprep.subr.mxu0 0.0
  %3054 = vmatpush1.msra.mxu0 0.0
  %3055 = vmatprep.subr.mxu0 0.0
  %3056 = vmatpush1.msra.mxu0 0.0
  %3057 = vmatprep.subr.mxu0 0.0
  %3058 = vmatpush1.msra.mxu0 0.0
  %3059 = vmatprep.subr.mxu0 0.0
  %3060 = vmatpush1.msra.mxu0 0.0
  %3061 = vmatprep.subr.mxu0 0.0
  %3062 = vmatpush1.msra.mxu0 0.0
  %3063 = vmatprep.subr.mxu0 0.0
  %3064 = vmatpush1.msra.mxu0 0.0
  %3065 = vmatprep.mubr.f32.mxu0 0.0
  %3066 = vmatmul.mubr.f32.gmra.mrb[0].mxu0 %v2999
  %v3067 = vpop.f32.mrb[0].mxu0
  %v3068 = vadd.f32 0.0, %v3067
  %v3069 = vpop.f32.mrb[0].mxu0
  %v3070 = vadd.f32 0.0, %v3069
  %3071 = vdwg.mxu0
  %3072 = vmatprep.subr.mxu0 0.0
  %3073 = vmatpush1.msra.mxu0 %v474
  %3074 = vmatprep.subr.mxu0 0.0
  %3075 = vmatpush1.msra.mxu0 %v477
  %3076 = vmatprep.subr.mxu0 0.0
  %3077 = vmatpush1.msra.mxu0 %v480
  %3078 = vmatprep.subr.mxu0 0.0
  %3079 = vmatpush1.msra.mxu0 %v483
  %3080 = vmatprep.subr.mxu0 0.0
  %3081 = vmatpush1.msra.mxu0 %v486
  %3082 = vmatprep.subr.mxu0 0.0
  %3083 = vmatpush1.msra.mxu0 %v489
  %3084 = vmatprep.subr.mxu0 0.0
  %3085 = vmatpush1.msra.mxu0 %v492
  %3086 = vmatprep.subr.mxu0 0.0
  %3087 = vmatpush1.msra.mxu0 %v495
  %3088 = vmatprep.subr.mxu0 0.0
  %3089 = vmatpush1.msra.mxu0 0.0
  %3090 = vmatprep.subr.mxu0 0.0
  %3091 = vmatpush1.msra.mxu0 0.0
  %3092 = vmatprep.subr.mxu0 0.0
  %3093 = vmatpush1.msra.mxu0 0.0
  %3094 = vmatprep.subr.mxu0 0.0
  %3095 = vmatpush1.msra.mxu0 0.0
  %3096 = vmatprep.subr.mxu0 0.0
  %3097 = vmatpush1.msra.mxu0 0.0
  %3098 = vmatprep.subr.mxu0 0.0
  %3099 = vmatpush1.msra.mxu0 0.0
  %3100 = vmatprep.subr.mxu0 0.0
  %3101 = vmatpush1.msra.mxu0 0.0
  %3102 = vmatprep.subr.mxu0 0.0
  %3103 = vmatpush1.msra.mxu0 0.0
  %3104 = vmatprep.subr.mxu0 0.0
  %3105 = vmatpush1.msra.mxu0 0.0
  %3106 = vmatprep.subr.mxu0 0.0
  %3107 = vmatpush1.msra.mxu0 0.0
  %3108 = vmatprep.subr.mxu0 0.0
  %3109 = vmatpush1.msra.mxu0 0.0
  %3110 = vmatprep.subr.mxu0 0.0
  %3111 = vmatpush1.msra.mxu0 0.0
  %3112 = vmatprep.subr.mxu0 0.0
  %3113 = vmatpush1.msra.mxu0 0.0
  %3114 = vmatprep.subr.mxu0 0.0
  %3115 = vmatpush1.msra.mxu0 0.0
  %3116 = vmatprep.subr.mxu0 0.0
  %3117 = vmatpush1.msra.mxu0 0.0
  %3118 = vmatprep.subr.mxu0 0.0
  %3119 = vmatpush1.msra.mxu0 0.0
  %3120 = vmatprep.subr.mxu0 0.0
  %3121 = vmatpush1.msra.mxu0 0.0
  %3122 = vmatprep.subr.mxu0 0.0
  %3123 = vmatpush1.msra.mxu0 0.0
  %3124 = vmatprep.subr.mxu0 0.0
  %3125 = vmatpush1.msra.mxu0 0.0
  %3126 = vmatprep.subr.mxu0 0.0
  %3127 = vmatpush1.msra.mxu0 0.0
  %3128 = vmatprep.subr.mxu0 0.0
  %3129 = vmatpush1.msra.mxu0 0.0
  %3130 = vmatprep.subr.mxu0 0.0
  %3131 = vmatpush1.msra.mxu0 0.0
  %3132 = vmatprep.subr.mxu0 0.0
  %3133 = vmatpush1.msra.mxu0 0.0
  %3134 = vmatprep.subr.mxu0 0.0
  %3135 = vmatpush1.msra.mxu0 0.0
  %3136 = vmatprep.mubr.f32.mxu0 0.0
  %3137 = vmatmul.mubr.f32.gmra.mrb[0].mxu0 %v2999
  %v3138 = vpop.f32.mrb[0].mxu0
  %v3139 = vadd.f32 0.0, %v3138
  %v3140 = vpop.f32.mrb[0].mxu0
  %3141 = vdwg.mxu0
  %v3142 = vadd.f32 %v3139, %v660
  %v3145 = vunpack.c.l.s4 1966171168
  %v3146 = vunpack.c.0.s8 %v3145
  %v3147 = vlaneseq
  %v3148 = vshrl.u32 %v3147, 7
  %v3149 = vsub.s32 %v3146, %v3148
  %v3150 = vrot.slane %v3142, %v3149
  %v3151 = vcombine.high %v3150, %v3150
  %v3153 = vunpack.c.l.s4 1966171168
  %v3154 = vunpack.c.0.s8 %v3153
  %v3155 = vlaneseq
  %v3156 = vshrl.u32 %v3155, 7
  %v3157 = vsub.s32 %v3154, %v3156
  %v3158 = vrot.slane %v3150, %v3157
  %v3160 = vunpack.c.l.s4 1966171168
  %v3161 = vunpack.c.0.s8 %v3160
  %v3162 = vlaneseq
  %v3163 = vshrl.u32 %v3162, 7
  %v3164 = vsub.s32 %v3161, %v3163
  %v3165 = vrot.slane %v3151, %v3164
  %v3166 = vlaneseq
  %v3167 = vshrl.u32 %v3166, 7
  %v3168 = vsub.s32 0, %v3167
  %v3169 = vrot.slane %v3158, %v3168
  %v3170 = vlaneseq
  %v3171 = vshrl.u32 %v3170, 7
  %v3172 = vsub.s32 0, %v3171
  %v3173 = vrot.slane %v3165, %v3172
  %v3176 = vadd.f32 %v260, %v3169
  %v3177 = vadd.f32 %v265, %v3169
  %v3178 = vadd.f32 %v270, %v3173
  %v3179 = vadd.f32 %v275, %v3173
  %v3180 = vmax.f32 %v3176, 0.0
  %v3181 = vmax.f32 %v3177, 0.0
  %v3182 = vmax.f32 %v3178, 0.0
  %v3183 = vmax.f32 %v3179, 0.0
  %v3184 = vmul.f32 %v3180, %v708
  %v3185 = vmul.f32 %v3181, %v708
  %v3186 = vmul.f32 %v3182, %v708
  %v3187 = vmul.f32 %v3183, %v708
  %v3188 = vsel %vm348, %v3184, 0.0
  %3189 = vadd.xlane.f32.xlu0 %v3188
  %v3190 = vpop.xlane.xlu0 %3189
  %v3191 = vsel %vm348, %v3185, 0.0
  %3192 = vadd.xlane.f32.xlu0 %v3191
  %v3193 = vpop.xlane.xlu0 %3192
  %v3194 = vsel %vm348, %v3186, 0.0
  %3195 = vadd.xlane.f32.xlu0 %v3194
  %v3196 = vpop.xlane.xlu0 %3195
  %v3197 = vsel %vm348, %v3187, 0.0
  %3198 = vadd.xlane.f32.xlu0 %v3197
  %v3199 = vpop.xlane.xlu0 %3198
  %v3204 = vlaneseq
  %v3205 = vshrl.u32 %v3204, 7
  %v3206 = vsub.s32 %v731, %v3205
  %v3207 = vrot.slane %v3190, %v3206
  %v3208 = vlaneseq
  %v3209 = vshrl.u32 %v3208, 7
  %v3210 = vsub.s32 %v736, %v3209
  %v3211 = vrot.slane %v3193, %v3210
  %v3212 = vsel %vm741, %v3211, %v3207
  %v3213 = vlaneseq
  %v3214 = vshrl.u32 %v3213, 7
  %v3215 = vsub.s32 %v731, %v3214
  %v3216 = vrot.slane %v3196, %v3215
  %v3217 = vlaneseq
  %v3218 = vshrl.u32 %v3217, 7
  %v3219 = vsub.s32 %v736, %v3218
  %v3220 = vrot.slane %v3199, %v3219
  %v3221 = vsel %vm741, %v3220, %v3216
  %v3222 = vsel %vm92, %v3221, %v3212
  %v3224 = vsel %vm754, %v3222, -inf
  %3225 = vmax.xlane.f32.xlu0 %v3224
  %v3226 = vpop.xlane.xlu0 %3225
  %v3228 = vlaneseq
  %v3229 = vshrl.u32 %v3228, 7
  %v3230 = vsub.s32 0, %v3229
  %v3231 = vrot.slane %v3226, %v3230
  %v3232 = vlaneseq
  %v3233 = vshrl.u32 %v3232, 7
  %v3234 = vsub.s32 1, %v3233
  %v3235 = vrot.slane %v3226, %v3234
  %v3238 = vsub.f32 %v3190, %v3231
  %v3239 = vsub.f32 %v3193, %v3231
  %v3240 = vsub.f32 %v3196, %v3235
  %v3241 = vsub.f32 %v3199, %v3235
  %v3242 = vmul.f32 %v3238, 1.442695
  %v3243 = vpow.pop %v3242
  %v3244 = vmul.f32 %v3239, 1.442695
  %v3245 = vpow.pop %v3244
  %v3246 = vmul.f32 %v3240, 1.442695
  %v3247 = vpow.pop %v3246
  %v3248 = vmul.f32 %v3241, 1.442695
  %v3249 = vpow.pop %v3248
  %3254 = vset.pattern.permute.xlu0 0
  %3255 = vperm.xlu0 %3254, %v3243
  %v3256 = vpop.permute.xlu0 %3255
  %3257 = vset.pattern.permute.xlu0 0
  %3258 = vperm.xlu0 %3257, %v3245
  %v3259 = vpop.permute.xlu0 %3258
  %3260 = vset.pattern.permute.xlu0 0
  %3261 = vperm.xlu0 %3260, %v3247
  %v3262 = vpop.permute.xlu0 %3261
  %3263 = vset.pattern.permute.xlu0 0
  %3264 = vperm.xlu0 %3263, %v3249
  %v3265 = vpop.permute.xlu0 %3264
  %v3266 = vlaneseq
  %v3267 = vshrl.u32 %v3266, 7
  %v3268 = vsub.s32 %v731, %v3267
  %v3269 = vrot.slane %v3256, %v3268
  %v3270 = vlaneseq
  %v3271 = vshrl.u32 %v3270, 7
  %v3272 = vsub.s32 %v736, %v3271
  %v3273 = vrot.slane %v3259, %v3272
  %v3274 = vsel %vm741, %v3273, %v3269
  %v3275 = vlaneseq
  %v3276 = vshrl.u32 %v3275, 7
  %v3277 = vsub.s32 %v731, %v3276
  %v3278 = vrot.slane %v3262, %v3277
  %v3279 = vlaneseq
  %v3280 = vshrl.u32 %v3279, 7
  %v3281 = vsub.s32 %v736, %v3280
  %v3282 = vrot.slane %v3265, %v3281
  %v3283 = vsel %vm741, %v3282, %v3278
  %v3284 = vsel %vm92, %v3283, %v3274
  %v3286 = vsel %vm754, %v3284, 0.0
  %3287 = vadd.xlane.f32.xlu0 %v3286
  %v3288 = vpop.xlane.xlu0 %3287
  %v3290 = vlaneseq
  %v3291 = vshrl.u32 %v3290, 7
  %v3292 = vsub.s32 0, %v3291
  %v3293 = vrot.slane %v3288, %v3292
  %v3294 = vlaneseq
  %v3295 = vshrl.u32 %v3294, 7
  %v3296 = vsub.s32 1, %v3295
  %v3297 = vrot.slane %v3288, %v3296
  %v3300 = vrcp.pop %v3293
  %v3301 = vmul.f32 %v3243, %v3300
  %v3302 = vmul.f32 %v3245, %v3300
  %v3303 = vrcp.pop %v3297
  %v3304 = vmul.f32 %v3247, %v3303
  %v3305 = vmul.f32 %v3249, %v3303
  %3307 = vset.pattern.permute.xlu0 0
  %3308 = vperm.xlu0 %3307, %v3301
  %v3309 = vpop.permute.xlu0 %3308
  %3312 = vset.pattern.permute.xlu0 0
  %3313 = vperm.xlu0 %3312, %v3302
  %v3314 = vpop.permute.xlu0 %3313
  %3317 = vset.pattern.permute.xlu0 0
  %3318 = vperm.xlu0 %3317, %v3304
  %v3319 = vpop.permute.xlu0 %3318
  %3322 = vset.pattern.permute.xlu0 0
  %3323 = vperm.xlu0 %3322, %v3305
  %v3324 = vpop.permute.xlu0 %3323
  %v3326 = vmul.f32 %v3309, %v49
  %v3327 = vmul.f32 %v3314, %v50
  %v3328 = vmul.f32 %v3319, %v51
  %v3329 = vmul.f32 %v3324, %v52
  %v3330 = vsel %vm53, %v3326, 0.0
  %v3331 = vsel %vm53, %v3327, 0.0
  %v3332 = vadd.f32 %v3330, %v3331
  %v3333 = vrot.slane %v3332, 4
  %v3334 = vadd.f32 %v3332, %v3333
  %v3335 = vrot.slane %v3334, 2
  %v3336 = vadd.f32 %v3334, %v3335
  %v3337 = vrot.slane %v3336, 1
  %v3338 = vadd.f32 %v3336, %v3337
  %v3339 = vsel %vm53, %v3328, 0.0
  %v3340 = vsel %vm53, %v3329, 0.0
  %v3341 = vadd.f32 %v3339, %v3340
  %v3342 = vrot.slane %v3341, 4
  %v3343 = vadd.f32 %v3341, %v3342
  %v3344 = vrot.slane %v3343, 2
  %v3345 = vadd.f32 %v3343, %v3344
  %v3346 = vrot.slane %v3345, 1
  %v3347 = vadd.f32 %v3345, %v3346
  %v3350 = vsel %vm92, %v3347, %v3338
  %v3351 = vsel %vm53, %v3350, 0
  %3353 = vmatprep.subr.mxu0 %v497
  %3354 = vmatpush1.msra.mxu0 %v496
  %3355 = vmatprep.subr.mxu0 %v499
  %3356 = vmatpush1.msra.mxu0 %v498
  %3357 = vmatprep.subr.mxu0 %v501
  %3358 = vmatpush1.msra.mxu0 %v500
  %3359 = vmatprep.subr.mxu0 %v503
  %3360 = vmatpush1.msra.mxu0 %v502
  %3361 = vmatprep.subr.mxu0 %v505
  %3362 = vmatpush1.msra.mxu0 %v504
  %3363 = vmatprep.subr.mxu0 %v507
  %3364 = vmatpush1.msra.mxu0 %v506
  %3365 = vmatprep.subr.mxu0 %v509
  %3366 = vmatpush1.msra.mxu0 %v508
  %3367 = vmatprep.subr.mxu0 %v511
  %3368 = vmatpush1.msra.mxu0 %v510
  %3369 = vmatprep.subr.mxu0 0.0
  %3370 = vmatpush1.msra.mxu0 0.0
  %3371 = vmatprep.subr.mxu0 0.0
  %3372 = vmatpush1.msra.mxu0 0.0
  %3373 = vmatprep.subr.mxu0 0.0
  %3374 = vmatpush1.msra.mxu0 0.0
  %3375 = vmatprep.subr.mxu0 0.0
  %3376 = vmatpush1.msra.mxu0 0.0
  %3377 = vmatprep.subr.mxu0 0.0
  %3378 = vmatpush1.msra.mxu0 0.0
  %3379 = vmatprep.subr.mxu0 0.0
  %3380 = vmatpush1.msra.mxu0 0.0
  %3381 = vmatprep.subr.mxu0 0.0
  %3382 = vmatpush1.msra.mxu0 0.0
  %3383 = vmatprep.subr.mxu0 0.0
  %3384 = vmatpush1.msra.mxu0 0.0
  %3385 = vmatprep.subr.mxu0 0.0
  %3386 = vmatpush1.msra.mxu0 0.0
  %3387 = vmatprep.subr.mxu0 0.0
  %3388 = vmatpush1.msra.mxu0 0.0
  %3389 = vmatprep.subr.mxu0 0.0
  %3390 = vmatpush1.msra.mxu0 0.0
  %3391 = vmatprep.subr.mxu0 0.0
  %3392 = vmatpush1.msra.mxu0 0.0
  %3393 = vmatprep.subr.mxu0 0.0
  %3394 = vmatpush1.msra.mxu0 0.0
  %3395 = vmatprep.subr.mxu0 0.0
  %3396 = vmatpush1.msra.mxu0 0.0
  %3397 = vmatprep.subr.mxu0 0.0
  %3398 = vmatpush1.msra.mxu0 0.0
  %3399 = vmatprep.subr.mxu0 0.0
  %3400 = vmatpush1.msra.mxu0 0.0
  %3401 = vmatprep.subr.mxu0 0.0
  %3402 = vmatpush1.msra.mxu0 0.0
  %3403 = vmatprep.subr.mxu0 0.0
  %3404 = vmatpush1.msra.mxu0 0.0
  %3405 = vmatprep.subr.mxu0 0.0
  %3406 = vmatpush1.msra.mxu0 0.0
  %3407 = vmatprep.subr.mxu0 0.0
  %3408 = vmatpush1.msra.mxu0 0.0
  %3409 = vmatprep.subr.mxu0 0.0
  %3410 = vmatpush1.msra.mxu0 0.0
  %3411 = vmatprep.subr.mxu0 0.0
  %3412 = vmatpush1.msra.mxu0 0.0
  %3413 = vmatprep.subr.mxu0 0.0
  %3414 = vmatpush1.msra.mxu0 0.0
  %3415 = vmatprep.subr.mxu0 0.0
  %3416 = vmatpush1.msra.mxu0 0.0
  %3417 = vmatprep.mubr.f32.mxu0 0.0
  %3418 = vmatmul.mubr.f32.gmra.mrb[0].mxu0 %v3351
  %v3419 = vpop.f32.mrb[0].mxu0
  %v3420 = vadd.f32 0.0, %v3419
  %v3421 = vpop.f32.mrb[0].mxu0
  %v3422 = vadd.f32 0.0, %v3421
  %3423 = vdwg.mxu0
  %v3424 = vadd.f32 %v3068, %v3420
  %v3425 = vadd.f32 %v3070, %v3422
  %v3427 = vunpack.c.l.s4 1983009808
  %v3428 = vunpack.c.0.s8 %v3427
  %v3429 = vlaneseq
  %v3430 = vshrl.u32 %v3429, 7
  %v3431 = vsub.s32 %v3428, %v3430
  %v3432 = vrot.slane %v468, %v3431
  %v3433 = vcombine.high %v3432, %v3432
  %v3436 = vadd.f32 %v3424, %v3432
  %v3437 = vadd.f32 %v3425, %v3433
  %v3438 = vxor.u32 %v3436, 2147483648
  %v3439 = vxor.u32 %v3437, 2147483648
  %v3440 = vmul.f32 %v3438, 1.442695
  %v3441 = vpow.pop %v3440
  %v3442 = vmul.f32 %v3439, 1.442695
  %v3443 = vpow.pop %v3442
  %v3444 = vadd.f32 %v3441, 1.0
  %v3445 = vadd.f32 %v3443, 1.0
  %v3446 = vrcp.pop %v3444
  %v3447 = vmul.f32 1.0, %v3446
  %v3448 = vrcp.pop %v3445
  %v3449 = vmul.f32 1.0, %v3448
  %v3450 = vtanh.pop %v3437
  %v3451 = vmul.f32 %v3447, %v2967
  %3453 = vrot.lane.b32.xlu0 %v3450, 64
  %v3454 = vpop.permute.xlu0 %3453
  %v3456 = vmul.f32 %v3447, %v3454
  %3458 = vrot.lane.b32.xlu0 %v3456, 64
  %v3459 = vpop.permute.xlu0 %3458
  %v3461 = vadd.f32 %v3451, %v3459
  %v3462 = vtanh.pop %v3461
  %3464 = vrot.lane.b32.xlu0 %v3462, 64
  %v3465 = vpop.permute.xlu0 %3464
  %v3467 = vmul.f32 %v3449, %v3465
  %s3468 = scalar_lea.vmem [#allocation2], 10
  %3469 = vst.msk [vmem:[%s3468] sm:$0x3] %vm999, %v3467
  %v3470 = vlaneseq
  %v3471 = vshrl.u32 %v3470, 7
  %v3472 = vsub.s32 %v731, %v3471
  %v3473 = vrot.slane %v3309, %v3472
  %v3474 = vlaneseq
  %v3475 = vshrl.u32 %v3474, 7
  %v3476 = vsub.s32 %v736, %v3475
  %v3477 = vrot.slane %v3314, %v3476
  %v3478 = vsel %vm741, %v3477, %v3473
  %v3479 = vlaneseq
  %v3480 = vshrl.u32 %v3479, 7
  %v3481 = vsub.s32 %v731, %v3480
  %v3482 = vrot.slane %v3319, %v3481
  %v3483 = vlaneseq
  %v3484 = vshrl.u32 %v3483, 7
  %v3485 = vsub.s32 %v736, %v3484
  %v3486 = vrot.slane %v3324, %v3485
  %v3487 = vsel %vm741, %v3486, %v3482
  %v3488 = vsel %vm92, %v3487, %v3478
  %s3490 = scalar_lea.vmem %s15, 10
  %3491 = vst.msk [vmem:[%s3490] sm:$0x3] %vm754, %v3488
  %v3493 = vsel %vm53, %v3467, 0
  %3495 = vmatprep.subr.mxu0 %v473
  %3496 = vmatpush1.msra.mxu0 %v472
  %3497 = vmatprep.subr.mxu0 %v476
  %3498 = vmatpush1.msra.mxu0 %v475
  %3499 = vmatprep.subr.mxu0 %v479
  %3500 = vmatpush1.msra.mxu0 %v478
  %3501 = vmatprep.subr.mxu0 %v482
  %3502 = vmatpush1.msra.mxu0 %v481
  %3503 = vmatprep.subr.mxu0 %v485
  %3504 = vmatpush1.msra.mxu0 %v484
  %3505 = vmatprep.subr.mxu0 %v488
  %3506 = vmatpush1.msra.mxu0 %v487
  %3507 = vmatprep.subr.mxu0 %v491
  %3508 = vmatpush1.msra.mxu0 %v490
  %3509 = vmatprep.subr.mxu0 %v494
  %3510 = vmatpush1.msra.mxu0 %v493
  %3511 = vmatprep.subr.mxu0 0.0
  %3512 = vmatpush1.msra.mxu0 0.0
  %3513 = vmatprep.subr.mxu0 0.0
  %3514 = vmatpush1.msra.mxu0 0.0
  %3515 = vmatprep.subr.mxu0 0.0
  %3516 = vmatpush1.msra.mxu0 0.0
  %3517 = vmatprep.subr.mxu0 0.0
  %3518 = vmatpush1.msra.mxu0 0.0
  %3519 = vmatprep.subr.mxu0 0.0
  %3520 = vmatpush1.msra.mxu0 0.0
  %3521 = vmatprep.subr.mxu0 0.0
  %3522 = vmatpush1.msra.mxu0 0.0
  %3523 = vmatprep.subr.mxu0 0.0
  %3524 = vmatpush1.msra.mxu0 0.0
  %3525 = vmatprep.subr.mxu0 0.0
  %3526 = vmatpush1.msra.mxu0 0.0
  %3527 = vmatprep.subr.mxu0 0.0
  %3528 = vmatpush1.msra.mxu0 0.0
  %3529 = vmatprep.subr.mxu0 0.0
  %3530 = vmatpush1.msra.mxu0 0.0
  %3531 = vmatprep.subr.mxu0 0.0
  %3532 = vmatpush1.msra.mxu0 0.0
  %3533 = vmatprep.subr.mxu0 0.0
  %3534 = vmatpush1.msra.mxu0 0.0
  %3535 = vmatprep.subr.mxu0 0.0
  %3536 = vmatpush1.msra.mxu0 0.0
  %3537 = vmatprep.subr.mxu0 0.0
  %3538 = vmatpush1.msra.mxu0 0.0
  %3539 = vmatprep.subr.mxu0 0.0
  %3540 = vmatpush1.msra.mxu0 0.0
  %3541 = vmatprep.subr.mxu0 0.0
  %3542 = vmatpush1.msra.mxu0 0.0
  %3543 = vmatprep.subr.mxu0 0.0
  %3544 = vmatpush1.msra.mxu0 0.0
  %3545 = vmatprep.subr.mxu0 0.0
  %3546 = vmatpush1.msra.mxu0 0.0
  %3547 = vmatprep.subr.mxu0 0.0
  %3548 = vmatpush1.msra.mxu0 0.0
  %3549 = vmatprep.subr.mxu0 0.0
  %3550 = vmatpush1.msra.mxu0 0.0
  %3551 = vmatprep.subr.mxu0 0.0
  %3552 = vmatpush1.msra.mxu0 0.0
  %3553 = vmatprep.subr.mxu0 0.0
  %3554 = vmatpush1.msra.mxu0 0.0
  %3555 = vmatprep.subr.mxu0 0.0
  %3556 = vmatpush1.msra.mxu0 0.0
  %3557 = vmatprep.subr.mxu0 0.0
  %3558 = vmatpush1.msra.mxu0 0.0
  %3559 = vmatprep.mubr.f32.mxu0 0.0
  %3560 = vmatmul.mubr.f32.gmra.mrb[0].mxu0 %v3493
  %v3561 = vpop.f32.mrb[0].mxu0
  %v3562 = vadd.f32 0.0, %v3561
  %v3563 = vpop.f32.mrb[0].mxu0
  %v3564 = vadd.f32 0.0, %v3563
  %3565 = vdwg.mxu0
  %3566 = vmatprep.subr.mxu0 0.0
  %3567 = vmatpush1.msra.mxu0 %v474
  %3568 = vmatprep.subr.mxu0 0.0
  %3569 = vmatpush1.msra.mxu0 %v477
  %3570 = vmatprep.subr.mxu0 0.0
  %3571 = vmatpush1.msra.mxu0 %v480
  %3572 = vmatprep.subr.mxu0 0.0
  %3573 = vmatpush1.msra.mxu0 %v483
  %3574 = vmatprep.subr.mxu0 0.0
  %3575 = vmatpush1.msra.mxu0 %v486
  %3576 = vmatprep.subr.mxu0 0.0
  %3577 = vmatpush1.msra.mxu0 %v489
  %3578 = vmatprep.subr.mxu0 0.0
  %3579 = vmatpush1.msra.mxu0 %v492
  %3580 = vmatprep.subr.mxu0 0.0
  %3581 = vmatpush1.msra.mxu0 %v495
  %3582 = vmatprep.subr.mxu0 0.0
  %3583 = vmatpush1.msra.mxu0 0.0
  %3584 = vmatprep.subr.mxu0 0.0
  %3585 = vmatpush1.msra.mxu0 0.0
  %3586 = vmatprep.subr.mxu0 0.0
  %3587 = vmatpush1.msra.mxu0 0.0
  %3588 = vmatprep.subr.mxu0 0.0
  %3589 = vmatpush1.msra.mxu0 0.0
  %3590 = vmatprep.subr.mxu0 0.0
  %3591 = vmatpush1.msra.mxu0 0.0
  %3592 = vmatprep.subr.mxu0 0.0
  %3593 = vmatpush1.msra.mxu0 0.0
  %3594 = vmatprep.subr.mxu0 0.0
  %3595 = vmatpush1.msra.mxu0 0.0
  %3596 = vmatprep.subr.mxu0 0.0
  %3597 = vmatpush1.msra.mxu0 0.0
  %3598 = vmatprep.subr.mxu0 0.0
  %3599 = vmatpush1.msra.mxu0 0.0
  %3600 = vmatprep.subr.mxu0 0.0
  %3601 = vmatpush1.msra.mxu0 0.0
  %3602 = vmatprep.subr.mxu0 0.0
  %3603 = vmatpush1.msra.mxu0 0.0
  %3604 = vmatprep.subr.mxu0 0.0
  %3605 = vmatpush1.msra.mxu0 0.0
  %3606 = vmatprep.subr.mxu0 0.0
  %3607 = vmatpush1.msra.mxu0 0.0
  %3608 = vmatprep.subr.mxu0 0.0
  %3609 = vmatpush1.msra.mxu0 0.0
  %3610 = vmatprep.subr.mxu0 0.0
  %3611 = vmatpush1.msra.mxu0 0.0
  %3612 = vmatprep.subr.mxu0 0.0
  %3613 = vmatpush1.msra.mxu0 0.0
  %3614 = vmatprep.subr.mxu0 0.0
  %3615 = vmatpush1.msra.mxu0 0.0
  %3616 = vmatprep.subr.mxu0 0.0
  %3617 = vmatpush1.msra.mxu0 0.0
  %3618 = vmatprep.subr.mxu0 0.0
  %3619 = vmatpush1.msra.mxu0 0.0
  %3620 = vmatprep.subr.mxu0 0.0
  %3621 = vmatpush1.msra.mxu0 0.0
  %3622 = vmatprep.subr.mxu0 0.0
  %3623 = vmatpush1.msra.mxu0 0.0
  %3624 = vmatprep.subr.mxu0 0.0
  %3625 = vmatpush1.msra.mxu0 0.0
  %3626 = vmatprep.subr.mxu0 0.0
  %3627 = vmatpush1.msra.mxu0 0.0
  %3628 = vmatprep.subr.mxu0 0.0
  %3629 = vmatpush1.msra.mxu0 0.0
  %3630 = vmatprep.mubr.f32.mxu0 0.0
  %3631 = vmatmul.mubr.f32.gmra.mrb[0].mxu0 %v3493
  %v3632 = vpop.f32.mrb[0].mxu0
  %v3633 = vadd.f32 0.0, %v3632
  %v3634 = vpop.f32.mrb[0].mxu0
  %3635 = vdwg.mxu0
  %v3636 = vadd.f32 %v3633, %v660
  %v3639 = vunpack.c.l.s4 1966171168
  %v3640 = vunpack.c.0.s8 %v3639
  %v3641 = vlaneseq
  %v3642 = vshrl.u32 %v3641, 7
  %v3643 = vsub.s32 %v3640, %v3642
  %v3644 = vrot.slane %v3636, %v3643
  %v3645 = vcombine.high %v3644, %v3644
  %v3647 = vunpack.c.l.s4 1966171168
  %v3648 = vunpack.c.0.s8 %v3647
  %v3649 = vlaneseq
  %v3650 = vshrl.u32 %v3649, 7
  %v3651 = vsub.s32 %v3648, %v3650
  %v3652 = vrot.slane %v3644, %v3651
  %v3654 = vunpack.c.l.s4 1966171168
  %v3655 = vunpack.c.0.s8 %v3654
  %v3656 = vlaneseq
  %v3657 = vshrl.u32 %v3656, 7
  %v3658 = vsub.s32 %v3655, %v3657
  %v3659 = vrot.slane %v3645, %v3658
  %v3660 = vlaneseq
  %v3661 = vshrl.u32 %v3660, 7
  %v3662 = vsub.s32 0, %v3661
  %v3663 = vrot.slane %v3652, %v3662
  %v3664 = vlaneseq
  %v3665 = vshrl.u32 %v3664, 7
  %v3666 = vsub.s32 0, %v3665
  %v3667 = vrot.slane %v3659, %v3666
  %v3670 = vadd.f32 %v260, %v3663
  %v3671 = vadd.f32 %v265, %v3663
  %v3672 = vadd.f32 %v270, %v3667
  %v3673 = vadd.f32 %v275, %v3667
  %v3674 = vmax.f32 %v3670, 0.0
  %v3675 = vmax.f32 %v3671, 0.0
  %v3676 = vmax.f32 %v3672, 0.0
  %v3677 = vmax.f32 %v3673, 0.0
  %v3678 = vmul.f32 %v3674, %v708
  %v3679 = vmul.f32 %v3675, %v708
  %v3680 = vmul.f32 %v3676, %v708
  %v3681 = vmul.f32 %v3677, %v708
  %v3682 = vsel %vm348, %v3678, 0.0
  %3683 = vadd.xlane.f32.xlu0 %v3682
  %v3684 = vpop.xlane.xlu0 %3683
  %v3685 = vsel %vm348, %v3679, 0.0
  %3686 = vadd.xlane.f32.xlu0 %v3685
  %v3687 = vpop.xlane.xlu0 %3686
  %v3688 = vsel %vm348, %v3680, 0.0
  %3689 = vadd.xlane.f32.xlu0 %v3688
  %v3690 = vpop.xlane.xlu0 %3689
  %v3691 = vsel %vm348, %v3681, 0.0
  %3692 = vadd.xlane.f32.xlu0 %v3691
  %v3693 = vpop.xlane.xlu0 %3692
  %v3698 = vlaneseq
  %v3699 = vshrl.u32 %v3698, 7
  %v3700 = vsub.s32 %v731, %v3699
  %v3701 = vrot.slane %v3684, %v3700
  %v3702 = vlaneseq
  %v3703 = vshrl.u32 %v3702, 7
  %v3704 = vsub.s32 %v736, %v3703
  %v3705 = vrot.slane %v3687, %v3704
  %v3706 = vsel %vm741, %v3705, %v3701
  %v3707 = vlaneseq
  %v3708 = vshrl.u32 %v3707, 7
  %v3709 = vsub.s32 %v731, %v3708
  %v3710 = vrot.slane %v3690, %v3709
  %v3711 = vlaneseq
  %v3712 = vshrl.u32 %v3711, 7
  %v3713 = vsub.s32 %v736, %v3712
  %v3714 = vrot.slane %v3693, %v3713
  %v3715 = vsel %vm741, %v3714, %v3710
  %v3716 = vsel %vm92, %v3715, %v3706
  %v3718 = vsel %vm754, %v3716, -inf
  %3719 = vmax.xlane.f32.xlu0 %v3718
  %v3720 = vpop.xlane.xlu0 %3719
  %v3722 = vlaneseq
  %v3723 = vshrl.u32 %v3722, 7
  %v3724 = vsub.s32 0, %v3723
  %v3725 = vrot.slane %v3720, %v3724
  %v3726 = vlaneseq
  %v3727 = vshrl.u32 %v3726, 7
  %v3728 = vsub.s32 1, %v3727
  %v3729 = vrot.slane %v3720, %v3728
  %v3732 = vsub.f32 %v3684, %v3725
  %v3733 = vsub.f32 %v3687, %v3725
  %v3734 = vsub.f32 %v3690, %v3729
  %v3735 = vsub.f32 %v3693, %v3729
  %v3736 = vmul.f32 %v3732, 1.442695
  %v3737 = vpow.pop %v3736
  %v3738 = vmul.f32 %v3733, 1.442695
  %v3739 = vpow.pop %v3738
  %v3740 = vmul.f32 %v3734, 1.442695
  %v3741 = vpow.pop %v3740
  %v3742 = vmul.f32 %v3735, 1.442695
  %v3743 = vpow.pop %v3742
  %3748 = vset.pattern.permute.xlu0 0
  %3749 = vperm.xlu0 %3748, %v3737
  %v3750 = vpop.permute.xlu0 %3749
  %3751 = vset.pattern.permute.xlu0 0
  %3752 = vperm.xlu0 %3751, %v3739
  %v3753 = vpop.permute.xlu0 %3752
  %3754 = vset.pattern.permute.xlu0 0
  %3755 = vperm.xlu0 %3754, %v3741
  %v3756 = vpop.permute.xlu0 %3755
  %3757 = vset.pattern.permute.xlu0 0
  %3758 = vperm.xlu0 %3757, %v3743
  %v3759 = vpop.permute.xlu0 %3758
  %v3760 = vlaneseq
  %v3761 = vshrl.u32 %v3760, 7
  %v3762 = vsub.s32 %v731, %v3761
  %v3763 = vrot.slane %v3750, %v3762
  %v3764 = vlaneseq
  %v3765 = vshrl.u32 %v3764, 7
  %v3766 = vsub.s32 %v736, %v3765
  %v3767 = vrot.slane %v3753, %v3766
  %v3768 = vsel %vm741, %v3767, %v3763
  %v3769 = vlaneseq
  %v3770 = vshrl.u32 %v3769, 7
  %v3771 = vsub.s32 %v731, %v3770
  %v3772 = vrot.slane %v3756, %v3771
  %v3773 = vlaneseq
  %v3774 = vshrl.u32 %v3773, 7
  %v3775 = vsub.s32 %v736, %v3774
  %v3776 = vrot.slane %v3759, %v3775
  %v3777 = vsel %vm741, %v3776, %v3772
  %v3778 = vsel %vm92, %v3777, %v3768
  %v3780 = vsel %vm754, %v3778, 0.0
  %3781 = vadd.xlane.f32.xlu0 %v3780
  %v3782 = vpop.xlane.xlu0 %3781
  %v3784 = vlaneseq
  %v3785 = vshrl.u32 %v3784, 7
  %v3786 = vsub.s32 0, %v3785
  %v3787 = vrot.slane %v3782, %v3786
  %v3788 = vlaneseq
  %v3789 = vshrl.u32 %v3788, 7
  %v3790 = vsub.s32 1, %v3789
  %v3791 = vrot.slane %v3782, %v3790
  %v3794 = vrcp.pop %v3787
  %v3795 = vmul.f32 %v3737, %v3794
  %v3796 = vmul.f32 %v3739, %v3794
  %v3797 = vrcp.pop %v3791
  %v3798 = vmul.f32 %v3741, %v3797
  %v3799 = vmul.f32 %v3743, %v3797
  %3801 = vset.pattern.permute.xlu0 0
  %3802 = vperm.xlu0 %3801, %v3795
  %v3803 = vpop.permute.xlu0 %3802
  %3806 = vset.pattern.permute.xlu0 0
  %3807 = vperm.xlu0 %3806, %v3796
  %v3808 = vpop.permute.xlu0 %3807
  %3811 = vset.pattern.permute.xlu0 0
  %3812 = vperm.xlu0 %3811, %v3798
  %v3813 = vpop.permute.xlu0 %3812
  %3816 = vset.pattern.permute.xlu0 0
  %3817 = vperm.xlu0 %3816, %v3799
  %v3818 = vpop.permute.xlu0 %3817
  %v3820 = vmul.f32 %v3803, %v49
  %v3821 = vmul.f32 %v3808, %v50
  %v3822 = vmul.f32 %v3813, %v51
  %v3823 = vmul.f32 %v3818, %v52
  %v3824 = vsel %vm53, %v3820, 0.0
  %v3825 = vsel %vm53, %v3821, 0.0
  %v3826 = vadd.f32 %v3824, %v3825
  %v3827 = vrot.slane %v3826, 4
  %v3828 = vadd.f32 %v3826, %v3827
  %v3829 = vrot.slane %v3828, 2
  %v3830 = vadd.f32 %v3828, %v3829
  %v3831 = vrot.slane %v3830, 1
  %v3832 = vadd.f32 %v3830, %v3831
  %v3833 = vsel %vm53, %v3822, 0.0
  %v3834 = vsel %vm53, %v3823, 0.0
  %v3835 = vadd.f32 %v3833, %v3834
  %v3836 = vrot.slane %v3835, 4
  %v3837 = vadd.f32 %v3835, %v3836
  %v3838 = vrot.slane %v3837, 2
  %v3839 = vadd.f32 %v3837, %v3838
  %v3840 = vrot.slane %v3839, 1
  %v3841 = vadd.f32 %v3839, %v3840
  %v3844 = vsel %vm92, %v3841, %v3832
  %v3845 = vsel %vm53, %v3844, 0
  %3847 = vmatprep.subr.mxu0 %v497
  %3848 = vmatpush1.msra.mxu0 %v496
  %3849 = vmatprep.subr.mxu0 %v499
  %3850 = vmatpush1.msra.mxu0 %v498
  %3851 = vmatprep.subr.mxu0 %v501
  %3852 = vmatpush1.msra.mxu0 %v500
  %3853 = vmatprep.subr.mxu0 %v503
  %3854 = vmatpush1.msra.mxu0 %v502
  %3855 = vmatprep.subr.mxu0 %v505
  %3856 = vmatpush1.msra.mxu0 %v504
  %3857 = vmatprep.subr.mxu0 %v507
  %3858 = vmatpush1.msra.mxu0 %v506
  %3859 = vmatprep.subr.mxu0 %v509
  %3860 = vmatpush1.msra.mxu0 %v508
  %3861 = vmatprep.subr.mxu0 %v511
  %3862 = vmatpush1.msra.mxu0 %v510
  %3863 = vmatprep.subr.mxu0 0.0
  %3864 = vmatpush1.msra.mxu0 0.0
  %3865 = vmatprep.subr.mxu0 0.0
  %3866 = vmatpush1.msra.mxu0 0.0
  %3867 = vmatprep.subr.mxu0 0.0
  %3868 = vmatpush1.msra.mxu0 0.0
  %3869 = vmatprep.subr.mxu0 0.0
  %3870 = vmatpush1.msra.mxu0 0.0
  %3871 = vmatprep.subr.mxu0 0.0
  %3872 = vmatpush1.msra.mxu0 0.0
  %3873 = vmatprep.subr.mxu0 0.0
  %3874 = vmatpush1.msra.mxu0 0.0
  %3875 = vmatprep.subr.mxu0 0.0
  %3876 = vmatpush1.msra.mxu0 0.0
  %3877 = vmatprep.subr.mxu0 0.0
  %3878 = vmatpush1.msra.mxu0 0.0
  %3879 = vmatprep.subr.mxu0 0.0
  %3880 = vmatpush1.msra.mxu0 0.0
  %3881 = vmatprep.subr.mxu0 0.0
  %3882 = vmatpush1.msra.mxu0 0.0
  %3883 = vmatprep.subr.mxu0 0.0
  %3884 = vmatpush1.msra.mxu0 0.0
  %3885 = vmatprep.subr.mxu0 0.0
  %3886 = vmatpush1.msra.mxu0 0.0
  %3887 = vmatprep.subr.mxu0 0.0
  %3888 = vmatpush1.msra.mxu0 0.0
  %3889 = vmatprep.subr.mxu0 0.0
  %3890 = vmatpush1.msra.mxu0 0.0
  %3891 = vmatprep.subr.mxu0 0.0
  %3892 = vmatpush1.msra.mxu0 0.0
  %3893 = vmatprep.subr.mxu0 0.0
  %3894 = vmatpush1.msra.mxu0 0.0
  %3895 = vmatprep.subr.mxu0 0.0
  %3896 = vmatpush1.msra.mxu0 0.0
  %3897 = vmatprep.subr.mxu0 0.0
  %3898 = vmatpush1.msra.mxu0 0.0
  %3899 = vmatprep.subr.mxu0 0.0
  %3900 = vmatpush1.msra.mxu0 0.0
  %3901 = vmatprep.subr.mxu0 0.0
  %3902 = vmatpush1.msra.mxu0 0.0
  %3903 = vmatprep.subr.mxu0 0.0
  %3904 = vmatpush1.msra.mxu0 0.0
  %3905 = vmatprep.subr.mxu0 0.0
  %3906 = vmatpush1.msra.mxu0 0.0
  %3907 = vmatprep.subr.mxu0 0.0
  %3908 = vmatpush1.msra.mxu0 0.0
  %3909 = vmatprep.subr.mxu0 0.0
  %3910 = vmatpush1.msra.mxu0 0.0
  %3911 = vmatprep.mubr.f32.mxu0 0.0
  %3912 = vmatmul.mubr.f32.gmra.mrb[0].mxu0 %v3845
  %v3913 = vpop.f32.mrb[0].mxu0
  %v3914 = vadd.f32 0.0, %v3913
  %v3915 = vpop.f32.mrb[0].mxu0
  %v3916 = vadd.f32 0.0, %v3915
  %3917 = vdwg.mxu0
  %v3918 = vadd.f32 %v3562, %v3914
  %v3919 = vadd.f32 %v3564, %v3916
  %v3921 = vunpack.c.l.s4 1983009808
  %v3922 = vunpack.c.0.s8 %v3921
  %v3923 = vlaneseq
  %v3924 = vshrl.u32 %v3923, 7
  %v3925 = vsub.s32 %v3922, %v3924
  %v3926 = vrot.slane %v467, %v3925
  %v3927 = vcombine.high %v3926, %v3926
  %v3930 = vadd.f32 %v3918, %v3926
  %v3931 = vadd.f32 %v3919, %v3927
  %v3932 = vxor.u32 %v3930, 2147483648
  %v3933 = vxor.u32 %v3931, 2147483648
  %v3934 = vmul.f32 %v3932, 1.442695
  %v3935 = vpow.pop %v3934
  %v3936 = vmul.f32 %v3933, 1.442695
  %v3937 = vpow.pop %v3936
  %v3938 = vadd.f32 %v3935, 1.0
  %v3939 = vadd.f32 %v3937, 1.0
  %v3940 = vrcp.pop %v3938
  %v3941 = vmul.f32 1.0, %v3940
  %v3942 = vrcp.pop %v3939
  %v3943 = vmul.f32 1.0, %v3942
  %v3944 = vtanh.pop %v3931
  %v3945 = vmul.f32 %v3941, %v3461
  %3947 = vrot.lane.b32.xlu0 %v3944, 64
  %v3948 = vpop.permute.xlu0 %3947
  %v3950 = vmul.f32 %v3941, %v3948
  %3952 = vrot.lane.b32.xlu0 %v3950, 64
  %v3953 = vpop.permute.xlu0 %3952
  %v3955 = vadd.f32 %v3945, %v3953
  %v3956 = vtanh.pop %v3955
  %3958 = vrot.lane.b32.xlu0 %v3956, 64
  %v3959 = vpop.permute.xlu0 %3958
  %v3961 = vmul.f32 %v3943, %v3959
  %s3962 = scalar_lea.vmem [#allocation2], 12
  %3963 = vst.msk [vmem:[%s3962] sm:$0x3] %vm999, %v3961
  %v3964 = vlaneseq
  %v3965 = vshrl.u32 %v3964, 7
  %v3966 = vsub.s32 %v731, %v3965
  %v3967 = vrot.slane %v3803, %v3966
  %v3968 = vlaneseq
  %v3969 = vshrl.u32 %v3968, 7
  %v3970 = vsub.s32 %v736, %v3969
  %v3971 = vrot.slane %v3808, %v3970
  %v3972 = vsel %vm741, %v3971, %v3967
  %v3973 = vlaneseq
  %v3974 = vshrl.u32 %v3973, 7
  %v3975 = vsub.s32 %v731, %v3974
  %v3976 = vrot.slane %v3813, %v3975
  %v3977 = vlaneseq
  %v3978 = vshrl.u32 %v3977, 7
  %v3979 = vsub.s32 %v736, %v3978
  %v3980 = vrot.slane %v3818, %v3979
  %v3981 = vsel %vm741, %v3980, %v3976
  %v3982 = vsel %vm92, %v3981, %v3972
  %s3984 = scalar_lea.vmem %s15, 12
  %3985 = vst.msk [vmem:[%s3984] sm:$0x3] %vm754, %v3982
  %v3987 = vsel %vm53, %v3961, 0
  %3989 = vmatprep.subr.mxu0 %v473
  %3990 = vmatpush1.msra.mxu0 %v472
  %3991 = vmatprep.subr.mxu0 %v476
  %3992 = vmatpush1.msra.mxu0 %v475
  %3993 = vmatprep.subr.mxu0 %v479
  %3994 = vmatpush1.msra.mxu0 %v478
  %3995 = vmatprep.subr.mxu0 %v482
  %3996 = vmatpush1.msra.mxu0 %v481
  %3997 = vmatprep.subr.mxu0 %v485
  %3998 = vmatpush1.msra.mxu0 %v484
  %3999 = vmatprep.subr.mxu0 %v488
  %4000 = vmatpush1.msra.mxu0 %v487
  %4001 = vmatprep.subr.mxu0 %v491
  %4002 = vmatpush1.msra.mxu0 %v490
  %4003 = vmatprep.subr.mxu0 %v494
  %4004 = vmatpush1.msra.mxu0 %v493
  %4005 = vmatprep.subr.mxu0 0.0
  %4006 = vmatpush1.msra.mxu0 0.0
  %4007 = vmatprep.subr.mxu0 0.0
  %4008 = vmatpush1.msra.mxu0 0.0
  %4009 = vmatprep.subr.mxu0 0.0
  %4010 = vmatpush1.msra.mxu0 0.0
  %4011 = vmatprep.subr.mxu0 0.0
  %4012 = vmatpush1.msra.mxu0 0.0
  %4013 = vmatprep.subr.mxu0 0.0
  %4014 = vmatpush1.msra.mxu0 0.0
  %4015 = vmatprep.subr.mxu0 0.0
  %4016 = vmatpush1.msra.mxu0 0.0
  %4017 = vmatprep.subr.mxu0 0.0
  %4018 = vmatpush1.msra.mxu0 0.0
  %4019 = vmatprep.subr.mxu0 0.0
  %4020 = vmatpush1.msra.mxu0 0.0
  %4021 = vmatprep.subr.mxu0 0.0
  %4022 = vmatpush1.msra.mxu0 0.0
  %4023 = vmatprep.subr.mxu0 0.0
  %4024 = vmatpush1.msra.mxu0 0.0
  %4025 = vmatprep.subr.mxu0 0.0
  %4026 = vmatpush1.msra.mxu0 0.0
  %4027 = vmatprep.subr.mxu0 0.0
  %4028 = vmatpush1.msra.mxu0 0.0
  %4029 = vmatprep.subr.mxu0 0.0
  %4030 = vmatpush1.msra.mxu0 0.0
  %4031 = vmatprep.subr.mxu0 0.0
  %4032 = vmatpush1.msra.mxu0 0.0
  %4033 = vmatprep.subr.mxu0 0.0
  %4034 = vmatpush1.msra.mxu0 0.0
  %4035 = vmatprep.subr.mxu0 0.0
  %4036 = vmatpush1.msra.mxu0 0.0
  %4037 = vmatprep.subr.mxu0 0.0
  %4038 = vmatpush1.msra.mxu0 0.0
  %4039 = vmatprep.subr.mxu0 0.0
  %4040 = vmatpush1.msra.mxu0 0.0
  %4041 = vmatprep.subr.mxu0 0.0
  %4042 = vmatpush1.msra.mxu0 0.0
  %4043 = vmatprep.subr.mxu0 0.0
  %4044 = vmatpush1.msra.mxu0 0.0
  %4045 = vmatprep.subr.mxu0 0.0
  %4046 = vmatpush1.msra.mxu0 0.0
  %4047 = vmatprep.subr.mxu0 0.0
  %4048 = vmatpush1.msra.mxu0 0.0
  %4049 = vmatprep.subr.mxu0 0.0
  %4050 = vmatpush1.msra.mxu0 0.0
  %4051 = vmatprep.subr.mxu0 0.0
  %4052 = vmatpush1.msra.mxu0 0.0
  %4053 = vmatprep.mubr.f32.mxu0 0.0
  %4054 = vmatmul.mubr.f32.gmra.mrb[0].mxu0 %v3987
  %v4055 = vpop.f32.mrb[0].mxu0
  %v4056 = vadd.f32 0.0, %v4055
  %v4057 = vpop.f32.mrb[0].mxu0
  %v4058 = vadd.f32 0.0, %v4057
  %4059 = vdwg.mxu0
  %4060 = vmatprep.subr.mxu0 0.0
  %4061 = vmatpush1.msra.mxu0 %v474
  %4062 = vmatprep.subr.mxu0 0.0
  %4063 = vmatpush1.msra.mxu0 %v477
  %4064 = vmatprep.subr.mxu0 0.0
  %4065 = vmatpush1.msra.mxu0 %v480
  %4066 = vmatprep.subr.mxu0 0.0
  %4067 = vmatpush1.msra.mxu0 %v483
  %4068 = vmatprep.subr.mxu0 0.0
  %4069 = vmatpush1.msra.mxu0 %v486
  %4070 = vmatprep.subr.mxu0 0.0
  %4071 = vmatpush1.msra.mxu0 %v489
  %4072 = vmatprep.subr.mxu0 0.0
  %4073 = vmatpush1.msra.mxu0 %v492
  %4074 = vmatprep.subr.mxu0 0.0
  %4075 = vmatpush1.msra.mxu0 %v495
  %4076 = vmatprep.subr.mxu0 0.0
  %4077 = vmatpush1.msra.mxu0 0.0
  %4078 = vmatprep.subr.mxu0 0.0
  %4079 = vmatpush1.msra.mxu0 0.0
  %4080 = vmatprep.subr.mxu0 0.0
  %4081 = vmatpush1.msra.mxu0 0.0
  %4082 = vmatprep.subr.mxu0 0.0
  %4083 = vmatpush1.msra.mxu0 0.0
  %4084 = vmatprep.subr.mxu0 0.0
  %4085 = vmatpush1.msra.mxu0 0.0
  %4086 = vmatprep.subr.mxu0 0.0
  %4087 = vmatpush1.msra.mxu0 0.0
  %4088 = vmatprep.subr.mxu0 0.0
  %4089 = vmatpush1.msra.mxu0 0.0
  %4090 = vmatprep.subr.mxu0 0.0
  %4091 = vmatpush1.msra.mxu0 0.0
  %4092 = vmatprep.subr.mxu0 0.0
  %4093 = vmatpush1.msra.mxu0 0.0
  %4094 = vmatprep.subr.mxu0 0.0
  %4095 = vmatpush1.msra.mxu0 0.0
  %4096 = vmatprep.subr.mxu0 0.0
  %4097 = vmatpush1.msra.mxu0 0.0
  %4098 = vmatprep.subr.mxu0 0.0
  %4099 = vmatpush1.msra.mxu0 0.0
  %4100 = vmatprep.subr.mxu0 0.0
  %4101 = vmatpush1.msra.mxu0 0.0
  %4102 = vmatprep.subr.mxu0 0.0
  %4103 = vmatpush1.msra.mxu0 0.0
  %4104 = vmatprep.subr.mxu0 0.0
  %4105 = vmatpush1.msra.mxu0 0.0
  %4106 = vmatprep.subr.mxu0 0.0
  %4107 = vmatpush1.msra.mxu0 0.0
  %4108 = vmatprep.subr.mxu0 0.0
  %4109 = vmatpush1.msra.mxu0 0.0
  %4110 = vmatprep.subr.mxu0 0.0
  %4111 = vmatpush1.msra.mxu0 0.0
  %4112 = vmatprep.subr.mxu0 0.0
  %4113 = vmatpush1.msra.mxu0 0.0
  %4114 = vmatprep.subr.mxu0 0.0
  %4115 = vmatpush1.msra.mxu0 0.0
  %4116 = vmatprep.subr.mxu0 0.0
  %4117 = vmatpush1.msra.mxu0 0.0
  %4118 = vmatprep.subr.mxu0 0.0
  %4119 = vmatpush1.msra.mxu0 0.0
  %4120 = vmatprep.subr.mxu0 0.0
  %4121 = vmatpush1.msra.mxu0 0.0
  %4122 = vmatprep.subr.mxu0 0.0
  %4123 = vmatpush1.msra.mxu0 0.0
  %4124 = vmatprep.mubr.f32.mxu0 0.0
  %4125 = vmatmul.mubr.f32.gmra.mrb[0].mxu0 %v3987
  %v4126 = vpop.f32.mrb[0].mxu0
  %v4127 = vadd.f32 0.0, %v4126
  %v4128 = vpop.f32.mrb[0].mxu0
  %4129 = vdwg.mxu0
  %v4130 = vadd.f32 %v4127, %v660
  %v4133 = vunpack.c.l.s4 1966171168
  %v4134 = vunpack.c.0.s8 %v4133
  %v4135 = vlaneseq
  %v4136 = vshrl.u32 %v4135, 7
  %v4137 = vsub.s32 %v4134, %v4136
  %v4138 = vrot.slane %v4130, %v4137
  %v4139 = vcombine.high %v4138, %v4138
  %v4141 = vunpack.c.l.s4 1966171168
  %v4142 = vunpack.c.0.s8 %v4141
  %v4143 = vlaneseq
  %v4144 = vshrl.u32 %v4143, 7
  %v4145 = vsub.s32 %v4142, %v4144
  %v4146 = vrot.slane %v4138, %v4145
  %v4148 = vunpack.c.l.s4 1966171168
  %v4149 = vunpack.c.0.s8 %v4148
  %v4150 = vlaneseq
  %v4151 = vshrl.u32 %v4150, 7
  %v4152 = vsub.s32 %v4149, %v4151
  %v4153 = vrot.slane %v4139, %v4152
  %v4154 = vlaneseq
  %v4155 = vshrl.u32 %v4154, 7
  %v4156 = vsub.s32 0, %v4155
  %v4157 = vrot.slane %v4146, %v4156
  %v4158 = vlaneseq
  %v4159 = vshrl.u32 %v4158, 7
  %v4160 = vsub.s32 0, %v4159
  %v4161 = vrot.slane %v4153, %v4160
  %v4164 = vadd.f32 %v260, %v4157
  %v4165 = vadd.f32 %v265, %v4157
  %v4166 = vadd.f32 %v270, %v4161
  %v4167 = vadd.f32 %v275, %v4161
  %v4168 = vmax.f32 %v4164, 0.0
  %v4169 = vmax.f32 %v4165, 0.0
  %v4170 = vmax.f32 %v4166, 0.0
  %v4171 = vmax.f32 %v4167, 0.0
  %v4172 = vmul.f32 %v4168, %v708
  %v4173 = vmul.f32 %v4169, %v708
  %v4174 = vmul.f32 %v4170, %v708
  %v4175 = vmul.f32 %v4171, %v708
  %v4176 = vsel %vm348, %v4172, 0.0
  %4177 = vadd.xlane.f32.xlu0 %v4176
  %v4178 = vpop.xlane.xlu0 %4177
  %v4179 = vsel %vm348, %v4173, 0.0
  %4180 = vadd.xlane.f32.xlu0 %v4179
  %v4181 = vpop.xlane.xlu0 %4180
  %v4182 = vsel %vm348, %v4174, 0.0
  %4183 = vadd.xlane.f32.xlu0 %v4182
  %v4184 = vpop.xlane.xlu0 %4183
  %v4185 = vsel %vm348, %v4175, 0.0
  %4186 = vadd.xlane.f32.xlu0 %v4185
  %v4187 = vpop.xlane.xlu0 %4186
  %v4192 = vlaneseq
  %v4193 = vshrl.u32 %v4192, 7
  %v4194 = vsub.s32 %v731, %v4193
  %v4195 = vrot.slane %v4178, %v4194
  %v4196 = vlaneseq
  %v4197 = vshrl.u32 %v4196, 7
  %v4198 = vsub.s32 %v736, %v4197
  %v4199 = vrot.slane %v4181, %v4198
  %v4200 = vsel %vm741, %v4199, %v4195
  %v4201 = vlaneseq
  %v4202 = vshrl.u32 %v4201, 7
  %v4203 = vsub.s32 %v731, %v4202
  %v4204 = vrot.slane %v4184, %v4203
  %v4205 = vlaneseq
  %v4206 = vshrl.u32 %v4205, 7
  %v4207 = vsub.s32 %v736, %v4206
  %v4208 = vrot.slane %v4187, %v4207
  %v4209 = vsel %vm741, %v4208, %v4204
  %v4210 = vsel %vm92, %v4209, %v4200
  %v4212 = vsel %vm754, %v4210, -inf
  %4213 = vmax.xlane.f32.xlu0 %v4212
  %v4214 = vpop.xlane.xlu0 %4213
  %v4216 = vlaneseq
  %v4217 = vshrl.u32 %v4216, 7
  %v4218 = vsub.s32 0, %v4217
  %v4219 = vrot.slane %v4214, %v4218
  %v4220 = vlaneseq
  %v4221 = vshrl.u32 %v4220, 7
  %v4222 = vsub.s32 1, %v4221
  %v4223 = vrot.slane %v4214, %v4222
  %v4226 = vsub.f32 %v4178, %v4219
  %v4227 = vsub.f32 %v4181, %v4219
  %v4228 = vsub.f32 %v4184, %v4223
  %v4229 = vsub.f32 %v4187, %v4223
  %v4230 = vmul.f32 %v4226, 1.442695
  %v4231 = vpow.pop %v4230
  %v4232 = vmul.f32 %v4227, 1.442695
  %v4233 = vpow.pop %v4232
  %v4234 = vmul.f32 %v4228, 1.442695
  %v4235 = vpow.pop %v4234
  %v4236 = vmul.f32 %v4229, 1.442695
  %v4237 = vpow.pop %v4236
  %4242 = vset.pattern.permute.xlu0 0
  %4243 = vperm.xlu0 %4242, %v4231
  %v4244 = vpop.permute.xlu0 %4243
  %4245 = vset.pattern.permute.xlu0 0
  %4246 = vperm.xlu0 %4245, %v4233
  %v4247 = vpop.permute.xlu0 %4246
  %4248 = vset.pattern.permute.xlu0 0
  %4249 = vperm.xlu0 %4248, %v4235
  %v4250 = vpop.permute.xlu0 %4249
  %4251 = vset.pattern.permute.xlu0 0
  %4252 = vperm.xlu0 %4251, %v4237
  %v4253 = vpop.permute.xlu0 %4252
  %v4254 = vlaneseq
  %v4255 = vshrl.u32 %v4254, 7
  %v4256 = vsub.s32 %v731, %v4255
  %v4257 = vrot.slane %v4244, %v4256
  %v4258 = vlaneseq
  %v4259 = vshrl.u32 %v4258, 7
  %v4260 = vsub.s32 %v736, %v4259
  %v4261 = vrot.slane %v4247, %v4260
  %v4262 = vsel %vm741, %v4261, %v4257
  %v4263 = vlaneseq
  %v4264 = vshrl.u32 %v4263, 7
  %v4265 = vsub.s32 %v731, %v4264
  %v4266 = vrot.slane %v4250, %v4265
  %v4267 = vlaneseq
  %v4268 = vshrl.u32 %v4267, 7
  %v4269 = vsub.s32 %v736, %v4268
  %v4270 = vrot.slane %v4253, %v4269
  %v4271 = vsel %vm741, %v4270, %v4266
  %v4272 = vsel %vm92, %v4271, %v4262
  %v4274 = vsel %vm754, %v4272, 0.0
  %4275 = vadd.xlane.f32.xlu0 %v4274
  %v4276 = vpop.xlane.xlu0 %4275
  %v4278 = vlaneseq
  %v4279 = vshrl.u32 %v4278, 7
  %v4280 = vsub.s32 0, %v4279
  %v4281 = vrot.slane %v4276, %v4280
  %v4282 = vlaneseq
  %v4283 = vshrl.u32 %v4282, 7
  %v4284 = vsub.s32 1, %v4283
  %v4285 = vrot.slane %v4276, %v4284
  %v4288 = vrcp.pop %v4281
  %v4289 = vmul.f32 %v4231, %v4288
  %v4290 = vmul.f32 %v4233, %v4288
  %v4291 = vrcp.pop %v4285
  %v4292 = vmul.f32 %v4235, %v4291
  %v4293 = vmul.f32 %v4237, %v4291
  %4295 = vset.pattern.permute.xlu0 0
  %4296 = vperm.xlu0 %4295, %v4289
  %v4297 = vpop.permute.xlu0 %4296
  %4300 = vset.pattern.permute.xlu0 0
  %4301 = vperm.xlu0 %4300, %v4290
  %v4302 = vpop.permute.xlu0 %4301
  %4305 = vset.pattern.permute.xlu0 0
  %4306 = vperm.xlu0 %4305, %v4292
  %v4307 = vpop.permute.xlu0 %4306
  %4310 = vset.pattern.permute.xlu0 0
  %4311 = vperm.xlu0 %4310, %v4293
  %v4312 = vpop.permute.xlu0 %4311
  %v4314 = vmul.f32 %v4297, %v49
  %v4315 = vmul.f32 %v4302, %v50
  %v4316 = vmul.f32 %v4307, %v51
  %v4317 = vmul.f32 %v4312, %v52
  %v4318 = vsel %vm53, %v4314, 0.0
  %v4319 = vsel %vm53, %v4315, 0.0
  %v4320 = vadd.f32 %v4318, %v4319
  %v4321 = vrot.slane %v4320, 4
  %v4322 = vadd.f32 %v4320, %v4321
  %v4323 = vrot.slane %v4322, 2
  %v4324 = vadd.f32 %v4322, %v4323
  %v4325 = vrot.slane %v4324, 1
  %v4326 = vadd.f32 %v4324, %v4325
  %v4327 = vsel %vm53, %v4316, 0.0
  %v4328 = vsel %vm53, %v4317, 0.0
  %v4329 = vadd.f32 %v4327, %v4328
  %v4330 = vrot.slane %v4329, 4
  %v4331 = vadd.f32 %v4329, %v4330
  %v4332 = vrot.slane %v4331, 2
  %v4333 = vadd.f32 %v4331, %v4332
  %v4334 = vrot.slane %v4333, 1
  %v4335 = vadd.f32 %v4333, %v4334
  %v4338 = vsel %vm92, %v4335, %v4326
  %v4339 = vsel %vm53, %v4338, 0
  %4341 = vmatprep.subr.mxu0 %v497
  %4342 = vmatpush1.msra.mxu0 %v496
  %4343 = vmatprep.subr.mxu0 %v499
  %4344 = vmatpush1.msra.mxu0 %v498
  %4345 = vmatprep.subr.mxu0 %v501
  %4346 = vmatpush1.msra.mxu0 %v500
  %4347 = vmatprep.subr.mxu0 %v503
  %4348 = vmatpush1.msra.mxu0 %v502
  %4349 = vmatprep.subr.mxu0 %v505
  %4350 = vmatpush1.msra.mxu0 %v504
  %4351 = vmatprep.subr.mxu0 %v507
  %4352 = vmatpush1.msra.mxu0 %v506
  %4353 = vmatprep.subr.mxu0 %v509
  %4354 = vmatpush1.msra.mxu0 %v508
  %4355 = vmatprep.subr.mxu0 %v511
  %4356 = vmatpush1.msra.mxu0 %v510
  %4357 = vmatprep.subr.mxu0 0.0
  %4358 = vmatpush1.msra.mxu0 0.0
  %4359 = vmatprep.subr.mxu0 0.0
  %4360 = vmatpush1.msra.mxu0 0.0
  %4361 = vmatprep.subr.mxu0 0.0
  %4362 = vmatpush1.msra.mxu0 0.0
  %4363 = vmatprep.subr.mxu0 0.0
  %4364 = vmatpush1.msra.mxu0 0.0
  %4365 = vmatprep.subr.mxu0 0.0
  %4366 = vmatpush1.msra.mxu0 0.0
  %4367 = vmatprep.subr.mxu0 0.0
  %4368 = vmatpush1.msra.mxu0 0.0
  %4369 = vmatprep.subr.mxu0 0.0
  %4370 = vmatpush1.msra.mxu0 0.0
  %4371 = vmatprep.subr.mxu0 0.0
  %4372 = vmatpush1.msra.mxu0 0.0
  %4373 = vmatprep.subr.mxu0 0.0
  %4374 = vmatpush1.msra.mxu0 0.0
  %4375 = vmatprep.subr.mxu0 0.0
  %4376 = vmatpush1.msra.mxu0 0.0
  %4377 = vmatprep.subr.mxu0 0.0
  %4378 = vmatpush1.msra.mxu0 0.0
  %4379 = vmatprep.subr.mxu0 0.0
  %4380 = vmatpush1.msra.mxu0 0.0
  %4381 = vmatprep.subr.mxu0 0.0
  %4382 = vmatpush1.msra.mxu0 0.0
  %4383 = vmatprep.subr.mxu0 0.0
  %4384 = vmatpush1.msra.mxu0 0.0
  %4385 = vmatprep.subr.mxu0 0.0
  %4386 = vmatpush1.msra.mxu0 0.0
  %4387 = vmatprep.subr.mxu0 0.0
  %4388 = vmatpush1.msra.mxu0 0.0
  %4389 = vmatprep.subr.mxu0 0.0
  %4390 = vmatpush1.msra.mxu0 0.0
  %4391 = vmatprep.subr.mxu0 0.0
  %4392 = vmatpush1.msra.mxu0 0.0
  %4393 = vmatprep.subr.mxu0 0.0
  %4394 = vmatpush1.msra.mxu0 0.0
  %4395 = vmatprep.subr.mxu0 0.0
  %4396 = vmatpush1.msra.mxu0 0.0
  %4397 = vmatprep.subr.mxu0 0.0
  %4398 = vmatpush1.msra.mxu0 0.0
  %4399 = vmatprep.subr.mxu0 0.0
  %4400 = vmatpush1.msra.mxu0 0.0
  %4401 = vmatprep.subr.mxu0 0.0
  %4402 = vmatpush1.msra.mxu0 0.0
  %4403 = vmatprep.subr.mxu0 0.0
  %4404 = vmatpush1.msra.mxu0 0.0
  %4405 = vmatprep.mubr.f32.mxu0 0.0
  %4406 = vmatmul.mubr.f32.gmra.mrb[0].mxu0 %v4339
  %v4407 = vpop.f32.mrb[0].mxu0
  %v4408 = vadd.f32 0.0, %v4407
  %v4409 = vpop.f32.mrb[0].mxu0
  %v4410 = vadd.f32 0.0, %v4409
  %4411 = vdwg.mxu0
  %v4412 = vadd.f32 %v4056, %v4408
  %v4413 = vadd.f32 %v4058, %v4410
  %v4415 = vunpack.c.l.s4 1983009808
  %v4416 = vunpack.c.0.s8 %v4415
  %v4417 = vlaneseq
  %v4418 = vshrl.u32 %v4417, 7
  %v4419 = vsub.s32 %v4416, %v4418
  %v4420 = vrot.slane %v469, %v4419
  %v4421 = vcombine.high %v4420, %v4420
  %v4424 = vadd.f32 %v4412, %v4420
  %v4425 = vadd.f32 %v4413, %v4421
  %v4426 = vxor.u32 %v4424, 2147483648
  %v4427 = vxor.u32 %v4425, 2147483648
  %v4428 = vmul.f32 %v4426, 1.442695
  %v4429 = vpow.pop %v4428
  %v4430 = vmul.f32 %v4427, 1.442695
  %v4431 = vpow.pop %v4430
  %v4432 = vadd.f32 %v4429, 1.0
  %v4433 = vadd.f32 %v4431, 1.0
  %v4434 = vrcp.pop %v4432
  %v4435 = vmul.f32 1.0, %v4434
  %v4436 = vrcp.pop %v4433
  %v4437 = vmul.f32 1.0, %v4436
  %v4438 = vtanh.pop %v4425
  %v4439 = vmul.f32 %v4435, %v3955
  %4441 = vrot.lane.b32.xlu0 %v4438, 64
  %v4442 = vpop.permute.xlu0 %4441
  %v4444 = vmul.f32 %v4435, %v4442
  %4446 = vrot.lane.b32.xlu0 %v4444, 64
  %v4447 = vpop.permute.xlu0 %4446
  %v4449 = vadd.f32 %v4439, %v4447
  %v4450 = vtanh.pop %v4449
  %4452 = vrot.lane.b32.xlu0 %v4450, 64
  %v4453 = vpop.permute.xlu0 %4452
  %v4455 = vmul.f32 %v4437, %v4453
  %s4456 = scalar_lea.vmem [#allocation2], 14
  %4457 = vst.msk [vmem:[%s4456] sm:$0x3] %vm999, %v4455
  %v4458 = vlaneseq
  %v4459 = vshrl.u32 %v4458, 7
  %v4460 = vsub.s32 %v731, %v4459
  %v4461 = vrot.slane %v4297, %v4460
  %v4462 = vlaneseq
  %v4463 = vshrl.u32 %v4462, 7
  %v4464 = vsub.s32 %v736, %v4463
  %v4465 = vrot.slane %v4302, %v4464
  %v4466 = vsel %vm741, %v4465, %v4461
  %v4467 = vlaneseq
  %v4468 = vshrl.u32 %v4467, 7
  %v4469 = vsub.s32 %v731, %v4468
  %v4470 = vrot.slane %v4307, %v4469
  %v4471 = vlaneseq
  %v4472 = vshrl.u32 %v4471, 7
  %v4473 = vsub.s32 %v736, %v4472
  %v4474 = vrot.slane %v4312, %v4473
  %v4475 = vsel %vm741, %v4474, %v4470
  %v4476 = vsel %vm92, %v4475, %v4466
  %s4478 = scalar_lea.vmem %s15, 14
  %4479 = vst.msk [vmem:[%s4478] sm:$0x3] %vm754, %v4476
  %v4480 = vld [vmem:[#allocation2] sm:$0x3]
  %v4481 = vld [vmem:[#allocation2 + $0x2] sm:$0x3]
  %v4482 = vld [vmem:[#allocation2 + $0x4] sm:$0x3]
  %v4483 = vld [vmem:[#allocation2 + $0x6] sm:$0x3]
  %v4484 = vld [vmem:[#allocation2 + $0x8] sm:$0x3]
  %v4485 = vld [vmem:[#allocation2 + $0xa] sm:$0x3]
  %v4486 = vld [vmem:[#allocation2 + $0xc] sm:$0x3]
  %v4487 = vld [vmem:[#allocation2 + $0xe] sm:$0x3]
  %v4488 = vld [vmem:[%s12] sm:$0xff]
  %v4489 = vld [vmem:[%s12 + $0x8] sm:$0xff]
  %v4490 = vld [vmem:[%s12 + $0x10] sm:$0xff]
  %v4491 = vld [vmem:[%s12 + $0x18] sm:$0xff]
  %v4492 = vld [vmem:[%s12 + $0x20] sm:$0xff]
  %v4493 = vld [vmem:[%s12 + $0x28] sm:$0xff]
  %v4494 = vld [vmem:[%s12 + $0x30] sm:$0xff]
  %v4495 = vld [vmem:[%s12 + $0x38] sm:$0xff]
  %v4496 = vld [vmem:[%s13] sm:$0x1]
  %v4498 = vlaneseq
  %v4499 = vshrl.u32 %v4498, 7
  %v4500 = vsub.s32 0, %v4499
  %v4501 = vrot.slane %v4496, %v4500
  %v4511 = vcombine.low %v4480, %v4481
  %v4512 = vcombine.low %v4482, %v4483
  %v4514 = vunpack.c.l.s4 1983009808
  %v4515 = vunpack.c.0.s8 %v4514
  %v4516 = vlaneseq
  %v4517 = vshrl.u32 %v4516, 7
  %v4518 = vsub.s32 %v4515, %v4517
  %v4519 = vrot.slane %v4511, %v4518
  %v4521 = vunpack.c.l.s4 1983009808
  %v4522 = vunpack.c.0.s8 %v4521
  %v4523 = vlaneseq
  %v4524 = vshrl.u32 %v4523, 7
  %v4525 = vsub.s32 %v4522, %v4524
  %v4526 = vrot.slane %v4512, %v4525
  %v4527 = vcombine.low %v4519, %v4526
  %v4528 = vcombine.low %v4484, %v4485
  %v4529 = vcombine.low %v4486, %v4487
  %v4531 = vunpack.c.l.s4 1983009808
  %v4532 = vunpack.c.0.s8 %v4531
  %v4533 = vlaneseq
  %v4534 = vshrl.u32 %v4533, 7
  %v4535 = vsub.s32 %v4532, %v4534
  %v4536 = vrot.slane %v4528, %v4535
  %v4538 = vunpack.c.l.s4 1983009808
  %v4539 = vunpack.c.0.s8 %v4538
  %v4540 = vlaneseq
  %v4541 = vshrl.u32 %v4540, 7
  %v4542 = vsub.s32 %v4539, %v4541
  %v4543 = vrot.slane %v4529, %v4542
  %v4544 = vcombine.low %v4536, %v4543
  %v4545 = vsel %vm53, %v4527, 0
  %v4547 = vsel %vm53, %v4544, 0
  %4549 = vmatprep.subr.mxu0 0.0
  %4550 = vmatpush1.msra.mxu0 %v4488
  %4551 = vmatprep.subr.mxu0 0.0
  %4552 = vmatpush1.msra.mxu0 %v4489
  %4553 = vmatprep.subr.mxu0 0.0
  %4554 = vmatpush1.msra.mxu0 %v4490
  %4555 = vmatprep.subr.mxu0 0.0
  %4556 = vmatpush1.msra.mxu0 %v4491
  %4557 = vmatprep.subr.mxu0 0.0
  %4558 = vmatpush1.msra.mxu0 %v4492
  %4559 = vmatprep.subr.mxu0 0.0
  %4560 = vmatpush1.msra.mxu0 %v4493
  %4561 = vmatprep.subr.mxu0 0.0
  %4562 = vmatpush1.msra.mxu0 %v4494
  %4563 = vmatprep.subr.mxu0 0.0
  %4564 = vmatpush1.msra.mxu0 %v4495
  %4565 = vmatprep.subr.mxu0 0.0
  %4566 = vmatpush1.msra.mxu0 0.0
  %4567 = vmatprep.subr.mxu0 0.0
  %4568 = vmatpush1.msra.mxu0 0.0
  %4569 = vmatprep.subr.mxu0 0.0
  %4570 = vmatpush1.msra.mxu0 0.0
  %4571 = vmatprep.subr.mxu0 0.0
  %4572 = vmatpush1.msra.mxu0 0.0
  %4573 = vmatprep.subr.mxu0 0.0
  %4574 = vmatpush1.msra.mxu0 0.0
  %4575 = vmatprep.subr.mxu0 0.0
  %4576 = vmatpush1.msra.mxu0 0.0
  %4577 = vmatprep.subr.mxu0 0.0
  %4578 = vmatpush1.msra.mxu0 0.0
  %4579 = vmatprep.subr.mxu0 0.0
  %4580 = vmatpush1.msra.mxu0 0.0
  %4581 = vmatprep.subr.mxu0 0.0
  %4582 = vmatpush1.msra.mxu0 0.0
  %4583 = vmatprep.subr.mxu0 0.0
  %4584 = vmatpush1.msra.mxu0 0.0
  %4585 = vmatprep.subr.mxu0 0.0
  %4586 = vmatpush1.msra.mxu0 0.0
  %4587 = vmatprep.subr.mxu0 0.0
  %4588 = vmatpush1.msra.mxu0 0.0
  %4589 = vmatprep.subr.mxu0 0.0
  %4590 = vmatpush1.msra.mxu0 0.0
  %4591 = vmatprep.subr.mxu0 0.0
  %4592 = vmatpush1.msra.mxu0 0.0
  %4593 = vmatprep.subr.mxu0 0.0
  %4594 = vmatpush1.msra.mxu0 0.0
  %4595 = vmatprep.subr.mxu0 0.0
  %4596 = vmatpush1.msra.mxu0 0.0
  %4597 = vmatprep.subr.mxu0 0.0
  %4598 = vmatpush1.msra.mxu0 0.0
  %4599 = vmatprep.subr.mxu0 0.0
  %4600 = vmatpush1.msra.mxu0 0.0
  %4601 = vmatprep.subr.mxu0 0.0
  %4602 = vmatpush1.msra.mxu0 0.0
  %4603 = vmatprep.subr.mxu0 0.0
  %4604 = vmatpush1.msra.mxu0 0.0
  %4605 = vmatprep.subr.mxu0 0.0
  %4606 = vmatpush1.msra.mxu0 0.0
  %4607 = vmatprep.subr.mxu0 0.0
  %4608 = vmatpush1.msra.mxu0 0.0
  %4609 = vmatprep.subr.mxu0 0.0
  %4610 = vmatpush1.msra.mxu0 0.0
  %4611 = vmatprep.subr.mxu0 0.0
  %4612 = vmatpush1.msra.mxu0 0.0
  %4613 = vmatprep.mubr.f32.mxu0 0.0
  %4614 = vmatmul.mubr.f32.gmra.mrb[0].mxu0 %v4545
  %v4615 = vpop.f32.mrb[0].mxu0
  %v4616 = vadd.f32 %v4501, %v4615
  %v4617 = vpop.f32.mrb[0].mxu0
  %4618 = vmatprep.mubr.f32.mxu0 0.0
  %4619 = vmatmul.mubr.f32.gmra.mrb[0].mxu0 %v4547
  %v4620 = vpop.f32.mrb[0].mxu0
  %v4621 = vadd.f32 %v4501, %v4620
  %v4622 = vpop.f32.mrb[0].mxu0
  %4623 = vdwg.mxu0
  %4624 = vst [vmem:[%s14] sm:$0xff] %v4616
  %4625 = vst [vmem:[%s14 + $0x8] sm:$0xff] %v4621
  // Predicated region
  $region58: #{encoder_decoder_forward.5} parent=0 // pred_check
    _
  $region59: #{encoder_decoder_forward.5} parent=0 // pred_check_branch
    %4627 = sbr.rel (0) target = $region61
  $region60: #{encoder_decoder_forward.5} parent=0 // pred_region
    _
  $region61: #{encoder_decoder_forward.5} parent=0 // pred_fallthru
    _
  // Predicated region
  $region62: #{encoder_decoder_forward.5} parent=0 // pred_check
    _
  $region63: #{encoder_decoder_forward.5} parent=0 // pred_check_branch
    %4629 = sbr.rel (0) target = $region65
  $region64: #{encoder_decoder_forward.5} parent=0 // pred_region
    _
  $region65: #{encoder_decoder_forward.5} parent=0 // pred_fallthru
    _
  // Predicated region
  $region66: #{encoder_decoder_forward.5} parent=0 // pred_check
    _
  $region67: #{encoder_decoder_forward.5} parent=0 // pred_check_branch
    %4631 = sbr.rel (0) target = $region69
  $region68: #{encoder_decoder_forward.5} parent=0 // pred_region
    _
  $region69: #{encoder_decoder_forward.5} parent=0 // pred_fallthru
    _
  // Predicated region
  $region70: #{encoder_decoder_forward.5} parent=0 // pred_check
    _
  $region71: #{encoder_decoder_forward.5} parent=0 // pred_check_branch
    %4633 = sbr.rel (0) target = $region73
  $region72: #{encoder_decoder_forward.5} parent=0 // pred_region
    _
  $region73: #{encoder_decoder_forward.5} parent=0 // pred_fallthru
    _

</llo_original>
